<compile_context>
chip_gen: v5e
topology: v5e:2x2
jax: 0.10.0
libtpu: 0.0.40
codegen_flags: <defaults>
</compile_context>

<pallas_src>
import jax
import jax.numpy as jnp
from jax.experimental import pallas as pl
from jax.experimental.pallas import tpu as pltpu

LEAKY_SLOPE = 0.01             # PyTorch LeakyReLU default
BN_EPS = 1e-5                  # PyTorch BatchNorm2d default
VMEM_LIMIT = 32 * 1024 * 1024  # safe scoped-VMEM request on v5e/v6e/v7x


def _pick_tile(n, target, multiple_of=8):
    """Largest divisor of n that is <= target and a multiple of `multiple_of`.
    Falls back to n itself (full extent) if no such divisor exists."""
    best = None
    for d in range(1, n + 1):
        if n % d == 0 and d <= target and d % multiple_of == 0:
            best = d
    return best if best is not None else n


# ---------------------------------------------------------------------------
# Kernel 1: ConvTranspose2d(kernel=2, stride=2) as a tiled matmul.
#   x2d : (N*H*W, Cin)   w2d : (Cin, 4*Chalf)   b2d : (1, 4*Chalf)
# ---------------------------------------------------------------------------
def _deconv_kernel(x_ref, w_ref, b_ref, o_ref):
    o_ref[...] = (
        jnp.dot(x_ref[...], w_ref[...], preferred_element_type=jnp.float32)
        + b_ref[...]
    )


def conv_transpose_2x2_s2(x_nhwc, w_torch, b):
    """x_nhwc: (N,H,W,Cin); w_torch: (Cin, Chalf, 2, 2) (PyTorch layout); b: (Chalf,)."""
    N, H, W, Cin = x_nhwc.shape
    Ch = w_torch.shape[1]
    rows = N * H * W

    x2d = x_nhwc.reshape(rows, Cin)
    # (Cin, Chalf, kh, kw) -> (Cin, kh, kw, Chalf) -> (Cin, kh*kw*Chalf)
    w2d = jnp.transpose(w_torch, (0, 2, 3, 1)).reshape(Cin, 4 * Ch)
    b2d = jnp.tile(b, (4,)).reshape(1, 4 * Ch)

    TR = _pick_tile(rows, 256)
    out2d = pl.pallas_call(
        _deconv_kernel,
        grid=(rows // TR,),
        out_shape=jax.ShapeDtypeStruct((rows, 4 * Ch), jnp.float32),
        in_specs=[
            pl.BlockSpec((TR, Cin), lambda i: (i, 0)),
            pl.BlockSpec((Cin, 4 * Ch), lambda i: (0, 0)),
            pl.BlockSpec((1, 4 * Ch), lambda i: (0, 0)),
        ],
        out_specs=pl.BlockSpec((TR, 4 * Ch), lambda i: (i, 0)),
        compiler_params=pltpu.CompilerParams(
            dimension_semantics=("parallel",),
            vmem_limit_bytes=VMEM_LIMIT),
    )(x2d, w2d, b2d)

    # (N,H,W,kh,kw,Ch) -> (N,H,kh,W,kw,Ch) -> (N, 2H, 2W, Ch)
    out = out2d.reshape(N, H, W, 2, 2, Ch)
    out = jnp.transpose(out, (0, 1, 3, 2, 4, 5)).reshape(N, 2 * H, 2 * W, Ch)
    return out


# ---------------------------------------------------------------------------
# Kernel 2: fused 3x3 conv (pad fused via halo blocks, channel concat fused in
# the im2col build) + per-tile BatchNorm partial statistics.
#   Inputs per grid step (n, b):
#     x2 main rows  (1, TH, W+2, Ch2)   x2 halo rows (1, 2, W+2, Ch2)
#     up main rows  (1, TH, W+2, Chu)   up halo rows (1, 2, W+2, Chu)
#     w_big (9*Cin, Cout)
#   Outputs: conv tile (TH*W, Cout)  and  partial [sum; sumsq] (1,1,2,Cout)
# ---------------------------------------------------------------------------
def _conv3x3_stats_kernel(x2m_ref, x2h_ref, upm_ref, uph_ref, w_ref,
                          o_ref, s_ref):
    _, TH, Wp, _ = x2m_ref.shape
    W = Wp - 2

    # Rebuild the (TH+2)-row halo window and fuse the channel concat.
    x2 = jnp.concatenate([x2m_ref[0], x2h_ref[0]], axis=0)   # (TH+2, Wp, Ch2)
    up = jnp.concatenate([upm_ref[0], uph_ref[0]], axis=0)   # (TH+2, Wp, Chu)
    xcat = jnp.concatenate([x2, up], axis=-1)                 # (TH+2, Wp, Cin)
    Cin = xcat.shape[-1]

    # im2col: one (TH*W, 9*Cin) patch, single MXU dot (K = 9*Cin).
    pieces = [
        xcat[dy:dy + TH, dx:dx + W, :].reshape(TH * W, Cin)
        for dy in range(3) for dx in range(3)
    ]
    patch = jnp.concatenate(pieces, axis=1)

    acc = jnp.dot(patch, w_ref[...], preferred_element_type=jnp.float32)
    o_ref[...] = acc
    s_ref[0, 0] = jnp.concatenate(
        [jnp.sum(acc, axis=0, keepdims=True),
         jnp.sum(acc * acc, axis=0, keepdims=True)], axis=0)


def conv3x3_fused(x2p, upp, conv_w):
    """x2p, upp: zero-padded NHWC slabs (N, Hout+2, Wout+2, C*); conv_w: (Cout, Cin, 3, 3)."""
    N, Hp, Wp, Ch2 = x2p.shape
    Chu = upp.shape[-1]
    Hout, Wout = Hp - 2, Wp - 2
    Cout, Cin = conv_w.shape[0], conv_w.shape[1]
    assert Cin == Ch2 + Chu
    assert upp.shape == (N, Hp, Wp, Chu)

    # Row-tile height (output rows per grid step). Must divide Hout and be even
    # for the 2-row halo BlockSpec; small enough that the im2col patch stays
    # well inside VMEM for realistic shapes.
    TH = _pick_tile(Hout, 16)
    assert TH % 2 == 0, "odd output heights unsupported (halo BlockSpec)"
    nHB = Hout // TH
    halo = TH // 2   # block-index multiplier for the 2-row halo spec

    # (Cout, Cin, 3, 3) -> (3, 3, Cin, Cout) -> (9*Cin, Cout).  The K ordering
    # (dy, dx, [x2 channels, up channels]) matches the in-kernel patch build,
    # because conv_w's input-channel axis is ordered as cat([x2, up]).
    w_big = jnp.transpose(conv_w, (2, 3, 1, 0)).reshape(9 * Cin, Cout)

    def main_map(n, b):
        return (n, b, 0, 0)

    def halo_map(n, b):
        return (n, (b + 1) * halo, 0, 0)

    conv2d, stats = pl.pallas_call(
        _conv3x3_stats_kernel,
        grid=(N, nHB),
        out_shape=(
            jax.ShapeDtypeStruct((N * Hout * Wout, Cout), jnp.float32),
            jax.ShapeDtypeStruct((N, nHB, 2, Cout), jnp.float32),
        ),
        in_specs=[
            pl.BlockSpec((1, TH, Wp, Ch2), main_map),
            pl.BlockSpec((1, 2, Wp, Ch2), halo_map),
            pl.BlockSpec((1, TH, Wp, Chu), main_map),
            pl.BlockSpec((1, 2, Wp, Chu), halo_map),
            pl.BlockSpec((9 * Cin, Cout), lambda n, b: (0, 0)),
        ],
        out_specs=(
            pl.BlockSpec((TH * Wout, Cout), lambda n, b: (n * nHB + b, 0)),
            pl.BlockSpec((1, 1, 2, Cout), lambda n, b: (n, b, 0, 0)),
        ),
        compiler_params=pltpu.CompilerParams(
            dimension_semantics=("parallel", "parallel"),
            vmem_limit_bytes=VMEM_LIMIT),
    )(x2p, x2p, upp, upp, w_big)
    return conv2d, stats


# ---------------------------------------------------------------------------
# Kernel 3: BatchNorm apply (precomputed scale/shift) + LeakyReLU, tiled rows.
# ---------------------------------------------------------------------------
def _bn_lrelu_kernel(x_ref, scale_ref, shift_ref, o_ref):
    y = x_ref[...] * scale_ref[...] + shift_ref[...]
    o_ref[...] = jnp.where(y >= 0, y, LEAKY_SLOPE * y)


def bn_lrelu_apply(y2d, scale, shift):
    rows, Cout = y2d.shape
    TB = _pick_tile(rows, 1024)
    return pl.pallas_call(
        _bn_lrelu_kernel,
        grid=(rows // TB,),
        out_shape=jax.ShapeDtypeStruct((rows, Cout), jnp.float32),
        in_specs=[
            pl.BlockSpec((TB, Cout), lambda i: (i, 0)),
            pl.BlockSpec((1, Cout), lambda i: (0, 0)),
            pl.BlockSpec((1, Cout), lambda i: (0, 0)),
        ],
        out_specs=pl.BlockSpec((TB, Cout), lambda i: (i, 0)),
        compiler_params=pltpu.CompilerParams(
            dimension_semantics=("parallel",),
            vmem_limit_bytes=VMEM_LIMIT),
    )(y2d, scale.reshape(1, Cout), shift.reshape(1, Cout))


# ---------------------------------------------------------------------------
# Up.forward (bilinear=False path), NCHW in / NCHW out.
# ---------------------------------------------------------------------------
def up_forward(x1_nchw, x2_nchw, params):
    x1 = jnp.transpose(x1_nchw, (0, 2, 3, 1))     # NCHW -> NHWC
    x2 = jnp.transpose(x2_nchw, (0, 2, 3, 1))
    N, Hout, Wout, _ = x2.shape

    up = conv_transpose_2x2_s2(x1, params["up_w"], params["up_b"])

    # F.pad(x1, [dX//2, dX-dX//2, dY//2, dY-dY//2]) fused with the +1 conv halo.
    diffY = Hout - up.shape[1]
    diffX = Wout - up.shape[2]
    upp = jnp.pad(
        up,
        ((0, 0),
         (1 + diffY // 2, 1 + diffY - diffY // 2),
         (1 + diffX // 2, 1 + diffX - diffX // 2),
         (0, 0)))
    x2p = jnp.pad(x2, ((0, 0), (1, 1), (1, 1), (0, 0)))

    conv2d, stats = conv3x3_fused(x2p, upp, params["conv_w"])

    # Finalize BatchNorm (training-mode, biased variance) from partial sums.
    s = jnp.sum(stats, axis=(0, 1))               # (2, Cout)
    count = N * Hout * Wout
    mean = s[0] / count
    var = s[1] / count - mean * mean
    scale = params["bn_gamma"] * jax.lax.rsqrt(var + BN_EPS)
    shift = params["bn_beta"] - mean * scale

    y2d = bn_lrelu_apply(conv2d, scale, shift)
    Cout = y2d.shape[-1]
    y = y2d.reshape(N, Hout, Wout, Cout)
    return jnp.transpose(y, (0, 3, 1, 2))         # back to NCHW


# ---------------------------------------------------------------------------
# Pure-JAX reference (no Pallas) for the correctness check.
# ---------------------------------------------------------------------------
def up_forward_ref(x1_nchw, x2_nchw, p):
    x1 = jnp.transpose(x1_nchw, (0, 2, 3, 1))
    x2 = jnp.transpose(x2_nchw, (0, 2, 3, 1))
    N, H, W, Cin = x1.shape
    Cout_up = p["up_w"].shape[1]
    up = jnp.einsum("nhwi,ioab->nhawbo", x1, p["up_w"])
    up = up.reshape(N, 2 * H, 2 * W, Cout_up) + p["up_b"]
    xcat = jnp.concatenate([x2, up], axis=-1)
    conv = jax.lax.conv_general_dilated(
        xcat, jnp.transpose(p["conv_w"], (2, 3, 1, 0)),
        window_strides=(1, 1), padding="SAME",
        dimension_numbers=("NHWC", "HWIO", "NHWC"))
    mean = jnp.mean(conv, axis=(0, 1, 2), keepdims=True)
    var = jnp.mean((conv - mean) ** 2, axis=(0, 1, 2), keepdims=True)
    y = (conv - mean) * jax.lax.rsqrt(var + BN_EPS)
    y = y * p["bn_gamma"] + p["bn_beta"]
    y = jnp.where(y >= 0, y, LEAKY_SLOPE * y)
    return jnp.transpose(y, (0, 3, 1, 2))


if __name__ == "__main__":
    key = jax.random.PRNGKey(0)
    k1, k2, k3, k4, k5 = jax.random.split(key, 5)

    # Up(in_channels=8, out_channels=8, bilinear=False)
    N, Cin, H, W = 2, 8, 16, 16
    Cout = 8
    Chalf = Cin // 2

    x1 = jax.random.normal(k1, (N, Cin, H, W), jnp.float32)
    x2 = jax.random.normal(k2, (N, Chalf, 2 * H, 2 * W), jnp.float32)

    params = dict(
        up_w=0.1 * jax.random.normal(k3, (Cin, Chalf, 2, 2), jnp.float32),
        up_b=0.1 * jax.random.normal(k4, (Chalf,), jnp.float32),
        conv_w=0.1 * jax.random.normal(k5, (Cout, Cin, 3, 3), jnp.float32),
        bn_gamma=jnp.ones((Cout,), jnp.float32),   # BatchNorm2d default init
        bn_beta=jnp.zeros((Cout,), jnp.float32),
    )

    y = jax.jit(up_forward)(x1, x2, params)
    y = jax.block_until_ready(y)

    y_ref = jax.block_until_ready(up_forward_ref(x1, x2, params))
    assert y.shape == (N, Cout, 2 * H, 2 * W), y.shape
    err = float(jnp.max(jnp.abs(y - y_ref)))
    assert err < 1e-3, err

    print("KERNEL_OK")
</pallas_src>

<mosaic_0001>
module attributes {stable_mosaic.version = 11 : i64} {
  func.func @_deconv_kernel(%arg0: i32, %arg1: memref<256x8xf32, #tpu.memory_space<vmem>>, %arg2: memref<8x16xf32, #tpu.memory_space<vmem>>, %arg3: memref<1x16xf32, #tpu.memory_space<vmem>>, %arg4: memref<256x16xf32, #tpu.memory_space<vmem>>) attributes {dimension_semantics = [#tpu.dimension_semantics<parallel>], iteration_bounds = array<i64: 2>, scalar_prefetch = 0 : i64, scratch_operands = 0 : i64, tpu.core_type = #tpu.core_type<tc>, window_params = [{transform_indices = @transform_0, window_bounds = array<i64: 256, 8>}, {pipeline_mode = #tpu.pipeline_mode<synchronous>, transform_indices = @transform_1, window_bounds = array<i64: 8, 16>}, {pipeline_mode = #tpu.pipeline_mode<synchronous>, transform_indices = @transform_2, window_bounds = array<i64: 1, 16>}, {transform_indices = @transform_3, window_bounds = array<i64: 256, 16>}]} {
    %c0 = arith.constant 0 : index
    %c0_0 = arith.constant 0 : index
    %0 = vector.load %arg1[%c0, %c0_0] : memref<256x8xf32, #tpu.memory_space<vmem>>, vector<256x8xf32>
    %c0_1 = arith.constant 0 : index
    %c0_2 = arith.constant 0 : index
    %1 = vector.load %arg2[%c0_1, %c0_2] : memref<8x16xf32, #tpu.memory_space<vmem>>, vector<8x16xf32>
    %cst = arith.constant dense<0.000000e+00> : vector<256x16xf32>
    %2 = tpu.matmul %0, %1, %cst {dimension_numbers = #tpu.dot_dimension_numbers<[1], [0], [0], [1], [0, 0, 1, 1], [], []>} : vector<256x8xf32>, vector<8x16xf32>, vector<256x16xf32> -> vector<256x16xf32>
    %c0_3 = arith.constant 0 : index
    %c0_4 = arith.constant 0 : index
    %3 = vector.load %arg3[%c0_3, %c0_4] : memref<1x16xf32, #tpu.memory_space<vmem>>, vector<1x16xf32>
    %4 = vector.broadcast %3 : vector<1x16xf32> to vector<256x16xf32>
    %5 = arith.addf %2, %4 : vector<256x16xf32>
    %c0_5 = arith.constant 0 : index
    %c0_6 = arith.constant 0 : index
    %6 = vector.load %arg4[%c0_5, %c0_6] : memref<256x16xf32, #tpu.memory_space<vmem>>, vector<256x16xf32>
    tpu.vector_store %arg4[%c0_5, %c0_6], %5 {strides = array<i32>} : memref<256x16xf32, #tpu.memory_space<vmem>>, vector<256x16xf32>,
    return
  }
  func.func @transform_0(%arg0: i32) -> (i32, i32) {
    %c0_i32 = arith.constant 0 : i32
    %c0_i32_0 = arith.constant 0 : i32
    return %arg0, %c0_i32 : i32, i32
  }
  func.func @transform_1(%arg0: i32) -> (i32, i32) {
    %c0_i32 = arith.constant 0 : i32
    %c0_i32_0 = arith.constant 0 : i32
    %c0_i32_1 = arith.constant 0 : i32
    return %c0_i32, %c0_i32_0 : i32, i32
  }
  func.func @transform_2(%arg0: i32) -> (i32, i32) {
    %c0_i32 = arith.constant 0 : i32
    %c0_i32_0 = arith.constant 0 : i32
    %c0_i32_1 = arith.constant 0 : i32
    return %c0_i32, %c0_i32_0 : i32, i32
  }
  func.func @transform_3(%arg0: i32) -> (i32, i32) {
    %c0_i32 = arith.constant 0 : i32
    %c0_i32_0 = arith.constant 0 : i32
    return %arg0, %c0_i32 : i32, i32
  }
}

module attributes {stable_mosaic.version = 11 : i64} {
  func.func @_conv3x3_stats_kernel(%arg0: i32, %arg1: i32, %arg2: memref<1x16x34x4xf32, #tpu.memory_space<vmem>>, %arg3: memref<1x2x34x4xf32, #tpu.memory_space<vmem>>, %arg4: memref<1x16x34x4xf32, #tpu.memory_space<vmem>>, %arg5: memref<1x2x34x4xf32, #tpu.memory_space<vmem>>, %arg6: memref<72x8xf32, #tpu.memory_space<vmem>>, %arg7: memref<512x8xf32, #tpu.memory_space<vmem>>, %arg8: memref<1x1x2x8xf32, #tpu.memory_space<vmem>>) attributes {dimension_semantics = [#tpu.dimension_semantics<parallel>, #tpu.dimension_semantics<parallel>], iteration_bounds = array<i64: 2, 2>, scalar_prefetch = 0 : i64, scratch_operands = 0 : i64, tpu.core_type = #tpu.core_type<tc>, window_params = [{transform_indices = @transform_0, window_bounds = array<i64: 1, 16, 34, 4>}, {transform_indices = @transform_1, window_bounds = array<i64: 1, 2, 34, 4>}, {transform_indices = @transform_2, window_bounds = array<i64: 1, 16, 34, 4>}, {transform_indices = @transform_3, window_bounds = array<i64: 1, 2, 34, 4>}, {pipeline_mode = #tpu.pipeline_mode<synchronous>, transform_indices = @transform_4, window_bounds = array<i64: 72, 8>}, {transform_indices = @transform_5, window_bounds = array<i64: 512, 8>}, {transform_indices = @transform_6, window_bounds = array<i64: 1, 1, 2, 8>}]} {
    %c0 = arith.constant 0 : index
    %c0_0 = arith.constant 0 : index
    %c0_1 = arith.constant 0 : index
    %c0_2 = arith.constant 0 : index
    %0 = vector.load %arg2[%c0, %c0_0, %c0_1, %c0_2] : memref<1x16x34x4xf32, #tpu.memory_space<vmem>>, vector<1x16x34x4xf32>
    %1 = vector.shape_cast %0 : vector<1x16x34x4xf32> to vector<16x34x4xf32>
    %c0_3 = arith.constant 0 : index
    %c0_4 = arith.constant 0 : index
    %c0_5 = arith.constant 0 : index
    %c0_6 = arith.constant 0 : index
    %2 = vector.load %arg3[%c0_3, %c0_4, %c0_5, %c0_6] : memref<1x2x34x4xf32, #tpu.memory_space<vmem>>, vector<1x2x34x4xf32>
    %3 = vector.shape_cast %2 : vector<1x2x34x4xf32> to vector<2x34x4xf32>
    %4 = tpu.concatenate %1, %3 in 0 : vector<16x34x4xf32>, vector<2x34x4xf32> -> vector<18x34x4xf32>
    %c0_7 = arith.constant 0 : index
    %c0_8 = arith.constant 0 : index
    %c0_9 = arith.constant 0 : index
    %c0_10 = arith.constant 0 : index
    %5 = vector.load %arg4[%c0_7, %c0_8, %c0_9, %c0_10] : memref<1x16x34x4xf32, #tpu.memory_space<vmem>>, vector<1x16x34x4xf32>
    %6 = vector.shape_cast %5 : vector<1x16x34x4xf32> to vector<16x34x4xf32>
    %c0_11 = arith.constant 0 : index
    %c0_12 = arith.constant 0 : index
    %c0_13 = arith.constant 0 : index
    %c0_14 = arith.constant 0 : index
    %7 = vector.load %arg5[%c0_11, %c0_12, %c0_13, %c0_14] : memref<1x2x34x4xf32, #tpu.memory_space<vmem>>, vector<1x2x34x4xf32>
    %8 = vector.shape_cast %7 : vector<1x2x34x4xf32> to vector<2x34x4xf32>
    %9 = tpu.concatenate %6, %8 in 0 : vector<16x34x4xf32>, vector<2x34x4xf32> -> vector<18x34x4xf32>
    %10 = tpu.concatenate %4, %9 in 2 : vector<18x34x4xf32>, vector<18x34x4xf32> -> vector<18x34x8xf32>
    %11 = vector.extract_strided_slice %10 {offsets = [0, 0, 0], sizes = [16, 32, 8], strides = [1, 1, 1]} : vector<18x34x8xf32> to vector<16x32x8xf32>
    %12 = vector.shape_cast %11 : vector<16x32x8xf32> to vector<512x8xf32>
    %13 = vector.extract_strided_slice %10 {offsets = [0, 1, 0], sizes = [16, 32, 8], strides = [1, 1, 1]} : vector<18x34x8xf32> to vector<16x32x8xf32>
    %14 = vector.shape_cast %13 : vector<16x32x8xf32> to vector<512x8xf32>
    %15 = vector.extract_strided_slice %10 {offsets = [0, 2, 0], sizes = [16, 32, 8], strides = [1, 1, 1]} : vector<18x34x8xf32> to vector<16x32x8xf32>
    %16 = vector.shape_cast %15 : vector<16x32x8xf32> to vector<512x8xf32>
    %17 = vector.extract_strided_slice %10 {offsets = [1, 0, 0], sizes = [16, 32, 8], strides = [1, 1, 1]} : vector<18x34x8xf32> to vector<16x32x8xf32>
    %18 = vector.shape_cast %17 : vector<16x32x8xf32> to vector<512x8xf32>
    %19 = vector.extract_strided_slice %10 {offsets = [1, 1, 0], sizes = [16, 32, 8], strides = [1, 1, 1]} : vector<18x34x8xf32> to vector<16x32x8xf32>
    %20 = vector.shape_cast %19 : vector<16x32x8xf32> to vector<512x8xf32>
    %21 = vector.extract_strided_slice %10 {offsets = [1, 2, 0], sizes = [16, 32, 8], strides = [1, 1, 1]} : vector<18x34x8xf32> to vector<16x32x8xf32>
    %22 = vector.shape_cast %21 : vector<16x32x8xf32> to vector<512x8xf32>
    %23 = vector.extract_strided_slice %10 {offsets = [2, 0, 0], sizes = [16, 32, 8], strides = [1, 1, 1]} : vector<18x34x8xf32> to vector<16x32x8xf32>
    %24 = vector.shape_cast %23 : vector<16x32x8xf32> to vector<512x8xf32>
    %25 = vector.extract_strided_slice %10 {offsets = [2, 1, 0], sizes = [16, 32, 8], strides = [1, 1, 1]} : vector<18x34x8xf32> to vector<16x32x8xf32>
    %26 = vector.shape_cast %25 : vector<16x32x8xf32> to vector<512x8xf32>
    %27 = vector.extract_strided_slice %10 {offsets = [2, 2, 0], sizes = [16, 32, 8], strides = [1, 1, 1]} : vector<18x34x8xf32> to vector<16x32x8xf32>
    %28 = vector.shape_cast %27 : vector<16x32x8xf32> to vector<512x8xf32>
    %29 = tpu.concatenate %12, %14, %16, %18, %20, %22, %24, %26, %28 in 1 : vector<512x8xf32>, vector<512x8xf32>, vector<512x8xf32>, vector<512x8xf32>, vector<512x8xf32>, vector<512x8xf32>, vector<512x8xf32>, vector<512x8xf32>, vector<512x8xf32> -> vector<512x72xf32>
    %c0_15 = arith.constant 0 : index
    %c0_16 = arith.constant 0 : index
    %30 = vector.load %arg6[%c0_15, %c0_16] : memref<72x8xf32, #tpu.memory_space<vmem>>, vector<72x8xf32>
    %cst = arith.constant dense<0.000000e+00> : vector<512x8xf32>
    %31 = tpu.matmul %29, %30, %cst {dimension_numbers = #tpu.dot_dimension_numbers<[1], [0], [0], [1], [0, 0, 1, 1], [], []>} : vector<512x72xf32>, vector<72x8xf32>, vector<512x8xf32> -> vector<512x8xf32>
    %c0_17 = arith.constant 0 : index
    %c0_18 = arith.constant 0 : index
    %32 = vector.load %arg7[%c0_17, %c0_18] : memref<512x8xf32, #tpu.memory_space<vmem>>, vector<512x8xf32>
    tpu.vector_store %arg7[%c0_17, %c0_18], %31 {strides = array<i32>} : memref<512x8xf32, #tpu.memory_space<vmem>>, vector<512x8xf32>,
    %cst_19 = arith.constant dense<0.000000e+00> : vector<8xf32>
    %33 = vector.multi_reduction <add>, %31, %cst_19 [0] : vector<512x8xf32> to vector<8xf32>
    %34 = vector.shape_cast %33 : vector<8xf32> to vector<1x8xf32>
    %35 = arith.mulf %31, %31 : vector<512x8xf32>
    %cst_20 = arith.constant dense<0.000000e+00> : vector<8xf32>
    %36 = vector.multi_reduction <add>, %35, %cst_20 [0] : vector<512x8xf32> to vector<8xf32>
    %37 = vector.shape_cast %36 : vector<8xf32> to vector<1x8xf32>
    %38 = tpu.concatenate %34, %37 in 0 : vector<1x8xf32>, vector<1x8xf32> -> vector<2x8xf32>
    %c0_21 = arith.constant 0 : index
    %c0_22 = arith.constant 0 : index
    %c0_23 = arith.constant 0 : index
    %c0_24 = arith.constant 0 : index
    %39 = vector.load %arg8[%c0_21, %c0_22, %c0_23, %c0_24] : memref<1x1x2x8xf32, #tpu.memory_space<vmem>>, vector<1x1x2x8xf32>
    %40 = vector.shape_cast %39 : vector<1x1x2x8xf32> to vector<2x8xf32>
    %41 = vector.shape_cast %38 : vector<2x8xf32> to vector<1x1x2x8xf32>
    tpu.vector_store %arg8[%c0_21, %c0_22, %c0_23, %c0_24], %41 {strides = array<i32>} : memref<1x1x2x8xf32, #tpu.memory_space<vmem>>, vector<1x1x2x8xf32>,
    return
  }
  func.func @transform_0(%arg0: i32, %arg1: i32) -> (i32, i32, i32, i32) {
    %c0_i32 = arith.constant 0 : i32
    %c0_i32_0 = arith.constant 0 : i32
    %c0_i32_1 = arith.constant 0 : i32
    return %arg0, %arg1, %c0_i32, %c0_i32_0 : i32, i32, i32, i32
  }
  func.func @transform_1(%arg0: i32, %arg1: i32) -> (i32, i32, i32, i32) {
    %c1_i32 = arith.constant 1 : i32
    %0 = arith.addi %arg1, %c1_i32 : i32
    %c8_i32 = arith.constant 8 : i32
    %1 = arith.muli %0, %c8_i32 : i32
    %c0_i32 = arith.constant 0 : i32
    %c0_i32_0 = arith.constant 0 : i32
    %c0_i32_1 = arith.constant 0 : i32
    return %arg0, %1, %c0_i32, %c0_i32_0 : i32, i32, i32, i32
  }
  func.func @transform_2(%arg0: i32, %arg1: i32) -> (i32, i32, i32, i32) {
    %c0_i32 = arith.constant 0 : i32
    %c0_i32_0 = arith.constant 0 : i32
    %c0_i32_1 = arith.constant 0 : i32
    return %arg0, %arg1, %c0_i32, %c0_i32_0 : i32, i32, i32, i32
  }
  func.func @transform_3(%arg0: i32, %arg1: i32) -> (i32, i32, i32, i32) {
    %c1_i32 = arith.constant 1 : i32
    %0 = arith.addi %arg1, %c1_i32 : i32
    %c8_i32 = arith.constant 8 : i32
    %1 = arith.muli %0, %c8_i32 : i32
    %c0_i32 = arith.constant 0 : i32
    %c0_i32_0 = arith.constant 0 : i32
    %c0_i32_1 = arith.constant 0 : i32
    return %arg0, %1, %c0_i32, %c0_i32_0 : i32, i32, i32, i32
  }
  func.func @transform_4(%arg0: i32, %arg1: i32) -> (i32, i32) {
    %c0_i32 = arith.constant 0 : i32
    %c0_i32_0 = arith.constant 0 : i32
    %c0_i32_1 = arith.constant 0 : i32
    return %c0_i32, %c0_i32_0 : i32, i32
  }
  func.func @transform_5(%arg0: i32, %arg1: i32) -> (i32, i32) {
    %c2_i32 = arith.constant 2 : i32
    %0 = arith.muli %arg0, %c2_i32 : i32
    %1 = arith.addi %0, %arg1 : i32
    %c0_i32 = arith.constant 0 : i32
    %c0_i32_0 = arith.constant 0 : i32
    return %1, %c0_i32 : i32, i32
  }
  func.func @transform_6(%arg0: i32, %arg1: i32) -> (i32, i32, i32, i32) {
    %c0_i32 = arith.constant 0 : i32
    %c0_i32_0 = arith.constant 0 : i32
    %c0_i32_1 = arith.constant 0 : i32
    return %arg0, %arg1, %c0_i32, %c0_i32_0 : i32, i32, i32, i32
  }
}

module attributes {stable_mosaic.version = 11 : i64} {
  func.func @_bn_lrelu_kernel(%arg0: i32, %arg1: memref<1024x8xf32, #tpu.memory_space<vmem>>, %arg2: memref<1x8xf32, #tpu.memory_space<vmem>>, %arg3: memref<1x8xf32, #tpu.memory_space<vmem>>, %arg4: memref<1024x8xf32, #tpu.memory_space<vmem>>) attributes {dimension_semantics = [#tpu.dimension_semantics<parallel>], iteration_bounds = array<i64: 2>, scalar_prefetch = 0 : i64, scratch_operands = 0 : i64, tpu.core_type = #tpu.core_type<tc>, window_params = [{transform_indices = @transform_0, window_bounds = array<i64: 1024, 8>}, {pipeline_mode = #tpu.pipeline_mode<synchronous>, transform_indices = @transform_1, window_bounds = array<i64: 1, 8>}, {pipeline_mode = #tpu.pipeline_mode<synchronous>, transform_indices = @transform_2, window_bounds = array<i64: 1, 8>}, {transform_indices = @transform_3, window_bounds = array<i64: 1024, 8>}]} {
    %c0 = arith.constant 0 : index
    %c0_0 = arith.constant 0 : index
    %0 = vector.load %arg1[%c0, %c0_0] : memref<1024x8xf32, #tpu.memory_space<vmem>>, vector<1024x8xf32>
    %c0_1 = arith.constant 0 : index
    %c0_2 = arith.constant 0 : index
    %1 = vector.load %arg2[%c0_1, %c0_2] : memref<1x8xf32, #tpu.memory_space<vmem>>, vector<1x8xf32>
    %2 = vector.broadcast %1 : vector<1x8xf32> to vector<1024x8xf32>
    %3 = arith.mulf %0, %2 : vector<1024x8xf32>
    %c0_3 = arith.constant 0 : index
    %c0_4 = arith.constant 0 : index
    %4 = vector.load %arg3[%c0_3, %c0_4] : memref<1x8xf32, #tpu.memory_space<vmem>>, vector<1x8xf32>
    %5 = vector.broadcast %4 : vector<1x8xf32> to vector<1024x8xf32>
    %6 = arith.addf %3, %5 : vector<1024x8xf32>
    %cst = arith.constant 0.000000e+00 : f32
    %7 = vector.broadcast %cst : f32 to vector<1024x8xf32>
    %8 = arith.cmpf oge, %6, %7 : vector<1024x8xf32>
    %cst_5 = arith.constant 0.00999999977 : f32
    %9 = vector.broadcast %cst_5 : f32 to vector<1024x8xf32>
    %10 = arith.mulf %9, %6 : vector<1024x8xf32>
    %11 = arith.select %8, %6, %10 : vector<1024x8xi1>, vector<1024x8xf32>
    %c0_6 = arith.constant 0 : index
    %c0_7 = arith.constant 0 : index
    %12 = vector.load %arg4[%c0_6, %c0_7] : memref<1024x8xf32, #tpu.memory_space<vmem>>, vector<1024x8xf32>
    tpu.vector_store %arg4[%c0_6, %c0_7], %11 {strides = array<i32>} : memref<1024x8xf32, #tpu.memory_space<vmem>>, vector<1024x8xf32>,
    return
  }
  func.func @transform_0(%arg0: i32) -> (i32, i32) {
    %c0_i32 = arith.constant 0 : i32
    %c0_i32_0 = arith.constant 0 : i32
    return %arg0, %c0_i32 : i32, i32
  }
  func.func @transform_1(%arg0: i32) -> (i32, i32) {
    %c0_i32 = arith.constant 0 : i32
    %c0_i32_0 = arith.constant 0 : i32
    %c0_i32_1 = arith.constant 0 : i32
    return %c0_i32, %c0_i32_0 : i32, i32
  }
  func.func @transform_2(%arg0: i32) -> (i32, i32) {
    %c0_i32 = arith.constant 0 : i32
    %c0_i32_0 = arith.constant 0 : i32
    %c0_i32_1 = arith.constant 0 : i32
    return %c0_i32, %c0_i32_0 : i32, i32
  }
  func.func @transform_3(%arg0: i32) -> (i32, i32) {
    %c0_i32 = arith.constant 0 : i32
    %c0_i32_0 = arith.constant 0 : i32
    return %arg0, %c0_i32 : i32, i32
  }
}

</mosaic_0001>

<llo_original>
// kernel: tile.9
$region0: #{tile.9}
  %s0 = inlined_call_operand.vmem [shape: f32[4,4], index: 0, kind: input, shape index: {}]
  %s1 = inlined_call_operand.vmem [shape: f32[1,16], index: 1, kind: output, shape index: {}]
  $region1: #{tile.9} parent=0
    #allocation0 [shape = 'u8[4096]{0}', space=vmem, size = 0x1000, scoped, tag = 'scoped mem for output reshape']
    #allocation1 [shape = 'u8[4096]{0}', space=vmem, size = 0x1000, scoped, tag = 'scoped mem for input reshape']
    %s3 = ssub.s32 16, 1
    %v4 = vld [vmem:[%s0] sm:%s3]
    %5 = vst [vmem:[#allocation1] sm:%s3] %v4
    %v6 = vld [vmem:[#allocation1] sm:$0x1]
    %vm7 = vcmask 31744
    %8 = vst.msk [vmem:[#allocation0] sm:$0x1] %vm7, %v6
    %s9 = scalar_lea.vmem [#allocation1], 3
    %v10 = vld [vmem:[%s9] sm:$0x1]
    %11 = vrot.lane.b32.xlu0 %v10, 12
    %v12 = vpop.permute.xlu0 %11
    %vm13 = vcmask 130144
    %14 = vst.msk [vmem:[#allocation0] sm:$0x1] %vm13, %v12
    %s15 = scalar_lea.vmem [#allocation1], 2
    %v16 = vld [vmem:[%s15] sm:$0x1]
    %17 = vrot.lane.b32.xlu0 %v16, 8
    %v18 = vpop.permute.xlu0 %17
    %vm19 = vcmask 97344
    %20 = vst.msk [vmem:[#allocation0] sm:$0x1] %vm19, %v18
    %s21 = scalar_lea.vmem [#allocation1], 1
    %v22 = vld [vmem:[%s21] sm:$0x1]
    %23 = vrot.lane.b32.xlu0 %v22, 4
    %v24 = vpop.permute.xlu0 %23
    %vm25 = vcmask 64544
    %26 = vst.msk [vmem:[#allocation0] sm:$0x1] %vm25, %v24
    %s28 = ssub.s32 2, 1
    %v29 = vld [vmem:[#allocation0] sm:%s28]
    %s31 = ssub.s32 2, 1
    %32 = vst [vmem:[%s1] sm:%s31] %v29

// kernel: tile.8
$region0: #{tile.8}
  #allocation2 [shape = 's32[1]{0}', space=sflag, size = 0x4, scoped, tag = 'scoped memory for tile.8']
  %s0 = inlined_call_operand.hbm [shape: f32[4], index: 0, kind: input, shape index: {}]
  %s1 = inlined_call_operand.vmem [shape: f32[4,4], index: 1, kind: output, shape index: {}]
  $region1: #{tile.8} parent=0
    #allocation0 [shape = 'u8[512]{0}', space=vmem, size = 0x400, scoped, tag = 'operand span for operand 0']
    #allocation1 [shape = 's32[1]{0}', space=sflag, size = 0x4, scoped, tag = 'scoped memory for tile.8']
    %2 = vsyncpa [#allocation1], 0
    // Predicated region
    $region2: #{tile.8} parent=1 // pred_check
      _
    $region3: #{tile.8} parent=1 // pred_check_branch
      %4 = sbr.rel (0) target = $region5
    $region4: #{tile.8} parent=1 // pred_region
      %6 = vsyncadd [#allocation1], 0
      %s8 = sshll.u32 %s0, 4
      %s9 = int_to_ptr.hbm [resolvable:$true] %s8
      %s10 = sshll.u32 [#allocation0], 4
      %s11 = int_to_ptr.vmem [resolvable:$true] %s10
      %13 = dma.hbm_to_vmem [thread:$0]  %s9, 16, %s11, [#allocation1]
    $region5: #{tile.8} parent=1 // pred_fallthru
      _
    // Predicated region
    $region6: #{tile.8} parent=1 // pred_check
      _
    $region7: #{tile.8} parent=1 // pred_check_branch
      %15 = sbr.rel (0) target = $region9
    $region8: #{tile.8} parent=1 // pred_region
      %17 = dma.done [#allocation1], 16
    $region9: #{tile.8} parent=1 // pred_fallthru
      _
    %v18 = vld [vmem:[#allocation0] ss:$0 sm:$0xff]
    %19 = vst [vmem:[%s1] sm:$0xf] %v18
    %20 = vsyncpa [#allocation1], 1

// kernel: up_forward.3
$region0: #{up_forward.3}
  #allocation0 [shape = 'u32[]', space=smem, size = 0x4, offset = 0x4, fixed_abs, tag = 'smem constant byte address 0x4 - core index']
  #allocation1 [shape = 'u32[72,128]{1,0:T(1,128)}', space=vmem, size = 0x9000, scoped, tag = 'internal scratch']
  %s0 = inlined_call_operand.vmem [shape: f32[512,8], index: 0, kind: input, shape index: {}]
  %s1 = inlined_call_operand.vmem [shape: f32[8,16], index: 1, kind: input, shape index: {}]
  %s2 = inlined_call_operand.vmem [shape: f32[1,16], index: 2, kind: input, shape index: {}]
  %s3 = inlined_call_operand.vmem [shape: f32[512,16], index: 3, kind: output, shape index: {}]
  %s4 = sld [smem:[#allocation0]]
  $region45: #{up_forward.3} parent=0
    _
  %s6 = ssub.s32 1, %s4
  %s7 = scalar_select 0, %s6, %s4
  loop: start=0, step=1, limit=4
  $region2: #{up_forward.3} parent=0 // loop_pre_header
    _
  $region3: #{up_forward.3} parent=0 // loop_header
    %s9 = sphi 0, %s13
    %p10 = scmp.ge.s32.totalorder %s9, 4
    %s19 = sphi 0, %s21
    %s22 = sphi 0, %s19
    %s23 = sphi 0, %s22
    %s39 = sphi 0, %s23
    %s43 = sphi 0, %s43
    %s45 = sphi 0, %s43
    %s46 = sphi 0, %s45
    %s60 = sphi 0, %s46
    %s64 = sphi 0, %s64
    %s66 = sphi 0, %s64
    %s67 = sphi 0, %s66
    %s81 = sphi 0, %s67
    %s87 = sphi 0, %s89
    %s90 = sphi 0, %s87
    %s91 = sphi 0, %s90
    %s107 = sphi 0, %s91
  $region4: #{up_forward.3} parent=0 // loop_header_branch
    %12 = sbr.rel (%p10) target = $region8
  $region5: #{up_forward.3} parent=0 // loop_body
    %s14 = ssub.s32 %s9, 1
    %s15 = ssub.s32 %s9, 2
    %s16 = sadd.s32 %s9, 1
    %s17 = ssub.s32 %s9, %s16
    %p18 = scmp.eq.s32.totalorder %s17, 0
    %s20 = sadd.s32 %s19, 1
    %s21 = scalar_select %p18, %s19, %s20
    %p24 = pneg %p18
    %p25 = scmp.eq.s32.totalorder %s9, 1
    %p26 = por %p24, %p25
    %p27 = scmp.ne.s32.totalorder %s19, %s22
    %p28 = scmp.eq.s32.totalorder %s9, 0
    %p29 = por %p27, %p28
    %p30 = scmp.ne.s32.totalorder %s19, %s22
    %p31 = scmp.eq.s32.totalorder %s14, 1
    %p32 = por %p30, %p31
    %p33 = scmp.ne.s32.totalorder %s22, %s23
    %p34 = scmp.eq.s32.totalorder %s14, 0
    %p35 = por %p33, %p34
    %p36 = scmp.ne.s32.totalorder %s22, %s23
    %p37 = scmp.eq.s32.totalorder %s15, 1
    %p38 = por %p36, %p37
    %p40 = scmp.ne.s32.totalorder %s23, %s39
    %p41 = scmp.eq.s32.totalorder %s15, 0
    %p42 = por %p40, %p41
    %s44 = sadd.s32 %s43, 1
    %p47 = scmp.eq.s32.totalorder %s9, 1
    %p48 = scmp.ne.s32.totalorder %s43, %s45
    %p49 = scmp.eq.s32.totalorder %s9, 0
    %p50 = por %p48, %p49
    %p51 = scmp.ne.s32.totalorder %s43, %s45
    %p52 = scmp.eq.s32.totalorder %s14, 1
    %p53 = por %p51, %p52
    %p54 = scmp.ne.s32.totalorder %s45, %s46
    %p55 = scmp.eq.s32.totalorder %s14, 0
    %p56 = por %p54, %p55
    %p57 = scmp.ne.s32.totalorder %s45, %s46
    %p58 = scmp.eq.s32.totalorder %s15, 1
    %p59 = por %p57, %p58
    %p61 = scmp.ne.s32.totalorder %s46, %s60
    %p62 = scmp.eq.s32.totalorder %s15, 0
    %p63 = por %p61, %p62
    %s65 = sadd.s32 %s64, 1
    %p68 = scmp.eq.s32.totalorder %s9, 1
    %p69 = scmp.ne.s32.totalorder %s64, %s66
    %p70 = scmp.eq.s32.totalorder %s9, 0
    %p71 = por %p69, %p70
    %p72 = scmp.ne.s32.totalorder %s64, %s66
    %p73 = scmp.eq.s32.totalorder %s14, 1
    %p74 = por %p72, %p73
    %p75 = scmp.ne.s32.totalorder %s66, %s67
    %p76 = scmp.eq.s32.totalorder %s14, 0
    %p77 = por %p75, %p76
    %p78 = scmp.ne.s32.totalorder %s66, %s67
    %p79 = scmp.eq.s32.totalorder %s15, 1
    %p80 = por %p78, %p79
    %p82 = scmp.ne.s32.totalorder %s67, %s81
    %p83 = scmp.eq.s32.totalorder %s15, 0
    %p84 = por %p82, %p83
    %s85 = ssub.s32 %s9, %s16
    %p86 = scmp.eq.s32.totalorder %s85, 0
    %s88 = sadd.s32 %s87, 1
    %s89 = scalar_select %p86, %s87, %s88
    %p92 = pneg %p86
    %p93 = scmp.eq.s32.totalorder %s9, 1
    %p94 = por %p92, %p93
    %p95 = scmp.ne.s32.totalorder %s87, %s90
    %p96 = scmp.eq.s32.totalorder %s9, 0
    %p97 = por %p95, %p96
    %p98 = scmp.ne.s32.totalorder %s87, %s90
    %p99 = scmp.eq.s32.totalorder %s14, 1
    %p100 = por %p98, %p99
    %p101 = scmp.ne.s32.totalorder %s90, %s91
    %p102 = scmp.eq.s32.totalorder %s14, 0
    %p103 = por %p101, %p102
    %p104 = scmp.ne.s32.totalorder %s90, %s91
    %p105 = scmp.eq.s32.totalorder %s15, 1
    %p106 = por %p104, %p105
    %p108 = scmp.ne.s32.totalorder %s91, %s107
    %p109 = scmp.eq.s32.totalorder %s15, 0
    %p110 = por %p108, %p109
    %p111 = scmp.le.s32.totalorder 1, %s9
    %p112 = scmp.lt.s32.totalorder %s9, 3
    %p113 = pnand %p111, %p112
    %p114 = pneg %p113
    // Predicated region
    $region9: #{up_forward.3} parent=5 // pred_check
      _
    $region10: #{up_forward.3} parent=5 // pred_check_branch
      %116 = sbr.rel (%p113) target = $region12
    $region11: #{up_forward.3} parent=5 // pred_region
      %s117 = ssub.s32 %s9, 1
      // Predicated region
      $region13: #{up_forward.3} parent=11 // pred_check
        %p118 = pneg %p56
      $region14: #{up_forward.3} parent=11 // pred_check_branch
        %120 = sbr.rel (%p118) target = $region16
      $region15: #{up_forward.3} parent=11 // pred_region
        _
      $region16: #{up_forward.3} parent=11 // pred_fallthru
        _
      // Predicated region
      $region17: #{up_forward.3} parent=11 // pred_check
        %p121 = pneg %p77
      $region18: #{up_forward.3} parent=11 // pred_check_branch
        %123 = sbr.rel (%p121) target = $region20
      $region19: #{up_forward.3} parent=11 // pred_region
        _
      $region20: #{up_forward.3} parent=11 // pred_fallthru
        _
    $region12: #{up_forward.3} parent=5 // pred_fallthru
      _
    %p124 = scmp.lt.s32.totalorder %s9, 2
    // Predicated region
    $region21: #{up_forward.3} parent=5 // pred_check
      %p125 = pneg %p124
    $region22: #{up_forward.3} parent=5 // pred_check_branch
      %127 = sbr.rel (%p125) target = $region24
    $region23: #{up_forward.3} parent=5 // pred_region
      // Predicated region
      $region25: #{up_forward.3} parent=23 // pred_check
        %p128 = pneg %p29
      $region26: #{up_forward.3} parent=23 // pred_check_branch
        %130 = sbr.rel (%p128) target = $region28
      $region27: #{up_forward.3} parent=23 // pred_region
        %s131 = smul.u32 32, %s9
        %p132 = scmp.lt.s32.totalorder %s131, 63
        %s133 = scalar_select %p132, %s131, 63
        %s134 = smul.addr %s133, 8
        %s135 = scalar_lea.vmem %s0, %s134
        %s136 = smul.u32 32, %s9
      $region28: #{up_forward.3} parent=23 // pred_fallthru
        _
    $region24: #{up_forward.3} parent=5 // pred_fallthru
      _
    %p137 = scmp.le.s32.totalorder 1, %s9
    %p138 = scmp.lt.s32.totalorder %s9, 3
    %p139 = pnand %p137, %p138
    %p140 = pneg %p139
    // Predicated region
    $region29: #{up_forward.3} parent=5 // pred_check
      _
    $region30: #{up_forward.3} parent=5 // pred_check_branch
      %142 = sbr.rel (%p139) target = $region32
    $region31: #{up_forward.3} parent=5 // pred_region
      %s143 = ssub.s32 %s9, 1
      %s144 = smul.u32 32, %s14
      %p145 = scmp.lt.s32.totalorder %s144, 63
      %s146 = scalar_select %p145, %s144, 63
      %s147 = smul.addr %s146, 8
      %s148 = scalar_lea.vmem %s0, %s147
      %p149 = pneg %p35
      %p150 = pneg %p32
      %p151 = pneg %p56
      %p152 = pneg %p53
      %p153 = pneg %p77
      %p154 = pneg %p74
      %p155 = pneg %p103
      %p156 = pneg %p100
      %s157 = smul.u32 32, %s14
      %p158 = scmp.lt.s32.totalorder %s157, 63
      %s159 = scalar_select %p158, %s157, 63
      %s160 = smul.addr %s159, 8
      %s161 = scalar_lea.vmem %s3, %s160
      %s162 = smul.u32 32, %s14
      %p163 = scmp.lt.s32.totalorder %s162, 63
      %s164 = scalar_select %p163, %s162, 63
      %s165 = smul.addr %s164, 8
      %s166 = scalar_lea.vmem %s0, %s165
      %s167 = smul.u32 32, %s14
      %s168 = smul.u32 32, %s14
      %p169 = scmp.lt.s32.totalorder %s168, 63
      %s170 = scalar_select %p169, %s168, 63
      %s171 = smul.addr %s170, 8
      %s172 = scalar_lea.vmem %s3, %s171
      %s173 = smul.u32 32, %s14
      %v174 = vld [vmem:[%s166] sm:$0xff]
      %v175 = vld [vmem:[%s166 + $0x8] sm:$0xff]
      %v176 = vld [vmem:[%s166 + $0x10] sm:$0xff]
      %v177 = vld [vmem:[%s166 + $0x18] sm:$0xff]
      %v178 = vld [vmem:[%s166 + $0x20] sm:$0xff]
      %v179 = vld [vmem:[%s166 + $0x28] sm:$0xff]
      %v180 = vld [vmem:[%s166 + $0x30] sm:$0xff]
      %v181 = vld [vmem:[%s166 + $0x38] sm:$0xff]
      %v182 = vld [vmem:[%s166 + $0x40] sm:$0xff]
      %v183 = vld [vmem:[%s166 + $0x48] sm:$0xff]
      %v184 = vld [vmem:[%s166 + $0x50] sm:$0xff]
      %v185 = vld [vmem:[%s166 + $0x58] sm:$0xff]
      %v186 = vld [vmem:[%s166 + $0x60] sm:$0xff]
      %v187 = vld [vmem:[%s166 + $0x68] sm:$0xff]
      %v188 = vld [vmem:[%s166 + $0x70] sm:$0xff]
      %v189 = vld [vmem:[%s166 + $0x78] sm:$0xff]
      %v190 = vld [vmem:[%s166 + $0x80] sm:$0xff]
      %v191 = vld [vmem:[%s166 + $0x88] sm:$0xff]
      %v192 = vld [vmem:[%s166 + $0x90] sm:$0xff]
      %v193 = vld [vmem:[%s166 + $0x98] sm:$0xff]
      %v194 = vld [vmem:[%s166 + $0xa0] sm:$0xff]
      %v195 = vld [vmem:[%s166 + $0xa8] sm:$0xff]
      %v196 = vld [vmem:[%s166 + $0xb0] sm:$0xff]
      %v197 = vld [vmem:[%s166 + $0xb8] sm:$0xff]
      %v198 = vld [vmem:[%s166 + $0xc0] sm:$0xff]
      %v199 = vld [vmem:[%s166 + $0xc8] sm:$0xff]
      %v200 = vld [vmem:[%s166 + $0xd0] sm:$0xff]
      %v201 = vld [vmem:[%s166 + $0xd8] sm:$0xff]
      %v202 = vld [vmem:[%s166 + $0xe0] sm:$0xff]
      %v203 = vld [vmem:[%s166 + $0xe8] sm:$0xff]
      %v204 = vld [vmem:[%s166 + $0xf0] sm:$0xff]
      %v205 = vld [vmem:[%s166 + $0xf8] sm:$0xff]
      %v206 = vld [vmem:[%s1] sm:$0xff]
      %v207 = vld [vmem:[%s2] sm:$0x1]
      %v209 = vperm.slane %v207, 0
      %vm211 = vcmask 64512
      %v213 = vsel %vm211, %v174, 0
      %v216 = vsel %vm211, %v175, 0
      %v219 = vsel %vm211, %v176, 0
      %v222 = vsel %vm211, %v177, 0
      %v225 = vsel %vm211, %v178, 0
      %v228 = vsel %vm211, %v179, 0
      %v231 = vsel %vm211, %v180, 0
      %v234 = vsel %vm211, %v181, 0
      %v237 = vsel %vm211, %v182, 0
      %v240 = vsel %vm211, %v183, 0
      %v243 = vsel %vm211, %v184, 0
      %v246 = vsel %vm211, %v185, 0
      %v249 = vsel %vm211, %v186, 0
      %v252 = vsel %vm211, %v187, 0
      %v255 = vsel %vm211, %v188, 0
      %v258 = vsel %vm211, %v189, 0
      %v261 = vsel %vm211, %v190, 0
      %v264 = vsel %vm211, %v191, 0
      %v267 = vsel %vm211, %v192, 0
      %v270 = vsel %vm211, %v193, 0
      %v273 = vsel %vm211, %v194, 0
      %v276 = vsel %vm211, %v195, 0
      %v279 = vsel %vm211, %v196, 0
      %v282 = vsel %vm211, %v197, 0
      %v285 = vsel %vm211, %v198, 0
      %v288 = vsel %vm211, %v199, 0
      %v291 = vsel %vm211, %v200, 0
      %v294 = vsel %vm211, %v201, 0
      %v297 = vsel %vm211, %v202, 0
      %v300 = vsel %vm211, %v203, 0
      %v303 = vsel %vm211, %v204, 0
      %v306 = vsel %vm211, %v205, 0
      %308 = vmatpush.msra.mxu0 0.0
      %309 = vmatpush.msra.mxu0 0.0
      %310 = vmatpush.msra.mxu0 0.0
      %311 = vmatpush.msra.mxu0 0.0
      %312 = vmatpush.msra.mxu0 0.0
      %313 = vmatpush.msra.mxu0 0.0
      %314 = vmatpush.msra.mxu0 0.0
      %315 = vmatpush.msra.mxu0 0.0
      %316 = vmatpush.msra.mxu0 0.0
      %317 = vmatpush.msra.mxu0 0.0
      %318 = vmatpush.msra.mxu0 0.0
      %319 = vmatpush.msra.mxu0 0.0
      %320 = vmatpush.msra.mxu0 0.0
      %321 = vmatpush.msra.mxu0 0.0
      %322 = vmatpush.msra.mxu0 0.0
      %323 = vmatpush.msra.mxu0 %v206
      %324 = vmatmul.f32.gmra.mxu0 %v213
      %v325 = vpop.f32.mrf.mxu0
      %v326 = vadd.f32 %v209, %v325
      %327 = vmatmul.f32.gmra.mxu0 %v216
      %v328 = vpop.f32.mrf.mxu0
      %v329 = vadd.f32 %v209, %v328
      %330 = vmatmul.f32.gmra.mxu0 %v219
      %v331 = vpop.f32.mrf.mxu0
      %v332 = vadd.f32 %v209, %v331
      %333 = vmatmul.f32.gmra.mxu0 %v222
      %v334 = vpop.f32.mrf.mxu0
      %v335 = vadd.f32 %v209, %v334
      %336 = vmatmul.f32.gmra.mxu0 %v225
      %v337 = vpop.f32.mrf.mxu0
      %v338 = vadd.f32 %v209, %v337
      %339 = vmatmul.f32.gmra.mxu0 %v228
      %v340 = vpop.f32.mrf.mxu0
      %v341 = vadd.f32 %v209, %v340
      %342 = vmatmul.f32.gmra.mxu0 %v231
      %v343 = vpop.f32.mrf.mxu0
      %v344 = vadd.f32 %v209, %v343
      %345 = vmatmul.f32.gmra.mxu0 %v234
      %v346 = vpop.f32.mrf.mxu0
      %v347 = vadd.f32 %v209, %v346
      %348 = vmatmul.f32.gmra.mxu0 %v237
      %v349 = vpop.f32.mrf.mxu0
      %v350 = vadd.f32 %v209, %v349
      %351 = vmatmul.f32.gmra.mxu0 %v240
      %v352 = vpop.f32.mrf.mxu0
      %v353 = vadd.f32 %v209, %v352
      %354 = vmatmul.f32.gmra.mxu0 %v243
      %v355 = vpop.f32.mrf.mxu0
      %v356 = vadd.f32 %v209, %v355
      %357 = vmatmul.f32.gmra.mxu0 %v246
      %v358 = vpop.f32.mrf.mxu0
      %v359 = vadd.f32 %v209, %v358
      %360 = vmatmul.f32.gmra.mxu0 %v249
      %v361 = vpop.f32.mrf.mxu0
      %v362 = vadd.f32 %v209, %v361
      %363 = vmatmul.f32.gmra.mxu0 %v252
      %v364 = vpop.f32.mrf.mxu0
      %v365 = vadd.f32 %v209, %v364
      %366 = vmatmul.f32.gmra.mxu0 %v255
      %v367 = vpop.f32.mrf.mxu0
      %v368 = vadd.f32 %v209, %v367
      %369 = vmatmul.f32.gmra.mxu0 %v258
      %v370 = vpop.f32.mrf.mxu0
      %v371 = vadd.f32 %v209, %v370
      %372 = vmatmul.f32.gmra.mxu0 %v261
      %v373 = vpop.f32.mrf.mxu0
      %v374 = vadd.f32 %v209, %v373
      %375 = vmatmul.f32.gmra.mxu0 %v264
      %v376 = vpop.f32.mrf.mxu0
      %v377 = vadd.f32 %v209, %v376
      %378 = vmatmul.f32.gmra.mxu0 %v267
      %v379 = vpop.f32.mrf.mxu0
      %v380 = vadd.f32 %v209, %v379
      %381 = vmatmul.f32.gmra.mxu0 %v270
      %v382 = vpop.f32.mrf.mxu0
      %v383 = vadd.f32 %v209, %v382
      %384 = vmatmul.f32.gmra.mxu0 %v273
      %v385 = vpop.f32.mrf.mxu0
      %v386 = vadd.f32 %v209, %v385
      %387 = vmatmul.f32.gmra.mxu0 %v276
      %v388 = vpop.f32.mrf.mxu0
      %v389 = vadd.f32 %v209, %v388
      %390 = vmatmul.f32.gmra.mxu0 %v279
      %v391 = vpop.f32.mrf.mxu0
      %v392 = vadd.f32 %v209, %v391
      %393 = vmatmul.f32.gmra.mxu0 %v282
      %v394 = vpop.f32.mrf.mxu0
      %v395 = vadd.f32 %v209, %v394
      %396 = vmatmul.f32.gmra.mxu0 %v285
      %v397 = vpop.f32.mrf.mxu0
      %v398 = vadd.f32 %v209, %v397
      %399 = vmatmul.f32.gmra.mxu0 %v288
      %v400 = vpop.f32.mrf.mxu0
      %v401 = vadd.f32 %v209, %v400
      %402 = vmatmul.f32.gmra.mxu0 %v291
      %v403 = vpop.f32.mrf.mxu0
      %v404 = vadd.f32 %v209, %v403
      %405 = vmatmul.f32.gmra.mxu0 %v294
      %v406 = vpop.f32.mrf.mxu0
      %v407 = vadd.f32 %v209, %v406
      %408 = vmatmul.f32.gmra.mxu0 %v297
      %v409 = vpop.f32.mrf.mxu0
      %v410 = vadd.f32 %v209, %v409
      %411 = vmatmul.f32.gmra.mxu0 %v300
      %v412 = vpop.f32.mrf.mxu0
      %v413 = vadd.f32 %v209, %v412
      %414 = vmatmul.f32.gmra.mxu0 %v303
      %v415 = vpop.f32.mrf.mxu0
      %v416 = vadd.f32 %v209, %v415
      %417 = vmatmul.f32.gmra.mxu0 %v306
      %v418 = vpop.f32.mrf.mxu0
      %v419 = vadd.f32 %v209, %v418
      %420 = vdwg.mxu0
      %vm421 = vcmask 130048
      %422 = vst.msk [vmem:[%s172] sm:$0xff] %vm421, %v326
      %423 = vst.msk [vmem:[%s172 + $0x8] sm:$0xff] %vm421, %v329
      %424 = vst.msk [vmem:[%s172 + $0x10] sm:$0xff] %vm421, %v332
      %425 = vst.msk [vmem:[%s172 + $0x18] sm:$0xff] %vm421, %v335
      %426 = vst.msk [vmem:[%s172 + $0x20] sm:$0xff] %vm421, %v338
      %427 = vst.msk [vmem:[%s172 + $0x28] sm:$0xff] %vm421, %v341
      %428 = vst.msk [vmem:[%s172 + $0x30] sm:$0xff] %vm421, %v344
      %429 = vst.msk [vmem:[%s172 + $0x38] sm:$0xff] %vm421, %v347
      %430 = vst.msk [vmem:[%s172 + $0x40] sm:$0xff] %vm421, %v350
      %431 = vst.msk [vmem:[%s172 + $0x48] sm:$0xff] %vm421, %v353
      %432 = vst.msk [vmem:[%s172 + $0x50] sm:$0xff] %vm421, %v356
      %433 = vst.msk [vmem:[%s172 + $0x58] sm:$0xff] %vm421, %v359
      %434 = vst.msk [vmem:[%s172 + $0x60] sm:$0xff] %vm421, %v362
      %435 = vst.msk [vmem:[%s172 + $0x68] sm:$0xff] %vm421, %v365
      %436 = vst.msk [vmem:[%s172 + $0x70] sm:$0xff] %vm421, %v368
      %437 = vst.msk [vmem:[%s172 + $0x78] sm:$0xff] %vm421, %v371
      %438 = vst.msk [vmem:[%s172 + $0x80] sm:$0xff] %vm421, %v374
      %439 = vst.msk [vmem:[%s172 + $0x88] sm:$0xff] %vm421, %v377
      %440 = vst.msk [vmem:[%s172 + $0x90] sm:$0xff] %vm421, %v380
      %441 = vst.msk [vmem:[%s172 + $0x98] sm:$0xff] %vm421, %v383
      %442 = vst.msk [vmem:[%s172 + $0xa0] sm:$0xff] %vm421, %v386
      %443 = vst.msk [vmem:[%s172 + $0xa8] sm:$0xff] %vm421, %v389
      %444 = vst.msk [vmem:[%s172 + $0xb0] sm:$0xff] %vm421, %v392
      %445 = vst.msk [vmem:[%s172 + $0xb8] sm:$0xff] %vm421, %v395
      %446 = vst.msk [vmem:[%s172 + $0xc0] sm:$0xff] %vm421, %v398
      %447 = vst.msk [vmem:[%s172 + $0xc8] sm:$0xff] %vm421, %v401
      %448 = vst.msk [vmem:[%s172 + $0xd0] sm:$0xff] %vm421, %v404
      %449 = vst.msk [vmem:[%s172 + $0xd8] sm:$0xff] %vm421, %v407
      %450 = vst.msk [vmem:[%s172 + $0xe0] sm:$0xff] %vm421, %v410
      %451 = vst.msk [vmem:[%s172 + $0xe8] sm:$0xff] %vm421, %v413
      %452 = vst.msk [vmem:[%s172 + $0xf0] sm:$0xff] %vm421, %v416
      %453 = vst.msk [vmem:[%s172 + $0xf8] sm:$0xff] %vm421, %v419
      %s454 = smul.u32 32, %s14
      %p455 = scmp.lt.s32.totalorder %s454, 63
      %s456 = scalar_select %p455, %s454, 63
      %s457 = smul.addr %s456, 8
      %s458 = scalar_lea.vmem %s3, %s457
      // Predicated region
      $region33: #{up_forward.3} parent=31 // pred_check
        %p459 = pneg %p100
      $region34: #{up_forward.3} parent=31 // pred_check_branch
        %461 = sbr.rel (%p459) target = $region36
      $region35: #{up_forward.3} parent=31 // pred_region
        %s462 = smul.u32 32, %s14
      $region36: #{up_forward.3} parent=31 // pred_fallthru
        _
    $region32: #{up_forward.3} parent=5 // pred_fallthru
      _
    %p463 = scmp.le.s32.totalorder 2, %s9
    // Predicated region
    $region37: #{up_forward.3} parent=5 // pred_check
      %p464 = pneg %p463
    $region38: #{up_forward.3} parent=5 // pred_check_branch
      %466 = sbr.rel (%p464) target = $region40
    $region39: #{up_forward.3} parent=5 // pred_region
      %s467 = ssub.s32 %s9, 2
      // Predicated region
      $region41: #{up_forward.3} parent=39 // pred_check
        %p468 = pneg %p106
      $region42: #{up_forward.3} parent=39 // pred_check_branch
        %470 = sbr.rel (%p468) target = $region44
      $region43: #{up_forward.3} parent=39 // pred_region
        %s471 = smul.u32 32, %s15
        %p472 = scmp.lt.s32.totalorder %s471, 63
        %s473 = scalar_select %p472, %s471, 63
        %s474 = smul.addr %s473, 8
        %s475 = scalar_lea.vmem %s3, %s474
      $region44: #{up_forward.3} parent=39 // pred_fallthru
        _
    $region40: #{up_forward.3} parent=5 // pred_fallthru
      _
  $region6: #{up_forward.3} parent=0 // loop_footer
    %s13 = sadd.s32 1, %s9
  $region7: #{up_forward.3} parent=0 // loop_footer_branch
    %8 = sbr.rel target = $region3
  $region8: #{up_forward.3} parent=0 // loop_exit
    _

// kernel: up_forward.5
$region0: #{up_forward.5}
  #allocation0 [shape = 'u32[]', space=smem, size = 0x4, offset = 0x4, fixed_abs, tag = 'smem constant byte address 0x4 - core index']
  #allocation1 [shape = 'u32[72,128]{1,0:T(1,128)}', space=vmem, size = 0x9000, scoped, tag = 'internal scratch']
  %s0 = inlined_call_operand.vmem [shape: f32[2048,8], index: 0, kind: input, shape index: {}]
  %s1 = inlined_call_operand.vmem [shape: f32[1,8], index: 1, kind: input, shape index: {}]
  %s2 = inlined_call_operand.vmem [shape: f32[1,8], index: 2, kind: input, shape index: {}]
  %s3 = inlined_call_operand.vmem [shape: f32[2048,8], index: 3, kind: output, shape index: {}]
  %s4 = sld [smem:[#allocation0]]
  $region45: #{up_forward.5} parent=0
    _
  %s6 = ssub.s32 1, %s4
  %s7 = scalar_select 0, %s6, %s4
  loop: start=0, step=1, limit=4
  $region2: #{up_forward.5} parent=0 // loop_pre_header
    _
  $region3: #{up_forward.5} parent=0 // loop_header
    %s9 = sphi 0, %s13
    %p10 = scmp.ge.s32.totalorder %s9, 4
    %s19 = sphi 0, %s21
    %s22 = sphi 0, %s19
    %s23 = sphi 0, %s22
    %s39 = sphi 0, %s23
    %s43 = sphi 0, %s43
    %s45 = sphi 0, %s43
    %s46 = sphi 0, %s45
    %s60 = sphi 0, %s46
    %s64 = sphi 0, %s64
    %s66 = sphi 0, %s64
    %s67 = sphi 0, %s66
    %s81 = sphi 0, %s67
    %s87 = sphi 0, %s89
    %s90 = sphi 0, %s87
    %s91 = sphi 0, %s90
    %s107 = sphi 0, %s91
  $region4: #{up_forward.5} parent=0 // loop_header_branch
    %12 = sbr.rel (%p10) target = $region8
  $region5: #{up_forward.5} parent=0 // loop_body
    %s14 = ssub.s32 %s9, 1
    %s15 = ssub.s32 %s9, 2
    %s16 = sadd.s32 %s9, 1
    %s17 = ssub.s32 %s9, %s16
    %p18 = scmp.eq.s32.totalorder %s17, 0
    %s20 = sadd.s32 %s19, 1
    %s21 = scalar_select %p18, %s19, %s20
    %p24 = pneg %p18
    %p25 = scmp.eq.s32.totalorder %s9, 1
    %p26 = por %p24, %p25
    %p27 = scmp.ne.s32.totalorder %s19, %s22
    %p28 = scmp.eq.s32.totalorder %s9, 0
    %p29 = por %p27, %p28
    %p30 = scmp.ne.s32.totalorder %s19, %s22
    %p31 = scmp.eq.s32.totalorder %s14, 1
    %p32 = por %p30, %p31
    %p33 = scmp.ne.s32.totalorder %s22, %s23
    %p34 = scmp.eq.s32.totalorder %s14, 0
    %p35 = por %p33, %p34
    %p36 = scmp.ne.s32.totalorder %s22, %s23
    %p37 = scmp.eq.s32.totalorder %s15, 1
    %p38 = por %p36, %p37
    %p40 = scmp.ne.s32.totalorder %s23, %s39
    %p41 = scmp.eq.s32.totalorder %s15, 0
    %p42 = por %p40, %p41
    %s44 = sadd.s32 %s43, 1
    %p47 = scmp.eq.s32.totalorder %s9, 1
    %p48 = scmp.ne.s32.totalorder %s43, %s45
    %p49 = scmp.eq.s32.totalorder %s9, 0
    %p50 = por %p48, %p49
    %p51 = scmp.ne.s32.totalorder %s43, %s45
    %p52 = scmp.eq.s32.totalorder %s14, 1
    %p53 = por %p51, %p52
    %p54 = scmp.ne.s32.totalorder %s45, %s46
    %p55 = scmp.eq.s32.totalorder %s14, 0
    %p56 = por %p54, %p55
    %p57 = scmp.ne.s32.totalorder %s45, %s46
    %p58 = scmp.eq.s32.totalorder %s15, 1
    %p59 = por %p57, %p58
    %p61 = scmp.ne.s32.totalorder %s46, %s60
    %p62 = scmp.eq.s32.totalorder %s15, 0
    %p63 = por %p61, %p62
    %s65 = sadd.s32 %s64, 1
    %p68 = scmp.eq.s32.totalorder %s9, 1
    %p69 = scmp.ne.s32.totalorder %s64, %s66
    %p70 = scmp.eq.s32.totalorder %s9, 0
    %p71 = por %p69, %p70
    %p72 = scmp.ne.s32.totalorder %s64, %s66
    %p73 = scmp.eq.s32.totalorder %s14, 1
    %p74 = por %p72, %p73
    %p75 = scmp.ne.s32.totalorder %s66, %s67
    %p76 = scmp.eq.s32.totalorder %s14, 0
    %p77 = por %p75, %p76
    %p78 = scmp.ne.s32.totalorder %s66, %s67
    %p79 = scmp.eq.s32.totalorder %s15, 1
    %p80 = por %p78, %p79
    %p82 = scmp.ne.s32.totalorder %s67, %s81
    %p83 = scmp.eq.s32.totalorder %s15, 0
    %p84 = por %p82, %p83
    %s85 = ssub.s32 %s9, %s16
    %p86 = scmp.eq.s32.totalorder %s85, 0
    %s88 = sadd.s32 %s87, 1
    %s89 = scalar_select %p86, %s87, %s88
    %p92 = pneg %p86
    %p93 = scmp.eq.s32.totalorder %s9, 1
    %p94 = por %p92, %p93
    %p95 = scmp.ne.s32.totalorder %s87, %s90
    %p96 = scmp.eq.s32.totalorder %s9, 0
    %p97 = por %p95, %p96
    %p98 = scmp.ne.s32.totalorder %s87, %s90
    %p99 = scmp.eq.s32.totalorder %s14, 1
    %p100 = por %p98, %p99
    %p101 = scmp.ne.s32.totalorder %s90, %s91
    %p102 = scmp.eq.s32.totalorder %s14, 0
    %p103 = por %p101, %p102
    %p104 = scmp.ne.s32.totalorder %s90, %s91
    %p105 = scmp.eq.s32.totalorder %s15, 1
    %p106 = por %p104, %p105
    %p108 = scmp.ne.s32.totalorder %s91, %s107
    %p109 = scmp.eq.s32.totalorder %s15, 0
    %p110 = por %p108, %p109
    %p111 = scmp.le.s32.totalorder 1, %s9
    %p112 = scmp.lt.s32.totalorder %s9, 3
    %p113 = pnand %p111, %p112
    %p114 = pneg %p113
    // Predicated region
    $region9: #{up_forward.5} parent=5 // pred_check
      _
    $region10: #{up_forward.5} parent=5 // pred_check_branch
      %116 = sbr.rel (%p113) target = $region12
    $region11: #{up_forward.5} parent=5 // pred_region
      %s117 = ssub.s32 %s9, 1
      // Predicated region
      $region13: #{up_forward.5} parent=11 // pred_check
        %p118 = pneg %p56
      $region14: #{up_forward.5} parent=11 // pred_check_branch
        %120 = sbr.rel (%p118) target = $region16
      $region15: #{up_forward.5} parent=11 // pred_region
        _
      $region16: #{up_forward.5} parent=11 // pred_fallthru
        _
      // Predicated region
      $region17: #{up_forward.5} parent=11 // pred_check
        %p121 = pneg %p77
      $region18: #{up_forward.5} parent=11 // pred_check_branch
        %123 = sbr.rel (%p121) target = $region20
      $region19: #{up_forward.5} parent=11 // pred_region
        _
      $region20: #{up_forward.5} parent=11 // pred_fallthru
        _
    $region12: #{up_forward.5} parent=5 // pred_fallthru
      _
    %p124 = scmp.lt.s32.totalorder %s9, 2
    // Predicated region
    $region21: #{up_forward.5} parent=5 // pred_check
      %p125 = pneg %p124
    $region22: #{up_forward.5} parent=5 // pred_check_branch
      %127 = sbr.rel (%p125) target = $region24
    $region23: #{up_forward.5} parent=5 // pred_region
      // Predicated region
      $region25: #{up_forward.5} parent=23 // pred_check
        %p128 = pneg %p29
      $region26: #{up_forward.5} parent=23 // pred_check_branch
        %130 = sbr.rel (%p128) target = $region28
      $region27: #{up_forward.5} parent=23 // pred_region
        %s131 = smul.u32 128, %s9
        %p132 = scmp.lt.s32.totalorder %s131, 255
        %s133 = scalar_select %p132, %s131, 255
        %s134 = smul.addr %s133, 8
        %s135 = scalar_lea.vmem %s0, %s134
        %s136 = smul.u32 128, %s9
      $region28: #{up_forward.5} parent=23 // pred_fallthru
        _
    $region24: #{up_forward.5} parent=5 // pred_fallthru
      _
    %p137 = scmp.le.s32.totalorder 1, %s9
    %p138 = scmp.lt.s32.totalorder %s9, 3
    %p139 = pnand %p137, %p138
    %p140 = pneg %p139
    // Predicated region
    $region29: #{up_forward.5} parent=5 // pred_check
      _
    $region30: #{up_forward.5} parent=5 // pred_check_branch
      %142 = sbr.rel (%p139) target = $region32
    $region31: #{up_forward.5} parent=5 // pred_region
      %s143 = ssub.s32 %s9, 1
      %s144 = smul.u32 128, %s14
      %p145 = scmp.lt.s32.totalorder %s144, 255
      %s146 = scalar_select %p145, %s144, 255
      %s147 = smul.addr %s146, 8
      %s148 = scalar_lea.vmem %s0, %s147
      %p149 = pneg %p35
      %p150 = pneg %p32
      %p151 = pneg %p56
      %p152 = pneg %p53
      %p153 = pneg %p77
      %p154 = pneg %p74
      %p155 = pneg %p103
      %p156 = pneg %p100
      %s157 = smul.u32 128, %s14
      %p158 = scmp.lt.s32.totalorder %s157, 255
      %s159 = scalar_select %p158, %s157, 255
      %s160 = smul.addr %s159, 8
      %s161 = scalar_lea.vmem %s3, %s160
      %s162 = smul.u32 128, %s14
      %p163 = scmp.lt.s32.totalorder %s162, 255
      %s164 = scalar_select %p163, %s162, 255
      %s165 = smul.addr %s164, 8
      %s166 = scalar_lea.vmem %s0, %s165
      %s167 = smul.u32 128, %s14
      %s168 = smul.u32 128, %s14
      %p169 = scmp.lt.s32.totalorder %s168, 255
      %s170 = scalar_select %p169, %s168, 255
      %s171 = smul.addr %s170, 8
      %s172 = scalar_lea.vmem %s3, %s171
      %s173 = smul.u32 128, %s14
      %v174 = vld [vmem:[%s166] sm:$0xff]
      %v175 = vld [vmem:[%s166 + $0x8] sm:$0xff]
      %v176 = vld [vmem:[%s166 + $0x10] sm:$0xff]
      %v177 = vld [vmem:[%s166 + $0x18] sm:$0xff]
      %v178 = vld [vmem:[%s166 + $0x20] sm:$0xff]
      %v179 = vld [vmem:[%s166 + $0x28] sm:$0xff]
      %v180 = vld [vmem:[%s166 + $0x30] sm:$0xff]
      %v181 = vld [vmem:[%s166 + $0x38] sm:$0xff]
      %v182 = vld [vmem:[%s166 + $0x40] sm:$0xff]
      %v183 = vld [vmem:[%s166 + $0x48] sm:$0xff]
      %v184 = vld [vmem:[%s166 + $0x50] sm:$0xff]
      %v185 = vld [vmem:[%s166 + $0x58] sm:$0xff]
      %v186 = vld [vmem:[%s166 + $0x60] sm:$0xff]
      %v187 = vld [vmem:[%s166 + $0x68] sm:$0xff]
      %v188 = vld [vmem:[%s166 + $0x70] sm:$0xff]
      %v189 = vld [vmem:[%s166 + $0x78] sm:$0xff]
      %v190 = vld [vmem:[%s166 + $0x80] sm:$0xff]
      %v191 = vld [vmem:[%s166 + $0x88] sm:$0xff]
      %v192 = vld [vmem:[%s166 + $0x90] sm:$0xff]
      %v193 = vld [vmem:[%s166 + $0x98] sm:$0xff]
      %v194 = vld [vmem:[%s166 + $0xa0] sm:$0xff]
      %v195 = vld [vmem:[%s166 + $0xa8] sm:$0xff]
      %v196 = vld [vmem:[%s166 + $0xb0] sm:$0xff]
      %v197 = vld [vmem:[%s166 + $0xb8] sm:$0xff]
      %v198 = vld [vmem:[%s166 + $0xc0] sm:$0xff]
      %v199 = vld [vmem:[%s166 + $0xc8] sm:$0xff]
      %v200 = vld [vmem:[%s166 + $0xd0] sm:$0xff]
      %v201 = vld [vmem:[%s166 + $0xd8] sm:$0xff]
      %v202 = vld [vmem:[%s166 + $0xe0] sm:$0xff]
      %v203 = vld [vmem:[%s166 + $0xe8] sm:$0xff]
      %v204 = vld [vmem:[%s166 + $0xf0] sm:$0xff]
      %v205 = vld [vmem:[%s166 + $0xf8] sm:$0xff]
      %v206 = vld [vmem:[%s166 + $0x100] sm:$0xff]
      %v207 = vld [vmem:[%s166 + $0x108] sm:$0xff]
      %v208 = vld [vmem:[%s166 + $0x110] sm:$0xff]
      %v209 = vld [vmem:[%s166 + $0x118] sm:$0xff]
      %v210 = vld [vmem:[%s166 + $0x120] sm:$0xff]
      %v211 = vld [vmem:[%s166 + $0x128] sm:$0xff]
      %v212 = vld [vmem:[%s166 + $0x130] sm:$0xff]
      %v213 = vld [vmem:[%s166 + $0x138] sm:$0xff]
      %v214 = vld [vmem:[%s166 + $0x140] sm:$0xff]
      %v215 = vld [vmem:[%s166 + $0x148] sm:$0xff]
      %v216 = vld [vmem:[%s166 + $0x150] sm:$0xff]
      %v217 = vld [vmem:[%s166 + $0x158] sm:$0xff]
      %v218 = vld [vmem:[%s166 + $0x160] sm:$0xff]
      %v219 = vld [vmem:[%s166 + $0x168] sm:$0xff]
      %v220 = vld [vmem:[%s166 + $0x170] sm:$0xff]
      %v221 = vld [vmem:[%s166 + $0x178] sm:$0xff]
      %v222 = vld [vmem:[%s166 + $0x180] sm:$0xff]
      %v223 = vld [vmem:[%s166 + $0x188] sm:$0xff]
      %v224 = vld [vmem:[%s166 + $0x190] sm:$0xff]
      %v225 = vld [vmem:[%s166 + $0x198] sm:$0xff]
      %v226 = vld [vmem:[%s166 + $0x1a0] sm:$0xff]
      %v227 = vld [vmem:[%s166 + $0x1a8] sm:$0xff]
      %v228 = vld [vmem:[%s166 + $0x1b0] sm:$0xff]
      %v229 = vld [vmem:[%s166 + $0x1b8] sm:$0xff]
      %v230 = vld [vmem:[%s166 + $0x1c0] sm:$0xff]
      %v231 = vld [vmem:[%s166 + $0x1c8] sm:$0xff]
      %v232 = vld [vmem:[%s166 + $0x1d0] sm:$0xff]
      %v233 = vld [vmem:[%s166 + $0x1d8] sm:$0xff]
      %v234 = vld [vmem:[%s166 + $0x1e0] sm:$0xff]
      %v235 = vld [vmem:[%s166 + $0x1e8] sm:$0xff]
      %v236 = vld [vmem:[%s166 + $0x1f0] sm:$0xff]
      %v237 = vld [vmem:[%s166 + $0x1f8] sm:$0xff]
      %v238 = vld [vmem:[%s166 + $0x200] sm:$0xff]
      %v239 = vld [vmem:[%s166 + $0x208] sm:$0xff]
      %v240 = vld [vmem:[%s166 + $0x210] sm:$0xff]
      %v241 = vld [vmem:[%s166 + $0x218] sm:$0xff]
      %v242 = vld [vmem:[%s166 + $0x220] sm:$0xff]
      %v243 = vld [vmem:[%s166 + $0x228] sm:$0xff]
      %v244 = vld [vmem:[%s166 + $0x230] sm:$0xff]
      %v245 = vld [vmem:[%s166 + $0x238] sm:$0xff]
      %v246 = vld [vmem:[%s166 + $0x240] sm:$0xff]
      %v247 = vld [vmem:[%s166 + $0x248] sm:$0xff]
      %v248 = vld [vmem:[%s166 + $0x250] sm:$0xff]
      %v249 = vld [vmem:[%s166 + $0x258] sm:$0xff]
      %v250 = vld [vmem:[%s166 + $0x260] sm:$0xff]
      %v251 = vld [vmem:[%s166 + $0x268] sm:$0xff]
      %v252 = vld [vmem:[%s166 + $0x270] sm:$0xff]
      %v253 = vld [vmem:[%s166 + $0x278] sm:$0xff]
      %v254 = vld [vmem:[%s166 + $0x280] sm:$0xff]
      %v255 = vld [vmem:[%s166 + $0x288] sm:$0xff]
      %v256 = vld [vmem:[%s166 + $0x290] sm:$0xff]
      %v257 = vld [vmem:[%s166 + $0x298] sm:$0xff]
      %v258 = vld [vmem:[%s166 + $0x2a0] sm:$0xff]
      %v259 = vld [vmem:[%s166 + $0x2a8] sm:$0xff]
      %v260 = vld [vmem:[%s166 + $0x2b0] sm:$0xff]
      %v261 = vld [vmem:[%s166 + $0x2b8] sm:$0xff]
      %v262 = vld [vmem:[%s166 + $0x2c0] sm:$0xff]
      %v263 = vld [vmem:[%s166 + $0x2c8] sm:$0xff]
      %v264 = vld [vmem:[%s166 + $0x2d0] sm:$0xff]
      %v265 = vld [vmem:[%s166 + $0x2d8] sm:$0xff]
      %v266 = vld [vmem:[%s166 + $0x2e0] sm:$0xff]
      %v267 = vld [vmem:[%s166 + $0x2e8] sm:$0xff]
      %v268 = vld [vmem:[%s166 + $0x2f0] sm:$0xff]
      %v269 = vld [vmem:[%s166 + $0x2f8] sm:$0xff]
      %v270 = vld [vmem:[%s166 + $0x300] sm:$0xff]
      %v271 = vld [vmem:[%s166 + $0x308] sm:$0xff]
      %v272 = vld [vmem:[%s166 + $0x310] sm:$0xff]
      %v273 = vld [vmem:[%s166 + $0x318] sm:$0xff]
      %v274 = vld [vmem:[%s166 + $0x320] sm:$0xff]
      %v275 = vld [vmem:[%s166 + $0x328] sm:$0xff]
      %v276 = vld [vmem:[%s166 + $0x330] sm:$0xff]
      %v277 = vld [vmem:[%s166 + $0x338] sm:$0xff]
      %v278 = vld [vmem:[%s166 + $0x340] sm:$0xff]
      %v279 = vld [vmem:[%s166 + $0x348] sm:$0xff]
      %v280 = vld [vmem:[%s166 + $0x350] sm:$0xff]
      %v281 = vld [vmem:[%s166 + $0x358] sm:$0xff]
      %v282 = vld [vmem:[%s166 + $0x360] sm:$0xff]
      %v283 = vld [vmem:[%s166 + $0x368] sm:$0xff]
      %v284 = vld [vmem:[%s166 + $0x370] sm:$0xff]
      %v285 = vld [vmem:[%s166 + $0x378] sm:$0xff]
      %v286 = vld [vmem:[%s166 + $0x380] sm:$0xff]
      %v287 = vld [vmem:[%s166 + $0x388] sm:$0xff]
      %v288 = vld [vmem:[%s166 + $0x390] sm:$0xff]
      %v289 = vld [vmem:[%s166 + $0x398] sm:$0xff]
      %v290 = vld [vmem:[%s166 + $0x3a0] sm:$0xff]
      %v291 = vld [vmem:[%s166 + $0x3a8] sm:$0xff]
      %v292 = vld [vmem:[%s166 + $0x3b0] sm:$0xff]
      %v293 = vld [vmem:[%s166 + $0x3b8] sm:$0xff]
      %v294 = vld [vmem:[%s166 + $0x3c0] sm:$0xff]
      %v295 = vld [vmem:[%s166 + $0x3c8] sm:$0xff]
      %v296 = vld [vmem:[%s166 + $0x3d0] sm:$0xff]
      %v297 = vld [vmem:[%s166 + $0x3d8] sm:$0xff]
      %v298 = vld [vmem:[%s166 + $0x3e0] sm:$0xff]
      %v299 = vld [vmem:[%s166 + $0x3e8] sm:$0xff]
      %v300 = vld [vmem:[%s166 + $0x3f0] sm:$0xff]
      %v301 = vld [vmem:[%s166 + $0x3f8] sm:$0xff]
      %v302 = vld [vmem:[%s1] sm:$0x1]
      %v304 = vperm.slane %v302, 0
      %v306 = vmul.f32 %v174, %v304
      %v307 = vmul.f32 %v175, %v304
      %v308 = vmul.f32 %v176, %v304
      %v309 = vmul.f32 %v177, %v304
      %v310 = vmul.f32 %v178, %v304
      %v311 = vmul.f32 %v179, %v304
      %v312 = vmul.f32 %v180, %v304
      %v313 = vmul.f32 %v181, %v304
      %v314 = vmul.f32 %v182, %v304
      %v315 = vmul.f32 %v183, %v304
      %v316 = vmul.f32 %v184, %v304
      %v317 = vmul.f32 %v185, %v304
      %v318 = vmul.f32 %v186, %v304
      %v319 = vmul.f32 %v187, %v304
      %v320 = vmul.f32 %v188, %v304
      %v321 = vmul.f32 %v189, %v304
      %v322 = vmul.f32 %v190, %v304
      %v323 = vmul.f32 %v191, %v304
      %v324 = vmul.f32 %v192, %v304
      %v325 = vmul.f32 %v193, %v304
      %v326 = vmul.f32 %v194, %v304
      %v327 = vmul.f32 %v195, %v304
      %v328 = vmul.f32 %v196, %v304
      %v329 = vmul.f32 %v197, %v304
      %v330 = vmul.f32 %v198, %v304
      %v331 = vmul.f32 %v199, %v304
      %v332 = vmul.f32 %v200, %v304
      %v333 = vmul.f32 %v201, %v304
      %v334 = vmul.f32 %v202, %v304
      %v335 = vmul.f32 %v203, %v304
      %v336 = vmul.f32 %v204, %v304
      %v337 = vmul.f32 %v205, %v304
      %v338 = vmul.f32 %v206, %v304
      %v339 = vmul.f32 %v207, %v304
      %v340 = vmul.f32 %v208, %v304
      %v341 = vmul.f32 %v209, %v304
      %v342 = vmul.f32 %v210, %v304
      %v343 = vmul.f32 %v211, %v304
      %v344 = vmul.f32 %v212, %v304
      %v345 = vmul.f32 %v213, %v304
      %v346 = vmul.f32 %v214, %v304
      %v347 = vmul.f32 %v215, %v304
      %v348 = vmul.f32 %v216, %v304
      %v349 = vmul.f32 %v217, %v304
      %v350 = vmul.f32 %v218, %v304
      %v351 = vmul.f32 %v219, %v304
      %v352 = vmul.f32 %v220, %v304
      %v353 = vmul.f32 %v221, %v304
      %v354 = vmul.f32 %v222, %v304
      %v355 = vmul.f32 %v223, %v304
      %v356 = vmul.f32 %v224, %v304
      %v357 = vmul.f32 %v225, %v304
      %v358 = vmul.f32 %v226, %v304
      %v359 = vmul.f32 %v227, %v304
      %v360 = vmul.f32 %v228, %v304
      %v361 = vmul.f32 %v229, %v304
      %v362 = vmul.f32 %v230, %v304
      %v363 = vmul.f32 %v231, %v304
      %v364 = vmul.f32 %v232, %v304
      %v365 = vmul.f32 %v233, %v304
      %v366 = vmul.f32 %v234, %v304
      %v367 = vmul.f32 %v235, %v304
      %v368 = vmul.f32 %v236, %v304
      %v369 = vmul.f32 %v237, %v304
      %v370 = vmul.f32 %v238, %v304
      %v371 = vmul.f32 %v239, %v304
      %v372 = vmul.f32 %v240, %v304
      %v373 = vmul.f32 %v241, %v304
      %v374 = vmul.f32 %v242, %v304
      %v375 = vmul.f32 %v243, %v304
      %v376 = vmul.f32 %v244, %v304
      %v377 = vmul.f32 %v245, %v304
      %v378 = vmul.f32 %v246, %v304
      %v379 = vmul.f32 %v247, %v304
      %v380 = vmul.f32 %v248, %v304
      %v381 = vmul.f32 %v249, %v304
      %v382 = vmul.f32 %v250, %v304
      %v383 = vmul.f32 %v251, %v304
      %v384 = vmul.f32 %v252, %v304
      %v385 = vmul.f32 %v253, %v304
      %v386 = vmul.f32 %v254, %v304
      %v387 = vmul.f32 %v255, %v304
      %v388 = vmul.f32 %v256, %v304
      %v389 = vmul.f32 %v257, %v304
      %v390 = vmul.f32 %v258, %v304
      %v391 = vmul.f32 %v259, %v304
      %v392 = vmul.f32 %v260, %v304
      %v393 = vmul.f32 %v261, %v304
      %v394 = vmul.f32 %v262, %v304
      %v395 = vmul.f32 %v263, %v304
      %v396 = vmul.f32 %v264, %v304
      %v397 = vmul.f32 %v265, %v304
      %v398 = vmul.f32 %v266, %v304
      %v399 = vmul.f32 %v267, %v304
      %v400 = vmul.f32 %v268, %v304
      %v401 = vmul.f32 %v269, %v304
      %v402 = vmul.f32 %v270, %v304
      %v403 = vmul.f32 %v271, %v304
      %v404 = vmul.f32 %v272, %v304
      %v405 = vmul.f32 %v273, %v304
      %v406 = vmul.f32 %v274, %v304
      %v407 = vmul.f32 %v275, %v304
      %v408 = vmul.f32 %v276, %v304
      %v409 = vmul.f32 %v277, %v304
      %v410 = vmul.f32 %v278, %v304
      %v411 = vmul.f32 %v279, %v304
      %v412 = vmul.f32 %v280, %v304
      %v413 = vmul.f32 %v281, %v304
      %v414 = vmul.f32 %v282, %v304
      %v415 = vmul.f32 %v283, %v304
      %v416 = vmul.f32 %v284, %v304
      %v417 = vmul.f32 %v285, %v304
      %v418 = vmul.f32 %v286, %v304
      %v419 = vmul.f32 %v287, %v304
      %v420 = vmul.f32 %v288, %v304
      %v421 = vmul.f32 %v289, %v304
      %v422 = vmul.f32 %v290, %v304
      %v423 = vmul.f32 %v291, %v304
      %v424 = vmul.f32 %v292, %v304
      %v425 = vmul.f32 %v293, %v304
      %v426 = vmul.f32 %v294, %v304
      %v427 = vmul.f32 %v295, %v304
      %v428 = vmul.f32 %v296, %v304
      %v429 = vmul.f32 %v297, %v304
      %v430 = vmul.f32 %v298, %v304
      %v431 = vmul.f32 %v299, %v304
      %v432 = vmul.f32 %v300, %v304
      %v433 = vmul.f32 %v301, %v304
      %v434 = vld [vmem:[%s2] sm:$0x1]
      %v436 = vperm.slane %v434, 0
      %v438 = vadd.f32 %v306, %v436
      %v439 = vadd.f32 %v307, %v436
      %v440 = vadd.f32 %v308, %v436
      %v441 = vadd.f32 %v309, %v436
      %v442 = vadd.f32 %v310, %v436
      %v443 = vadd.f32 %v311, %v436
      %v444 = vadd.f32 %v312, %v436
      %v445 = vadd.f32 %v313, %v436
      %v446 = vadd.f32 %v314, %v436
      %v447 = vadd.f32 %v315, %v436
      %v448 = vadd.f32 %v316, %v436
      %v449 = vadd.f32 %v317, %v436
      %v450 = vadd.f32 %v318, %v436
      %v451 = vadd.f32 %v319, %v436
      %v452 = vadd.f32 %v320, %v436
      %v453 = vadd.f32 %v321, %v436
      %v454 = vadd.f32 %v322, %v436
      %v455 = vadd.f32 %v323, %v436
      %v456 = vadd.f32 %v324, %v436
      %v457 = vadd.f32 %v325, %v436
      %v458 = vadd.f32 %v326, %v436
      %v459 = vadd.f32 %v327, %v436
      %v460 = vadd.f32 %v328, %v436
      %v461 = vadd.f32 %v329, %v436
      %v462 = vadd.f32 %v330, %v436
      %v463 = vadd.f32 %v331, %v436
      %v464 = vadd.f32 %v332, %v436
      %v465 = vadd.f32 %v333, %v436
      %v466 = vadd.f32 %v334, %v436
      %v467 = vadd.f32 %v335, %v436
      %v468 = vadd.f32 %v336, %v436
      %v469 = vadd.f32 %v337, %v436
      %v470 = vadd.f32 %v338, %v436
      %v471 = vadd.f32 %v339, %v436
      %v472 = vadd.f32 %v340, %v436
      %v473 = vadd.f32 %v341, %v436
      %v474 = vadd.f32 %v342, %v436
      %v475 = vadd.f32 %v343, %v436
      %v476 = vadd.f32 %v344, %v436
      %v477 = vadd.f32 %v345, %v436
      %v478 = vadd.f32 %v346, %v436
      %v479 = vadd.f32 %v347, %v436
      %v480 = vadd.f32 %v348, %v436
      %v481 = vadd.f32 %v349, %v436
      %v482 = vadd.f32 %v350, %v436
      %v483 = vadd.f32 %v351, %v436
      %v484 = vadd.f32 %v352, %v436
      %v485 = vadd.f32 %v353, %v436
      %v486 = vadd.f32 %v354, %v436
      %v487 = vadd.f32 %v355, %v436
      %v488 = vadd.f32 %v356, %v436
      %v489 = vadd.f32 %v357, %v436
      %v490 = vadd.f32 %v358, %v436
      %v491 = vadd.f32 %v359, %v436
      %v492 = vadd.f32 %v360, %v436
      %v493 = vadd.f32 %v361, %v436
      %v494 = vadd.f32 %v362, %v436
      %v495 = vadd.f32 %v363, %v436
      %v496 = vadd.f32 %v364, %v436
      %v497 = vadd.f32 %v365, %v436
      %v498 = vadd.f32 %v366, %v436
      %v499 = vadd.f32 %v367, %v436
      %v500 = vadd.f32 %v368, %v436
      %v501 = vadd.f32 %v369, %v436
      %v502 = vadd.f32 %v370, %v436
      %v503 = vadd.f32 %v371, %v436
      %v504 = vadd.f32 %v372, %v436
      %v505 = vadd.f32 %v373, %v436
      %v506 = vadd.f32 %v374, %v436
      %v507 = vadd.f32 %v375, %v436
      %v508 = vadd.f32 %v376, %v436
      %v509 = vadd.f32 %v377, %v436
      %v510 = vadd.f32 %v378, %v436
      %v511 = vadd.f32 %v379, %v436
      %v512 = vadd.f32 %v380, %v436
      %v513 = vadd.f32 %v381, %v436
      %v514 = vadd.f32 %v382, %v436
      %v515 = vadd.f32 %v383, %v436
      %v516 = vadd.f32 %v384, %v436
      %v517 = vadd.f32 %v385, %v436
      %v518 = vadd.f32 %v386, %v436
      %v519 = vadd.f32 %v387, %v436
      %v520 = vadd.f32 %v388, %v436
      %v521 = vadd.f32 %v389, %v436
      %v522 = vadd.f32 %v390, %v436
      %v523 = vadd.f32 %v391, %v436
      %v524 = vadd.f32 %v392, %v436
      %v525 = vadd.f32 %v393, %v436
      %v526 = vadd.f32 %v394, %v436
      %v527 = vadd.f32 %v395, %v436
      %v528 = vadd.f32 %v396, %v436
      %v529 = vadd.f32 %v397, %v436
      %v530 = vadd.f32 %v398, %v436
      %v531 = vadd.f32 %v399, %v436
      %v532 = vadd.f32 %v400, %v436
      %v533 = vadd.f32 %v401, %v436
      %v534 = vadd.f32 %v402, %v436
      %v535 = vadd.f32 %v403, %v436
      %v536 = vadd.f32 %v404, %v436
      %v537 = vadd.f32 %v405, %v436
      %v538 = vadd.f32 %v406, %v436
      %v539 = vadd.f32 %v407, %v436
      %v540 = vadd.f32 %v408, %v436
      %v541 = vadd.f32 %v409, %v436
      %v542 = vadd.f32 %v410, %v436
      %v543 = vadd.f32 %v411, %v436
      %v544 = vadd.f32 %v412, %v436
      %v545 = vadd.f32 %v413, %v436
      %v546 = vadd.f32 %v414, %v436
      %v547 = vadd.f32 %v415, %v436
      %v548 = vadd.f32 %v416, %v436
      %v549 = vadd.f32 %v417, %v436
      %v550 = vadd.f32 %v418, %v436
      %v551 = vadd.f32 %v419, %v436
      %v552 = vadd.f32 %v420, %v436
      %v553 = vadd.f32 %v421, %v436
      %v554 = vadd.f32 %v422, %v436
      %v555 = vadd.f32 %v423, %v436
      %v556 = vadd.f32 %v424, %v436
      %v557 = vadd.f32 %v425, %v436
      %v558 = vadd.f32 %v426, %v436
      %v559 = vadd.f32 %v427, %v436
      %v560 = vadd.f32 %v428, %v436
      %v561 = vadd.f32 %v429, %v436
      %v562 = vadd.f32 %v430, %v436
      %v563 = vadd.f32 %v431, %v436
      %v564 = vadd.f32 %v432, %v436
      %v565 = vadd.f32 %v433, %v436
      %vm566 = vcmp.ge.f32.partialorder %v438, 0.0
      %vm567 = vcmp.ge.f32.partialorder %v439, 0.0
      %vm568 = vcmp.ge.f32.partialorder %v440, 0.0
      %vm569 = vcmp.ge.f32.partialorder %v441, 0.0
      %vm570 = vcmp.ge.f32.partialorder %v442, 0.0
      %vm571 = vcmp.ge.f32.partialorder %v443, 0.0
      %vm572 = vcmp.ge.f32.partialorder %v444, 0.0
      %vm573 = vcmp.ge.f32.partialorder %v445, 0.0
      %vm574 = vcmp.ge.f32.partialorder %v446, 0.0
      %vm575 = vcmp.ge.f32.partialorder %v447, 0.0
      %vm576 = vcmp.ge.f32.partialorder %v448, 0.0
      %vm577 = vcmp.ge.f32.partialorder %v449, 0.0
      %vm578 = vcmp.ge.f32.partialorder %v450, 0.0
      %vm579 = vcmp.ge.f32.partialorder %v451, 0.0
      %vm580 = vcmp.ge.f32.partialorder %v452, 0.0
      %vm581 = vcmp.ge.f32.partialorder %v453, 0.0
      %vm582 = vcmp.ge.f32.partialorder %v454, 0.0
      %vm583 = vcmp.ge.f32.partialorder %v455, 0.0
      %vm584 = vcmp.ge.f32.partialorder %v456, 0.0
      %vm585 = vcmp.ge.f32.partialorder %v457, 0.0
      %vm586 = vcmp.ge.f32.partialorder %v458, 0.0
      %vm587 = vcmp.ge.f32.partialorder %v459, 0.0
      %vm588 = vcmp.ge.f32.partialorder %v460, 0.0
      %vm589 = vcmp.ge.f32.partialorder %v461, 0.0
      %vm590 = vcmp.ge.f32.partialorder %v462, 0.0
      %vm591 = vcmp.ge.f32.partialorder %v463, 0.0
      %vm592 = vcmp.ge.f32.partialorder %v464, 0.0
      %vm593 = vcmp.ge.f32.partialorder %v465, 0.0
      %vm594 = vcmp.ge.f32.partialorder %v466, 0.0
      %vm595 = vcmp.ge.f32.partialorder %v467, 0.0
      %vm596 = vcmp.ge.f32.partialorder %v468, 0.0
      %vm597 = vcmp.ge.f32.partialorder %v469, 0.0
      %vm598 = vcmp.ge.f32.partialorder %v470, 0.0
      %vm599 = vcmp.ge.f32.partialorder %v471, 0.0
      %vm600 = vcmp.ge.f32.partialorder %v472, 0.0
      %vm601 = vcmp.ge.f32.partialorder %v473, 0.0
      %vm602 = vcmp.ge.f32.partialorder %v474, 0.0
      %vm603 = vcmp.ge.f32.partialorder %v475, 0.0
      %vm604 = vcmp.ge.f32.partialorder %v476, 0.0
      %vm605 = vcmp.ge.f32.partialorder %v477, 0.0
      %vm606 = vcmp.ge.f32.partialorder %v478, 0.0
      %vm607 = vcmp.ge.f32.partialorder %v479, 0.0
      %vm608 = vcmp.ge.f32.partialorder %v480, 0.0
      %vm609 = vcmp.ge.f32.partialorder %v481, 0.0
      %vm610 = vcmp.ge.f32.partialorder %v482, 0.0
      %vm611 = vcmp.ge.f32.partialorder %v483, 0.0
      %vm612 = vcmp.ge.f32.partialorder %v484, 0.0
      %vm613 = vcmp.ge.f32.partialorder %v485, 0.0
      %vm614 = vcmp.ge.f32.partialorder %v486, 0.0
      %vm615 = vcmp.ge.f32.partialorder %v487, 0.0
      %vm616 = vcmp.ge.f32.partialorder %v488, 0.0
      %vm617 = vcmp.ge.f32.partialorder %v489, 0.0
      %vm618 = vcmp.ge.f32.partialorder %v490, 0.0
      %vm619 = vcmp.ge.f32.partialorder %v491, 0.0
      %vm620 = vcmp.ge.f32.partialorder %v492, 0.0
      %vm621 = vcmp.ge.f32.partialorder %v493, 0.0
      %vm622 = vcmp.ge.f32.partialorder %v494, 0.0
      %vm623 = vcmp.ge.f32.partialorder %v495, 0.0
      %vm624 = vcmp.ge.f32.partialorder %v496, 0.0
      %vm625 = vcmp.ge.f32.partialorder %v497, 0.0
      %vm626 = vcmp.ge.f32.partialorder %v498, 0.0
      %vm627 = vcmp.ge.f32.partialorder %v499, 0.0
      %vm628 = vcmp.ge.f32.partialorder %v500, 0.0
      %vm629 = vcmp.ge.f32.partialorder %v501, 0.0
      %vm630 = vcmp.ge.f32.partialorder %v502, 0.0
      %vm631 = vcmp.ge.f32.partialorder %v503, 0.0
      %vm632 = vcmp.ge.f32.partialorder %v504, 0.0
      %vm633 = vcmp.ge.f32.partialorder %v505, 0.0
      %vm634 = vcmp.ge.f32.partialorder %v506, 0.0
      %vm635 = vcmp.ge.f32.partialorder %v507, 0.0
      %vm636 = vcmp.ge.f32.partialorder %v508, 0.0
      %vm637 = vcmp.ge.f32.partialorder %v509, 0.0
      %vm638 = vcmp.ge.f32.partialorder %v510, 0.0
      %vm639 = vcmp.ge.f32.partialorder %v511, 0.0
      %vm640 = vcmp.ge.f32.partialorder %v512, 0.0
      %vm641 = vcmp.ge.f32.partialorder %v513, 0.0
      %vm642 = vcmp.ge.f32.partialorder %v514, 0.0
      %vm643 = vcmp.ge.f32.partialorder %v515, 0.0
      %vm644 = vcmp.ge.f32.partialorder %v516, 0.0
      %vm645 = vcmp.ge.f32.partialorder %v517, 0.0
      %vm646 = vcmp.ge.f32.partialorder %v518, 0.0
      %vm647 = vcmp.ge.f32.partialorder %v519, 0.0
      %vm648 = vcmp.ge.f32.partialorder %v520, 0.0
      %vm649 = vcmp.ge.f32.partialorder %v521, 0.0
      %vm650 = vcmp.ge.f32.partialorder %v522, 0.0
      %vm651 = vcmp.ge.f32.partialorder %v523, 0.0
      %vm652 = vcmp.ge.f32.partialorder %v524, 0.0
      %vm653 = vcmp.ge.f32.partialorder %v525, 0.0
      %vm654 = vcmp.ge.f32.partialorder %v526, 0.0
      %vm655 = vcmp.ge.f32.partialorder %v527, 0.0
      %vm656 = vcmp.ge.f32.partialorder %v528, 0.0
      %vm657 = vcmp.ge.f32.partialorder %v529, 0.0
      %vm658 = vcmp.ge.f32.partialorder %v530, 0.0
      %vm659 = vcmp.ge.f32.partialorder %v531, 0.0
      %vm660 = vcmp.ge.f32.partialorder %v532, 0.0
      %vm661 = vcmp.ge.f32.partialorder %v533, 0.0
      %vm662 = vcmp.ge.f32.partialorder %v534, 0.0
      %vm663 = vcmp.ge.f32.partialorder %v535, 0.0
      %vm664 = vcmp.ge.f32.partialorder %v536, 0.0
      %vm665 = vcmp.ge.f32.partialorder %v537, 0.0
      %vm666 = vcmp.ge.f32.partialorder %v538, 0.0
      %vm667 = vcmp.ge.f32.partialorder %v539, 0.0
      %vm668 = vcmp.ge.f32.partialorder %v540, 0.0
      %vm669 = vcmp.ge.f32.partialorder %v541, 0.0
      %vm670 = vcmp.ge.f32.partialorder %v542, 0.0
      %vm671 = vcmp.ge.f32.partialorder %v543, 0.0
      %vm672 = vcmp.ge.f32.partialorder %v544, 0.0
      %vm673 = vcmp.ge.f32.partialorder %v545, 0.0
      %vm674 = vcmp.ge.f32.partialorder %v546, 0.0
      %vm675 = vcmp.ge.f32.partialorder %v547, 0.0
      %vm676 = vcmp.ge.f32.partialorder %v548, 0.0
      %vm677 = vcmp.ge.f32.partialorder %v549, 0.0
      %vm678 = vcmp.ge.f32.partialorder %v550, 0.0
      %vm679 = vcmp.ge.f32.partialorder %v551, 0.0
      %vm680 = vcmp.ge.f32.partialorder %v552, 0.0
      %vm681 = vcmp.ge.f32.partialorder %v553, 0.0
      %vm682 = vcmp.ge.f32.partialorder %v554, 0.0
      %vm683 = vcmp.ge.f32.partialorder %v555, 0.0
      %vm684 = vcmp.ge.f32.partialorder %v556, 0.0
      %vm685 = vcmp.ge.f32.partialorder %v557, 0.0
      %vm686 = vcmp.ge.f32.partialorder %v558, 0.0
      %vm687 = vcmp.ge.f32.partialorder %v559, 0.0
      %vm688 = vcmp.ge.f32.partialorder %v560, 0.0
      %vm689 = vcmp.ge.f32.partialorder %v561, 0.0
      %vm690 = vcmp.ge.f32.partialorder %v562, 0.0
      %vm691 = vcmp.ge.f32.partialorder %v563, 0.0
      %vm692 = vcmp.ge.f32.partialorder %v564, 0.0
      %vm693 = vcmp.ge.f32.partialorder %v565, 0.0
      %v694 = vmul.f32 %v438, 0.01
      %v695 = vmul.f32 %v439, 0.01
      %v696 = vmul.f32 %v440, 0.01
      %v697 = vmul.f32 %v441, 0.01
      %v698 = vmul.f32 %v442, 0.01
      %v699 = vmul.f32 %v443, 0.01
      %v700 = vmul.f32 %v444, 0.01
      %v701 = vmul.f32 %v445, 0.01
      %v702 = vmul.f32 %v446, 0.01
      %v703 = vmul.f32 %v447, 0.01
      %v704 = vmul.f32 %v448, 0.01
      %v705 = vmul.f32 %v449, 0.01
      %v706 = vmul.f32 %v450, 0.01
      %v707 = vmul.f32 %v451, 0.01
      %v708 = vmul.f32 %v452, 0.01
      %v709 = vmul.f32 %v453, 0.01
      %v710 = vmul.f32 %v454, 0.01
      %v711 = vmul.f32 %v455, 0.01
      %v712 = vmul.f32 %v456, 0.01
      %v713 = vmul.f32 %v457, 0.01
      %v714 = vmul.f32 %v458, 0.01
      %v715 = vmul.f32 %v459, 0.01
      %v716 = vmul.f32 %v460, 0.01
      %v717 = vmul.f32 %v461, 0.01
      %v718 = vmul.f32 %v462, 0.01
      %v719 = vmul.f32 %v463, 0.01
      %v720 = vmul.f32 %v464, 0.01
      %v721 = vmul.f32 %v465, 0.01
      %v722 = vmul.f32 %v466, 0.01
      %v723 = vmul.f32 %v467, 0.01
      %v724 = vmul.f32 %v468, 0.01
      %v725 = vmul.f32 %v469, 0.01
      %v726 = vmul.f32 %v470, 0.01
      %v727 = vmul.f32 %v471, 0.01
      %v728 = vmul.f32 %v472, 0.01
      %v729 = vmul.f32 %v473, 0.01
      %v730 = vmul.f32 %v474, 0.01
      %v731 = vmul.f32 %v475, 0.01
      %v732 = vmul.f32 %v476, 0.01
      %v733 = vmul.f32 %v477, 0.01
      %v734 = vmul.f32 %v478, 0.01
      %v735 = vmul.f32 %v479, 0.01
      %v736 = vmul.f32 %v480, 0.01
      %v737 = vmul.f32 %v481, 0.01
      %v738 = vmul.f32 %v482, 0.01
      %v739 = vmul.f32 %v483, 0.01
      %v740 = vmul.f32 %v484, 0.01
      %v741 = vmul.f32 %v485, 0.01
      %v742 = vmul.f32 %v486, 0.01
      %v743 = vmul.f32 %v487, 0.01
      %v744 = vmul.f32 %v488, 0.01
      %v745 = vmul.f32 %v489, 0.01
      %v746 = vmul.f32 %v490, 0.01
      %v747 = vmul.f32 %v491, 0.01
      %v748 = vmul.f32 %v492, 0.01
      %v749 = vmul.f32 %v493, 0.01
      %v750 = vmul.f32 %v494, 0.01
      %v751 = vmul.f32 %v495, 0.01
      %v752 = vmul.f32 %v496, 0.01
      %v753 = vmul.f32 %v497, 0.01
      %v754 = vmul.f32 %v498, 0.01
      %v755 = vmul.f32 %v499, 0.01
      %v756 = vmul.f32 %v500, 0.01
      %v757 = vmul.f32 %v501, 0.01
      %v758 = vmul.f32 %v502, 0.01
      %v759 = vmul.f32 %v503, 0.01
      %v760 = vmul.f32 %v504, 0.01
      %v761 = vmul.f32 %v505, 0.01
      %v762 = vmul.f32 %v506, 0.01
      %v763 = vmul.f32 %v507, 0.01
      %v764 = vmul.f32 %v508, 0.01
      %v765 = vmul.f32 %v509, 0.01
      %v766 = vmul.f32 %v510, 0.01
      %v767 = vmul.f32 %v511, 0.01
      %v768 = vmul.f32 %v512, 0.01
      %v769 = vmul.f32 %v513, 0.01
      %v770 = vmul.f32 %v514, 0.01
      %v771 = vmul.f32 %v515, 0.01
      %v772 = vmul.f32 %v516, 0.01
      %v773 = vmul.f32 %v517, 0.01
      %v774 = vmul.f32 %v518, 0.01
      %v775 = vmul.f32 %v519, 0.01
      %v776 = vmul.f32 %v520, 0.01
      %v777 = vmul.f32 %v521, 0.01
      %v778 = vmul.f32 %v522, 0.01
      %v779 = vmul.f32 %v523, 0.01
      %v780 = vmul.f32 %v524, 0.01
      %v781 = vmul.f32 %v525, 0.01
      %v782 = vmul.f32 %v526, 0.01
      %v783 = vmul.f32 %v527, 0.01
      %v784 = vmul.f32 %v528, 0.01
      %v785 = vmul.f32 %v529, 0.01
      %v786 = vmul.f32 %v530, 0.01
      %v787 = vmul.f32 %v531, 0.01
      %v788 = vmul.f32 %v532, 0.01
      %v789 = vmul.f32 %v533, 0.01
      %v790 = vmul.f32 %v534, 0.01
      %v791 = vmul.f32 %v535, 0.01
      %v792 = vmul.f32 %v536, 0.01
      %v793 = vmul.f32 %v537, 0.01
      %v794 = vmul.f32 %v538, 0.01
      %v795 = vmul.f32 %v539, 0.01
      %v796 = vmul.f32 %v540, 0.01
      %v797 = vmul.f32 %v541, 0.01
      %v798 = vmul.f32 %v542, 0.01
      %v799 = vmul.f32 %v543, 0.01
      %v800 = vmul.f32 %v544, 0.01
      %v801 = vmul.f32 %v545, 0.01
      %v802 = vmul.f32 %v546, 0.01
      %v803 = vmul.f32 %v547, 0.01
      %v804 = vmul.f32 %v548, 0.01
      %v805 = vmul.f32 %v549, 0.01
      %v806 = vmul.f32 %v550, 0.01
      %v807 = vmul.f32 %v551, 0.01
      %v808 = vmul.f32 %v552, 0.01
      %v809 = vmul.f32 %v553, 0.01
      %v810 = vmul.f32 %v554, 0.01
      %v811 = vmul.f32 %v555, 0.01
      %v812 = vmul.f32 %v556, 0.01
      %v813 = vmul.f32 %v557, 0.01
      %v814 = vmul.f32 %v558, 0.01
      %v815 = vmul.f32 %v559, 0.01
      %v816 = vmul.f32 %v560, 0.01
      %v817 = vmul.f32 %v561, 0.01
      %v818 = vmul.f32 %v562, 0.01
      %v819 = vmul.f32 %v563, 0.01
      %v820 = vmul.f32 %v564, 0.01
      %v821 = vmul.f32 %v565, 0.01
      %v822 = vsel %vm566, %v438, %v694
      %v823 = vsel %vm567, %v439, %v695
      %v824 = vsel %vm568, %v440, %v696
      %v825 = vsel %vm569, %v441, %v697
      %v826 = vsel %vm570, %v442, %v698
      %v827 = vsel %vm571, %v443, %v699
      %v828 = vsel %vm572, %v444, %v700
      %v829 = vsel %vm573, %v445, %v701
      %v830 = vsel %vm574, %v446, %v702
      %v831 = vsel %vm575, %v447, %v703
      %v832 = vsel %vm576, %v448, %v704
      %v833 = vsel %vm577, %v449, %v705
      %v834 = vsel %vm578, %v450, %v706
      %v835 = vsel %vm579, %v451, %v707
      %v836 = vsel %vm580, %v452, %v708
      %v837 = vsel %vm581, %v453, %v709
      %v838 = vsel %vm582, %v454, %v710
      %v839 = vsel %vm583, %v455, %v711
      %v840 = vsel %vm584, %v456, %v712
      %v841 = vsel %vm585, %v457, %v713
      %v842 = vsel %vm586, %v458, %v714
      %v843 = vsel %vm587, %v459, %v715
      %v844 = vsel %vm588, %v460, %v716
      %v845 = vsel %vm589, %v461, %v717
      %v846 = vsel %vm590, %v462, %v718
      %v847 = vsel %vm591, %v463, %v719
      %v848 = vsel %vm592, %v464, %v720
      %v849 = vsel %vm593, %v465, %v721
      %v850 = vsel %vm594, %v466, %v722
      %v851 = vsel %vm595, %v467, %v723
      %v852 = vsel %vm596, %v468, %v724
      %v853 = vsel %vm597, %v469, %v725
      %v854 = vsel %vm598, %v470, %v726
      %v855 = vsel %vm599, %v471, %v727
      %v856 = vsel %vm600, %v472, %v728
      %v857 = vsel %vm601, %v473, %v729
      %v858 = vsel %vm602, %v474, %v730
      %v859 = vsel %vm603, %v475, %v731
      %v860 = vsel %vm604, %v476, %v732
      %v861 = vsel %vm605, %v477, %v733
      %v862 = vsel %vm606, %v478, %v734
      %v863 = vsel %vm607, %v479, %v735
      %v864 = vsel %vm608, %v480, %v736
      %v865 = vsel %vm609, %v481, %v737
      %v866 = vsel %vm610, %v482, %v738
      %v867 = vsel %vm611, %v483, %v739
      %v868 = vsel %vm612, %v484, %v740
      %v869 = vsel %vm613, %v485, %v741
      %v870 = vsel %vm614, %v486, %v742
      %v871 = vsel %vm615, %v487, %v743
      %v872 = vsel %vm616, %v488, %v744
      %v873 = vsel %vm617, %v489, %v745
      %v874 = vsel %vm618, %v490, %v746
      %v875 = vsel %vm619, %v491, %v747
      %v876 = vsel %vm620, %v492, %v748
      %v877 = vsel %vm621, %v493, %v749
      %v878 = vsel %vm622, %v494, %v750
      %v879 = vsel %vm623, %v495, %v751
      %v880 = vsel %vm624, %v496, %v752
      %v881 = vsel %vm625, %v497, %v753
      %v882 = vsel %vm626, %v498, %v754
      %v883 = vsel %vm627, %v499, %v755
      %v884 = vsel %vm628, %v500, %v756
      %v885 = vsel %vm629, %v501, %v757
      %v886 = vsel %vm630, %v502, %v758
      %v887 = vsel %vm631, %v503, %v759
      %v888 = vsel %vm632, %v504, %v760
      %v889 = vsel %vm633, %v505, %v761
      %v890 = vsel %vm634, %v506, %v762
      %v891 = vsel %vm635, %v507, %v763
      %v892 = vsel %vm636, %v508, %v764
      %v893 = vsel %vm637, %v509, %v765
      %v894 = vsel %vm638, %v510, %v766
      %v895 = vsel %vm639, %v511, %v767
      %v896 = vsel %vm640, %v512, %v768
      %v897 = vsel %vm641, %v513, %v769
      %v898 = vsel %vm642, %v514, %v770
      %v899 = vsel %vm643, %v515, %v771
      %v900 = vsel %vm644, %v516, %v772
      %v901 = vsel %vm645, %v517, %v773
      %v902 = vsel %vm646, %v518, %v774
      %v903 = vsel %vm647, %v519, %v775
      %v904 = vsel %vm648, %v520, %v776
      %v905 = vsel %vm649, %v521, %v777
      %v906 = vsel %vm650, %v522, %v778
      %v907 = vsel %vm651, %v523, %v779
      %v908 = vsel %vm652, %v524, %v780
      %v909 = vsel %vm653, %v525, %v781
      %v910 = vsel %vm654, %v526, %v782
      %v911 = vsel %vm655, %v527, %v783
      %v912 = vsel %vm656, %v528, %v784
      %v913 = vsel %vm657, %v529, %v785
      %v914 = vsel %vm658, %v530, %v786
      %v915 = vsel %vm659, %v531, %v787
      %v916 = vsel %vm660, %v532, %v788
      %v917 = vsel %vm661, %v533, %v789
      %v918 = vsel %vm662, %v534, %v790
      %v919 = vsel %vm663, %v535, %v791
      %v920 = vsel %vm664, %v536, %v792
      %v921 = vsel %vm665, %v537, %v793
      %v922 = vsel %vm666, %v538, %v794
      %v923 = vsel %vm667, %v539, %v795
      %v924 = vsel %vm668, %v540, %v796
      %v925 = vsel %vm669, %v541, %v797
      %v926 = vsel %vm670, %v542, %v798
      %v927 = vsel %vm671, %v543, %v799
      %v928 = vsel %vm672, %v544, %v800
      %v929 = vsel %vm673, %v545, %v801
      %v930 = vsel %vm674, %v546, %v802
      %v931 = vsel %vm675, %v547, %v803
      %v932 = vsel %vm676, %v548, %v804
      %v933 = vsel %vm677, %v549, %v805
      %v934 = vsel %vm678, %v550, %v806
      %v935 = vsel %vm679, %v551, %v807
      %v936 = vsel %vm680, %v552, %v808
      %v937 = vsel %vm681, %v553, %v809
      %v938 = vsel %vm682, %v554, %v810
      %v939 = vsel %vm683, %v555, %v811
      %v940 = vsel %vm684, %v556, %v812
      %v941 = vsel %vm685, %v557, %v813
      %v942 = vsel %vm686, %v558, %v814
      %v943 = vsel %vm687, %v559, %v815
      %v944 = vsel %vm688, %v560, %v816
      %v945 = vsel %vm689, %v561, %v817
      %v946 = vsel %vm690, %v562, %v818
      %v947 = vsel %vm691, %v563, %v819
      %v948 = vsel %vm692, %v564, %v820
      %v949 = vsel %vm693, %v565, %v821
      %vm950 = vcmask 64512
      %951 = vst.msk [vmem:[%s172] sm:$0xff] %vm950, %v822
      %952 = vst.msk [vmem:[%s172 + $0x8] sm:$0xff] %vm950, %v823
      %953 = vst.msk [vmem:[%s172 + $0x10] sm:$0xff] %vm950, %v824
      %954 = vst.msk [vmem:[%s172 + $0x18] sm:$0xff] %vm950, %v825
      %955 = vst.msk [vmem:[%s172 + $0x20] sm:$0xff] %vm950, %v826
      %956 = vst.msk [vmem:[%s172 + $0x28] sm:$0xff] %vm950, %v827
      %957 = vst.msk [vmem:[%s172 + $0x30] sm:$0xff] %vm950, %v828
      %958 = vst.msk [vmem:[%s172 + $0x38] sm:$0xff] %vm950, %v829
      %959 = vst.msk [vmem:[%s172 + $0x40] sm:$0xff] %vm950, %v830
      %960 = vst.msk [vmem:[%s172 + $0x48] sm:$0xff] %vm950, %v831
      %961 = vst.msk [vmem:[%s172 + $0x50] sm:$0xff] %vm950, %v832
      %962 = vst.msk [vmem:[%s172 + $0x58] sm:$0xff] %vm950, %v833
      %963 = vst.msk [vmem:[%s172 + $0x60] sm:$0xff] %vm950, %v834
      %964 = vst.msk [vmem:[%s172 + $0x68] sm:$0xff] %vm950, %v835
      %965 = vst.msk [vmem:[%s172 + $0x70] sm:$0xff] %vm950, %v836
      %966 = vst.msk [vmem:[%s172 + $0x78] sm:$0xff] %vm950, %v837
      %967 = vst.msk [vmem:[%s172 + $0x80] sm:$0xff] %vm950, %v838
      %968 = vst.msk [vmem:[%s172 + $0x88] sm:$0xff] %vm950, %v839
      %969 = vst.msk [vmem:[%s172 + $0x90] sm:$0xff] %vm950, %v840
      %970 = vst.msk [vmem:[%s172 + $0x98] sm:$0xff] %vm950, %v841
      %971 = vst.msk [vmem:[%s172 + $0xa0] sm:$0xff] %vm950, %v842
      %972 = vst.msk [vmem:[%s172 + $0xa8] sm:$0xff] %vm950, %v843
      %973 = vst.msk [vmem:[%s172 + $0xb0] sm:$0xff] %vm950, %v844
      %974 = vst.msk [vmem:[%s172 + $0xb8] sm:$0xff] %vm950, %v845
      %975 = vst.msk [vmem:[%s172 + $0xc0] sm:$0xff] %vm950, %v846
      %976 = vst.msk [vmem:[%s172 + $0xc8] sm:$0xff] %vm950, %v847
      %977 = vst.msk [vmem:[%s172 + $0xd0] sm:$0xff] %vm950, %v848
      %978 = vst.msk [vmem:[%s172 + $0xd8] sm:$0xff] %vm950, %v849
      %979 = vst.msk [vmem:[%s172 + $0xe0] sm:$0xff] %vm950, %v850
      %980 = vst.msk [vmem:[%s172 + $0xe8] sm:$0xff] %vm950, %v851
      %981 = vst.msk [vmem:[%s172 + $0xf0] sm:$0xff] %vm950, %v852
      %982 = vst.msk [vmem:[%s172 + $0xf8] sm:$0xff] %vm950, %v853
      %983 = vst.msk [vmem:[%s172 + $0x100] sm:$0xff] %vm950, %v854
      %984 = vst.msk [vmem:[%s172 + $0x108] sm:$0xff] %vm950, %v855
      %985 = vst.msk [vmem:[%s172 + $0x110] sm:$0xff] %vm950, %v856
      %986 = vst.msk [vmem:[%s172 + $0x118] sm:$0xff] %vm950, %v857
      %987 = vst.msk [vmem:[%s172 + $0x120] sm:$0xff] %vm950, %v858
      %988 = vst.msk [vmem:[%s172 + $0x128] sm:$0xff] %vm950, %v859
      %989 = vst.msk [vmem:[%s172 + $0x130] sm:$0xff] %vm950, %v860
      %990 = vst.msk [vmem:[%s172 + $0x138] sm:$0xff] %vm950, %v861
      %991 = vst.msk [vmem:[%s172 + $0x140] sm:$0xff] %vm950, %v862
      %992 = vst.msk [vmem:[%s172 + $0x148] sm:$0xff] %vm950, %v863
      %993 = vst.msk [vmem:[%s172 + $0x150] sm:$0xff] %vm950, %v864
      %994 = vst.msk [vmem:[%s172 + $0x158] sm:$0xff] %vm950, %v865
      %995 = vst.msk [vmem:[%s172 + $0x160] sm:$0xff] %vm950, %v866
      %996 = vst.msk [vmem:[%s172 + $0x168] sm:$0xff] %vm950, %v867
      %997 = vst.msk [vmem:[%s172 + $0x170] sm:$0xff] %vm950, %v868
      %998 = vst.msk [vmem:[%s172 + $0x178] sm:$0xff] %vm950, %v869
      %999 = vst.msk [vmem:[%s172 + $0x180] sm:$0xff] %vm950, %v870
      %1000 = vst.msk [vmem:[%s172 + $0x188] sm:$0xff] %vm950, %v871
      %1001 = vst.msk [vmem:[%s172 + $0x190] sm:$0xff] %vm950, %v872
      %1002 = vst.msk [vmem:[%s172 + $0x198] sm:$0xff] %vm950, %v873
      %1003 = vst.msk [vmem:[%s172 + $0x1a0] sm:$0xff] %vm950, %v874
      %1004 = vst.msk [vmem:[%s172 + $0x1a8] sm:$0xff] %vm950, %v875
      %1005 = vst.msk [vmem:[%s172 + $0x1b0] sm:$0xff] %vm950, %v876
      %1006 = vst.msk [vmem:[%s172 + $0x1b8] sm:$0xff] %vm950, %v877
      %1007 = vst.msk [vmem:[%s172 + $0x1c0] sm:$0xff] %vm950, %v878
      %1008 = vst.msk [vmem:[%s172 + $0x1c8] sm:$0xff] %vm950, %v879
      %1009 = vst.msk [vmem:[%s172 + $0x1d0] sm:$0xff] %vm950, %v880
      %1010 = vst.msk [vmem:[%s172 + $0x1d8] sm:$0xff] %vm950, %v881
      %1011 = vst.msk [vmem:[%s172 + $0x1e0] sm:$0xff] %vm950, %v882
      %1012 = vst.msk [vmem:[%s172 + $0x1e8] sm:$0xff] %vm950, %v883
      %1013 = vst.msk [vmem:[%s172 + $0x1f0] sm:$0xff] %vm950, %v884
      %1014 = vst.msk [vmem:[%s172 + $0x1f8] sm:$0xff] %vm950, %v885
      %1015 = vst.msk [vmem:[%s172 + $0x200] sm:$0xff] %vm950, %v886
      %1016 = vst.msk [vmem:[%s172 + $0x208] sm:$0xff] %vm950, %v887
      %1017 = vst.msk [vmem:[%s172 + $0x210] sm:$0xff] %vm950, %v888
      %1018 = vst.msk [vmem:[%s172 + $0x218] sm:$0xff] %vm950, %v889
      %1019 = vst.msk [vmem:[%s172 + $0x220] sm:$0xff] %vm950, %v890
      %1020 = vst.msk [vmem:[%s172 + $0x228] sm:$0xff] %vm950, %v891
      %1021 = vst.msk [vmem:[%s172 + $0x230] sm:$0xff] %vm950, %v892
      %1022 = vst.msk [vmem:[%s172 + $0x238] sm:$0xff] %vm950, %v893
      %1023 = vst.msk [vmem:[%s172 + $0x240] sm:$0xff] %vm950, %v894
      %1024 = vst.msk [vmem:[%s172 + $0x248] sm:$0xff] %vm950, %v895
      %1025 = vst.msk [vmem:[%s172 + $0x250] sm:$0xff] %vm950, %v896
      %1026 = vst.msk [vmem:[%s172 + $0x258] sm:$0xff] %vm950, %v897
      %1027 = vst.msk [vmem:[%s172 + $0x260] sm:$0xff] %vm950, %v898
      %1028 = vst.msk [vmem:[%s172 + $0x268] sm:$0xff] %vm950, %v899
      %1029 = vst.msk [vmem:[%s172 + $0x270] sm:$0xff] %vm950, %v900
      %1030 = vst.msk [vmem:[%s172 + $0x278] sm:$0xff] %vm950, %v901
      %1031 = vst.msk [vmem:[%s172 + $0x280] sm:$0xff] %vm950, %v902
      %1032 = vst.msk [vmem:[%s172 + $0x288] sm:$0xff] %vm950, %v903
      %1033 = vst.msk [vmem:[%s172 + $0x290] sm:$0xff] %vm950, %v904
      %1034 = vst.msk [vmem:[%s172 + $0x298] sm:$0xff] %vm950, %v905
      %1035 = vst.msk [vmem:[%s172 + $0x2a0] sm:$0xff] %vm950, %v906
      %1036 = vst.msk [vmem:[%s172 + $0x2a8] sm:$0xff] %vm950, %v907
      %1037 = vst.msk [vmem:[%s172 + $0x2b0] sm:$0xff] %vm950, %v908
      %1038 = vst.msk [vmem:[%s172 + $0x2b8] sm:$0xff] %vm950, %v909
      %1039 = vst.msk [vmem:[%s172 + $0x2c0] sm:$0xff] %vm950, %v910
      %1040 = vst.msk [vmem:[%s172 + $0x2c8] sm:$0xff] %vm950, %v911
      %1041 = vst.msk [vmem:[%s172 + $0x2d0] sm:$0xff] %vm950, %v912
      %1042 = vst.msk [vmem:[%s172 + $0x2d8] sm:$0xff] %vm950, %v913
      %1043 = vst.msk [vmem:[%s172 + $0x2e0] sm:$0xff] %vm950, %v914
      %1044 = vst.msk [vmem:[%s172 + $0x2e8] sm:$0xff] %vm950, %v915
      %1045 = vst.msk [vmem:[%s172 + $0x2f0] sm:$0xff] %vm950, %v916
      %1046 = vst.msk [vmem:[%s172 + $0x2f8] sm:$0xff] %vm950, %v917
      %1047 = vst.msk [vmem:[%s172 + $0x300] sm:$0xff] %vm950, %v918
      %1048 = vst.msk [vmem:[%s172 + $0x308] sm:$0xff] %vm950, %v919
      %1049 = vst.msk [vmem:[%s172 + $0x310] sm:$0xff] %vm950, %v920
      %1050 = vst.msk [vmem:[%s172 + $0x318] sm:$0xff] %vm950, %v921
      %1051 = vst.msk [vmem:[%s172 + $0x320] sm:$0xff] %vm950, %v922
      %1052 = vst.msk [vmem:[%s172 + $0x328] sm:$0xff] %vm950, %v923
      %1053 = vst.msk [vmem:[%s172 + $0x330] sm:$0xff] %vm950, %v924
      %1054 = vst.msk [vmem:[%s172 + $0x338] sm:$0xff] %vm950, %v925
      %1055 = vst.msk [vmem:[%s172 + $0x340] sm:$0xff] %vm950, %v926
      %1056 = vst.msk [vmem:[%s172 + $0x348] sm:$0xff] %vm950, %v927
      %1057 = vst.msk [vmem:[%s172 + $0x350] sm:$0xff] %vm950, %v928
      %1058 = vst.msk [vmem:[%s172 + $0x358] sm:$0xff] %vm950, %v929
      %1059 = vst.msk [vmem:[%s172 + $0x360] sm:$0xff] %vm950, %v930
      %1060 = vst.msk [vmem:[%s172 + $0x368] sm:$0xff] %vm950, %v931
      %1061 = vst.msk [vmem:[%s172 + $0x370] sm:$0xff] %vm950, %v932
      %1062 = vst.msk [vmem:[%s172 + $0x378] sm:$0xff] %vm950, %v933
      %1063 = vst.msk [vmem:[%s172 + $0x380] sm:$0xff] %vm950, %v934
      %1064 = vst.msk [vmem:[%s172 + $0x388] sm:$0xff] %vm950, %v935
      %1065 = vst.msk [vmem:[%s172 + $0x390] sm:$0xff] %vm950, %v936
      %1066 = vst.msk [vmem:[%s172 + $0x398] sm:$0xff] %vm950, %v937
      %1067 = vst.msk [vmem:[%s172 + $0x3a0] sm:$0xff] %vm950, %v938
      %1068 = vst.msk [vmem:[%s172 + $0x3a8] sm:$0xff] %vm950, %v939
      %1069 = vst.msk [vmem:[%s172 + $0x3b0] sm:$0xff] %vm950, %v940
      %1070 = vst.msk [vmem:[%s172 + $0x3b8] sm:$0xff] %vm950, %v941
      %1071 = vst.msk [vmem:[%s172 + $0x3c0] sm:$0xff] %vm950, %v942
      %1072 = vst.msk [vmem:[%s172 + $0x3c8] sm:$0xff] %vm950, %v943
      %1073 = vst.msk [vmem:[%s172 + $0x3d0] sm:$0xff] %vm950, %v944
      %1074 = vst.msk [vmem:[%s172 + $0x3d8] sm:$0xff] %vm950, %v945
      %1075 = vst.msk [vmem:[%s172 + $0x3e0] sm:$0xff] %vm950, %v946
      %1076 = vst.msk [vmem:[%s172 + $0x3e8] sm:$0xff] %vm950, %v947
      %1077 = vst.msk [vmem:[%s172 + $0x3f0] sm:$0xff] %vm950, %v948
      %1078 = vst.msk [vmem:[%s172 + $0x3f8] sm:$0xff] %vm950, %v949
      %s1079 = smul.u32 128, %s14
      %p1080 = scmp.lt.s32.totalorder %s1079, 255
      %s1081 = scalar_select %p1080, %s1079, 255
      %s1082 = smul.addr %s1081, 8
      %s1083 = scalar_lea.vmem %s3, %s1082
      // Predicated region
      $region33: #{up_forward.5} parent=31 // pred_check
        %p1084 = pneg %p100
      $region34: #{up_forward.5} parent=31 // pred_check_branch
        %1086 = sbr.rel (%p1084) target = $region36
      $region35: #{up_forward.5} parent=31 // pred_region
        %s1087 = smul.u32 128, %s14
      $region36: #{up_forward.5} parent=31 // pred_fallthru
        _
    $region32: #{up_forward.5} parent=5 // pred_fallthru
      _
    %p1088 = scmp.le.s32.totalorder 2, %s9
    // Predicated region
    $region37: #{up_forward.5} parent=5 // pred_check
      %p1089 = pneg %p1088
    $region38: #{up_forward.5} parent=5 // pred_check_branch
      %1091 = sbr.rel (%p1089) target = $region40
    $region39: #{up_forward.5} parent=5 // pred_region
      %s1092 = ssub.s32 %s9, 2
      // Predicated region
      $region41: #{up_forward.5} parent=39 // pred_check
        %p1093 = pneg %p106
      $region42: #{up_forward.5} parent=39 // pred_check_branch
        %1095 = sbr.rel (%p1093) target = $region44
      $region43: #{up_forward.5} parent=39 // pred_region
        %s1096 = smul.u32 128, %s15
        %p1097 = scmp.lt.s32.totalorder %s1096, 255
        %s1098 = scalar_select %p1097, %s1096, 255
        %s1099 = smul.addr %s1098, 8
        %s1100 = scalar_lea.vmem %s3, %s1099
      $region44: #{up_forward.5} parent=39 // pred_fallthru
        _
    $region40: #{up_forward.5} parent=5 // pred_fallthru
      _
  $region6: #{up_forward.5} parent=0 // loop_footer
    %s13 = sadd.s32 1, %s9
  $region7: #{up_forward.5} parent=0 // loop_footer_branch
    %8 = sbr.rel target = $region3
  $region8: #{up_forward.5} parent=0 // loop_exit
    _

// kernel: up_forward.4
$region0: #{up_forward.4}
  #allocation0 [shape = 'u32[]', space=smem, size = 0x4, offset = 0x4, fixed_abs, tag = 'smem constant byte address 0x4 - core index']
  #allocation1 [shape = 'u32[72,128]{1,0:T(1,128)}', space=vmem, size = 0x9000, scoped, tag = 'internal scratch']
  %s0 = inlined_call_operand.vmem [shape: f32[2,34,34,4], index: 0, kind: input, shape index: {}, may-alias: {0,1}]
  %s1 = inlined_call_operand.vmem [shape: f32[2,34,34,4], index: 1, kind: input, shape index: {}, may-alias: {0,1}]
  %s2 = inlined_call_operand.vmem [shape: f32[2,34,34,4], index: 2, kind: input, shape index: {}, may-alias: {2,3}]
  %s3 = inlined_call_operand.vmem [shape: f32[2,34,34,4], index: 3, kind: input, shape index: {}, may-alias: {2,3}]
  %s4 = inlined_call_operand.vmem [shape: f32[72,8], index: 4, kind: input, shape index: {}]
  %s5 = inlined_call_operand.vmem [shape: f32[2048,8], index: 5, kind: output, shape index: {0}]
  %s6 = inlined_call_operand.vmem [shape: f32[2,2,2,8], index: 6, kind: output, shape index: {1}]
  %7 = xla_tuple %s5, %s6
  %s8 = sld [smem:[#allocation0]]
  $region61: #{up_forward.4} parent=0
    _
  %s10 = ssub.s32 1, %s8
  %s11 = scalar_select 0, %s10, %s8
  loop: start=0, step=1, limit=6
  $region2: #{up_forward.4} parent=0 // loop_pre_header
    _
  $region3: #{up_forward.4} parent=0 // loop_header
    %s13 = sphi 0, %s17
    %p14 = scmp.ge.s32.totalorder %s13, 6
    %s20 = sphi 0, %s32
    %s21 = sphi 0, %s28
    %s22 = sphi 0, %s20
    %s23 = sphi 0, %s21
    %s24 = sphi 0, %s22
    %s25 = sphi 0, %s23
    %s37 = sphi 0, %s39
    %s40 = sphi 0, %s37
    %s41 = sphi 0, %s40
    %s57 = sphi 0, %s41
    %s69 = sphi 0, %s71
    %s72 = sphi 0, %s69
    %s73 = sphi 0, %s72
    %s89 = sphi 0, %s73
    %s97 = sphi 0, %s99
    %s100 = sphi 0, %s97
    %s101 = sphi 0, %s100
    %s117 = sphi 0, %s101
    %s129 = sphi 0, %s131
    %s132 = sphi 0, %s129
    %s133 = sphi 0, %s132
    %s149 = sphi 0, %s133
    %s153 = sphi 0, %s153
    %s155 = sphi 0, %s153
    %s156 = sphi 0, %s155
    %s170 = sphi 0, %s156
    %s180 = sphi 0, %s182
    %s183 = sphi 0, %s180
    %s184 = sphi 0, %s183
    %s200 = sphi 0, %s184
    %s208 = sphi 0, %s210
    %s211 = sphi 0, %s208
    %s212 = sphi 0, %s211
    %s228 = sphi 0, %s212
  $region4: #{up_forward.4} parent=0 // loop_header_branch
    %16 = sbr.rel (%p14) target = $region8
  $region5: #{up_forward.4} parent=0 // loop_body
    %s18 = ssub.s32 %s13, 1
    %s19 = ssub.s32 %s13, 2
    %s26 = sadd.s32 1, %s21
    %p27 = scmp.ge.s32.totalorder %s26, 2
    %s28 = scalar_select %p27, 0, %s26
    %s29 = sadd.s32 1, %s20
    %s30 = scalar_select %p27, %s29, %s20
    %p31 = scmp.ge.s32.totalorder %s30, 2
    %s32 = scalar_select %p31, 0, %s30
    %s33 = ssub.s32 %s20, %s32
    %s34 = ssub.s32 %s21, %s28
    %s35 = sor.u32 %s33, %s34
    %p36 = scmp.eq.s32.totalorder %s35, 0
    %s38 = sadd.s32 %s37, 1
    %s39 = scalar_select %p36, %s37, %s38
    %p42 = pneg %p36
    %p43 = scmp.eq.s32.totalorder %s13, 3
    %p44 = por %p42, %p43
    %p45 = scmp.ne.s32.totalorder %s37, %s40
    %p46 = scmp.eq.s32.totalorder %s13, 0
    %p47 = por %p45, %p46
    %p48 = scmp.ne.s32.totalorder %s37, %s40
    %p49 = scmp.eq.s32.totalorder %s18, 3
    %p50 = por %p48, %p49
    %p51 = scmp.ne.s32.totalorder %s40, %s41
    %p52 = scmp.eq.s32.totalorder %s18, 0
    %p53 = por %p51, %p52
    %p54 = scmp.ne.s32.totalorder %s40, %s41
    %p55 = scmp.eq.s32.totalorder %s19, 3
    %p56 = por %p54, %p55
    %p58 = scmp.ne.s32.totalorder %s41, %s57
    %p59 = scmp.eq.s32.totalorder %s19, 0
    %p60 = por %p58, %p59
    %s61 = sadd.s32 %s21, 1
    %s62 = smul.u32 %s61, 8
    %s63 = sadd.s32 %s28, 1
    %s64 = smul.u32 %s63, 8
    %s65 = ssub.s32 %s20, %s32
    %s66 = ssub.s32 %s62, %s64
    %s67 = sor.u32 %s65, %s66
    %p68 = scmp.eq.s32.totalorder %s67, 0
    %s70 = sadd.s32 %s69, 1
    %s71 = scalar_select %p68, %s69, %s70
    %p74 = pneg %p68
    %p75 = scmp.eq.s32.totalorder %s13, 3
    %p76 = por %p74, %p75
    %p77 = scmp.ne.s32.totalorder %s69, %s72
    %p78 = scmp.eq.s32.totalorder %s13, 0
    %p79 = por %p77, %p78
    %p80 = scmp.ne.s32.totalorder %s69, %s72
    %p81 = scmp.eq.s32.totalorder %s18, 3
    %p82 = por %p80, %p81
    %p83 = scmp.ne.s32.totalorder %s72, %s73
    %p84 = scmp.eq.s32.totalorder %s18, 0
    %p85 = por %p83, %p84
    %p86 = scmp.ne.s32.totalorder %s72, %s73
    %p87 = scmp.eq.s32.totalorder %s19, 3
    %p88 = por %p86, %p87
    %p90 = scmp.ne.s32.totalorder %s73, %s89
    %p91 = scmp.eq.s32.totalorder %s19, 0
    %p92 = por %p90, %p91
    %s93 = ssub.s32 %s20, %s32
    %s94 = ssub.s32 %s21, %s28
    %s95 = sor.u32 %s93, %s94
    %p96 = scmp.eq.s32.totalorder %s95, 0
    %s98 = sadd.s32 %s97, 1
    %s99 = scalar_select %p96, %s97, %s98
    %p102 = pneg %p96
    %p103 = scmp.eq.s32.totalorder %s13, 3
    %p104 = por %p102, %p103
    %p105 = scmp.ne.s32.totalorder %s97, %s100
    %p106 = scmp.eq.s32.totalorder %s13, 0
    %p107 = por %p105, %p106
    %p108 = scmp.ne.s32.totalorder %s97, %s100
    %p109 = scmp.eq.s32.totalorder %s18, 3
    %p110 = por %p108, %p109
    %p111 = scmp.ne.s32.totalorder %s100, %s101
    %p112 = scmp.eq.s32.totalorder %s18, 0
    %p113 = por %p111, %p112
    %p114 = scmp.ne.s32.totalorder %s100, %s101
    %p115 = scmp.eq.s32.totalorder %s19, 3
    %p116 = por %p114, %p115
    %p118 = scmp.ne.s32.totalorder %s101, %s117
    %p119 = scmp.eq.s32.totalorder %s19, 0
    %p120 = por %p118, %p119
    %s121 = sadd.s32 %s21, 1
    %s122 = smul.u32 %s121, 8
    %s123 = sadd.s32 %s28, 1
    %s124 = smul.u32 %s123, 8
    %s125 = ssub.s32 %s20, %s32
    %s126 = ssub.s32 %s122, %s124
    %s127 = sor.u32 %s125, %s126
    %p128 = scmp.eq.s32.totalorder %s127, 0
    %s130 = sadd.s32 %s129, 1
    %s131 = scalar_select %p128, %s129, %s130
    %p134 = pneg %p128
    %p135 = scmp.eq.s32.totalorder %s13, 3
    %p136 = por %p134, %p135
    %p137 = scmp.ne.s32.totalorder %s129, %s132
    %p138 = scmp.eq.s32.totalorder %s13, 0
    %p139 = por %p137, %p138
    %p140 = scmp.ne.s32.totalorder %s129, %s132
    %p141 = scmp.eq.s32.totalorder %s18, 3
    %p142 = por %p140, %p141
    %p143 = scmp.ne.s32.totalorder %s132, %s133
    %p144 = scmp.eq.s32.totalorder %s18, 0
    %p145 = por %p143, %p144
    %p146 = scmp.ne.s32.totalorder %s132, %s133
    %p147 = scmp.eq.s32.totalorder %s19, 3
    %p148 = por %p146, %p147
    %p150 = scmp.ne.s32.totalorder %s133, %s149
    %p151 = scmp.eq.s32.totalorder %s19, 0
    %p152 = por %p150, %p151
    %s154 = sadd.s32 %s153, 1
    %p157 = scmp.eq.s32.totalorder %s13, 3
    %p158 = scmp.ne.s32.totalorder %s153, %s155
    %p159 = scmp.eq.s32.totalorder %s13, 0
    %p160 = por %p158, %p159
    %p161 = scmp.ne.s32.totalorder %s153, %s155
    %p162 = scmp.eq.s32.totalorder %s18, 3
    %p163 = por %p161, %p162
    %p164 = scmp.ne.s32.totalorder %s155, %s156
    %p165 = scmp.eq.s32.totalorder %s18, 0
    %p166 = por %p164, %p165
    %p167 = scmp.ne.s32.totalorder %s155, %s156
    %p168 = scmp.eq.s32.totalorder %s19, 3
    %p169 = por %p167, %p168
    %p171 = scmp.ne.s32.totalorder %s156, %s170
    %p172 = scmp.eq.s32.totalorder %s19, 0
    %p173 = por %p171, %p172
    %s174 = smul.u32 %s20, 2
    %s175 = sadd.s32 %s174, %s21
    %s176 = smul.u32 %s32, 2
    %s177 = sadd.s32 %s176, %s28
    %s178 = ssub.s32 %s175, %s177
    %p179 = scmp.eq.s32.totalorder %s178, 0
    %s181 = sadd.s32 %s180, 1
    %s182 = scalar_select %p179, %s180, %s181
    %p185 = pneg %p179
    %p186 = scmp.eq.s32.totalorder %s13, 3
    %p187 = por %p185, %p186
    %p188 = scmp.ne.s32.totalorder %s180, %s183
    %p189 = scmp.eq.s32.totalorder %s13, 0
    %p190 = por %p188, %p189
    %p191 = scmp.ne.s32.totalorder %s180, %s183
    %p192 = scmp.eq.s32.totalorder %s18, 3
    %p193 = por %p191, %p192
    %p194 = scmp.ne.s32.totalorder %s183, %s184
    %p195 = scmp.eq.s32.totalorder %s18, 0
    %p196 = por %p194, %p195
    %p197 = scmp.ne.s32.totalorder %s183, %s184
    %p198 = scmp.eq.s32.totalorder %s19, 3
    %p199 = por %p197, %p198
    %p201 = scmp.ne.s32.totalorder %s184, %s200
    %p202 = scmp.eq.s32.totalorder %s19, 0
    %p203 = por %p201, %p202
    %s204 = ssub.s32 %s20, %s32
    %s205 = ssub.s32 %s21, %s28
    %s206 = sor.u32 %s204, %s205
    %p207 = scmp.eq.s32.totalorder %s206, 0
    %s209 = sadd.s32 %s208, 1
    %s210 = scalar_select %p207, %s208, %s209
    %p213 = pneg %p207
    %p214 = scmp.eq.s32.totalorder %s13, 3
    %p215 = por %p213, %p214
    %p216 = scmp.ne.s32.totalorder %s208, %s211
    %p217 = scmp.eq.s32.totalorder %s13, 0
    %p218 = por %p216, %p217
    %p219 = scmp.ne.s32.totalorder %s208, %s211
    %p220 = scmp.eq.s32.totalorder %s18, 3
    %p221 = por %p219, %p220
    %p222 = scmp.ne.s32.totalorder %s211, %s212
    %p223 = scmp.eq.s32.totalorder %s18, 0
    %p224 = por %p222, %p223
    %p225 = scmp.ne.s32.totalorder %s211, %s212
    %p226 = scmp.eq.s32.totalorder %s19, 3
    %p227 = por %p225, %p226
    %p229 = scmp.ne.s32.totalorder %s212, %s228
    %p230 = scmp.eq.s32.totalorder %s19, 0
    %p231 = por %p229, %p230
    %p232 = scmp.le.s32.totalorder 1, %s13
    %p233 = scmp.lt.s32.totalorder %s13, 5
    %p234 = pnand %p232, %p233
    %p235 = pneg %p234
    // Predicated region
    $region9: #{up_forward.4} parent=5 // pred_check
      _
    $region10: #{up_forward.4} parent=5 // pred_check_branch
      %237 = sbr.rel (%p234) target = $region12
    $region11: #{up_forward.4} parent=5 // pred_region
      %s238 = ssub.s32 %s13, 1
      // Predicated region
      $region13: #{up_forward.4} parent=11 // pred_check
        %p239 = pneg %p166
      $region14: #{up_forward.4} parent=11 // pred_check_branch
        %241 = sbr.rel (%p239) target = $region16
      $region15: #{up_forward.4} parent=11 // pred_region
        _
      $region16: #{up_forward.4} parent=11 // pred_fallthru
        _
    $region12: #{up_forward.4} parent=5 // pred_fallthru
      _
    %p242 = scmp.lt.s32.totalorder %s13, 4
    // Predicated region
    $region17: #{up_forward.4} parent=5 // pred_check
      %p243 = pneg %p242
    $region18: #{up_forward.4} parent=5 // pred_check_branch
      %245 = sbr.rel (%p243) target = $region20
    $region19: #{up_forward.4} parent=5 // pred_region
      // Predicated region
      $region21: #{up_forward.4} parent=19 // pred_check
        %p246 = pneg %p47
      $region22: #{up_forward.4} parent=19 // pred_check_branch
        %248 = sbr.rel (%p246) target = $region24
      $region23: #{up_forward.4} parent=19 // pred_region
        %s249 = smul.u32 16, %s21
        %s250 = ssub.s32 34, %s249
        %p251 = scmp.lt.s32.totalorder %s250, 16
        %s252 = scalar_select %p251, %s250, 16
        %s253 = smul.u32 8, %s252
        %s254 = smul.u32 %s253, 5
        %p255 = scmp.lt.s32.totalorder %s20, 1
        %s256 = scalar_select %p255, %s20, 1
        %p257 = scmp.lt.s32.totalorder %s249, 33
        %s258 = scalar_select %p257, %s249, 33
        %s259 = smul.addr %s258, 5
        %s260 = smul.addr %s256, 170
        %s261 = sadd.s32 %s259, %s260
        %s262 = smul.addr %s261, 8
        %s263 = scalar_lea.vmem %s0, %s262
        %s264 = smul.u32 16, %s21
        %s265 = ssub.s32 34, %s264
        %p266 = scmp.lt.s32.totalorder %s265, 16
        %s267 = scalar_select %p266, %s265, 16
        %s268 = smul.u32 8, %s267
        %s269 = smul.u32 %s268, 5
      $region24: #{up_forward.4} parent=19 // pred_fallthru
        _
      // Predicated region
      $region25: #{up_forward.4} parent=19 // pred_check
        %p270 = pneg %p79
      $region26: #{up_forward.4} parent=19 // pred_check_branch
        %272 = sbr.rel (%p270) target = $region28
      $region27: #{up_forward.4} parent=19 // pred_region
        %s273 = sadd.s32 %s21, 1
        %s274 = smul.u32 %s273, 8
        %s275 = smul.u32 2, %s274
        %p276 = scmp.lt.s32.totalorder %s20, 1
        %s277 = scalar_select %p276, %s20, 1
        %p278 = scmp.lt.s32.totalorder %s275, 33
        %s279 = scalar_select %p278, %s275, 33
        %s280 = smul.addr %s279, 5
        %s281 = smul.addr %s277, 170
        %s282 = sadd.s32 %s280, %s281
        %s283 = smul.addr %s282, 8
        %s284 = scalar_lea.vmem %s1, %s283
        %s285 = sadd.s32 %s21, 1
        %s286 = smul.u32 %s285, 8
        %s287 = smul.u32 2, %s286
      $region28: #{up_forward.4} parent=19 // pred_fallthru
        _
      // Predicated region
      $region29: #{up_forward.4} parent=19 // pred_check
        %p288 = pneg %p107
      $region30: #{up_forward.4} parent=19 // pred_check_branch
        %290 = sbr.rel (%p288) target = $region32
      $region31: #{up_forward.4} parent=19 // pred_region
        %s291 = smul.u32 16, %s21
        %s292 = ssub.s32 34, %s291
        %p293 = scmp.lt.s32.totalorder %s292, 16
        %s294 = scalar_select %p293, %s292, 16
        %s295 = smul.u32 8, %s294
        %s296 = smul.u32 %s295, 5
        %p297 = scmp.lt.s32.totalorder %s20, 1
        %s298 = scalar_select %p297, %s20, 1
        %p299 = scmp.lt.s32.totalorder %s291, 33
        %s300 = scalar_select %p299, %s291, 33
        %s301 = smul.addr %s300, 5
        %s302 = smul.addr %s298, 170
        %s303 = sadd.s32 %s301, %s302
        %s304 = smul.addr %s303, 8
        %s305 = scalar_lea.vmem %s2, %s304
        %s306 = smul.u32 16, %s21
        %s307 = ssub.s32 34, %s306
        %p308 = scmp.lt.s32.totalorder %s307, 16
        %s309 = scalar_select %p308, %s307, 16
        %s310 = smul.u32 8, %s309
        %s311 = smul.u32 %s310, 5
      $region32: #{up_forward.4} parent=19 // pred_fallthru
        _
      // Predicated region
      $region33: #{up_forward.4} parent=19 // pred_check
        %p312 = pneg %p139
      $region34: #{up_forward.4} parent=19 // pred_check_branch
        %314 = sbr.rel (%p312) target = $region36
      $region35: #{up_forward.4} parent=19 // pred_region
        %s315 = sadd.s32 %s21, 1
        %s316 = smul.u32 %s315, 8
        %s317 = smul.u32 2, %s316
        %p318 = scmp.lt.s32.totalorder %s20, 1
        %s319 = scalar_select %p318, %s20, 1
        %p320 = scmp.lt.s32.totalorder %s317, 33
        %s321 = scalar_select %p320, %s317, 33
        %s322 = smul.addr %s321, 5
        %s323 = smul.addr %s319, 170
        %s324 = sadd.s32 %s322, %s323
        %s325 = smul.addr %s324, 8
        %s326 = scalar_lea.vmem %s3, %s325
        %s327 = sadd.s32 %s21, 1
        %s328 = smul.u32 %s327, 8
        %s329 = smul.u32 2, %s328
      $region36: #{up_forward.4} parent=19 // pred_fallthru
        _
    $region20: #{up_forward.4} parent=5 // pred_fallthru
      _
    %p330 = scmp.le.s32.totalorder 1, %s13
    %p331 = scmp.lt.s32.totalorder %s13, 5
    %p332 = pnand %p330, %p331
    %p333 = pneg %p332
    // Predicated region
    $region37: #{up_forward.4} parent=5 // pred_check
      _
    $region38: #{up_forward.4} parent=5 // pred_check_branch
      %335 = sbr.rel (%p332) target = $region40
    $region39: #{up_forward.4} parent=5 // pred_region
      %s336 = ssub.s32 %s13, 1
      %s337 = smul.u32 16, %s23
      %s338 = ssub.s32 34, %s337
      %p339 = scmp.lt.s32.totalorder %s338, 16
      %s340 = scalar_select %p339, %s338, 16
      %s341 = smul.u32 8, %s340
      %s342 = smul.u32 %s341, 5
      %p343 = scmp.lt.s32.totalorder %s22, 1
      %s344 = scalar_select %p343, %s22, 1
      %p345 = scmp.lt.s32.totalorder %s337, 33
      %s346 = scalar_select %p345, %s337, 33
      %s347 = smul.addr %s346, 5
      %s348 = smul.addr %s344, 170
      %s349 = sadd.s32 %s347, %s348
      %s350 = smul.addr %s349, 8
      %s351 = scalar_lea.vmem %s0, %s350
      %p352 = pneg %p53
      %p353 = pneg %p50
      %s354 = sadd.s32 %s23, 1
      %s355 = smul.u32 %s354, 8
      %s356 = smul.u32 2, %s355
      %p357 = scmp.lt.s32.totalorder %s22, 1
      %s358 = scalar_select %p357, %s22, 1
      %p359 = scmp.lt.s32.totalorder %s356, 33
      %s360 = scalar_select %p359, %s356, 33
      %s361 = smul.addr %s360, 5
      %s362 = smul.addr %s358, 170
      %s363 = sadd.s32 %s361, %s362
      %s364 = smul.addr %s363, 8
      %s365 = scalar_lea.vmem %s1, %s364
      %p366 = pneg %p85
      %p367 = pneg %p82
      %s368 = smul.u32 16, %s23
      %s369 = ssub.s32 34, %s368
      %p370 = scmp.lt.s32.totalorder %s369, 16
      %s371 = scalar_select %p370, %s369, 16
      %s372 = smul.u32 8, %s371
      %s373 = smul.u32 %s372, 5
      %p374 = scmp.lt.s32.totalorder %s22, 1
      %s375 = scalar_select %p374, %s22, 1
      %p376 = scmp.lt.s32.totalorder %s368, 33
      %s377 = scalar_select %p376, %s368, 33
      %s378 = smul.addr %s377, 5
      %s379 = smul.addr %s375, 170
      %s380 = sadd.s32 %s378, %s379
      %s381 = smul.addr %s380, 8
      %s382 = scalar_lea.vmem %s2, %s381
      %p383 = pneg %p113
      %p384 = pneg %p110
      %s385 = sadd.s32 %s23, 1
      %s386 = smul.u32 %s385, 8
      %s387 = smul.u32 2, %s386
      %p388 = scmp.lt.s32.totalorder %s22, 1
      %s389 = scalar_select %p388, %s22, 1
      %p390 = scmp.lt.s32.totalorder %s387, 33
      %s391 = scalar_select %p390, %s387, 33
      %s392 = smul.addr %s391, 5
      %s393 = smul.addr %s389, 170
      %s394 = sadd.s32 %s392, %s393
      %s395 = smul.addr %s394, 8
      %s396 = scalar_lea.vmem %s3, %s395
      %p397 = pneg %p145
      %p398 = pneg %p142
      %p399 = pneg %p166
      %p400 = pneg %p163
      %p401 = pneg %p196
      %p402 = pneg %p193
      %s403 = smul.u32 %s22, 2
      %s404 = sadd.s32 %s403, %s23
      %s405 = smul.u32 64, %s404
      %p406 = scmp.lt.s32.totalorder %s405, 255
      %s407 = scalar_select %p406, %s405, 255
      %s408 = smul.addr %s407, 8
      %s409 = scalar_lea.vmem %s5, %s408
      %p410 = pneg %p224
      %p411 = pneg %p221
      %p412 = scmp.lt.s32.totalorder %s22, 1
      %s413 = scalar_select %p412, %s22, 1
      %p414 = scmp.lt.s32.totalorder %s23, 1
      %s415 = scalar_select %p414, %s23, 1
      %s416 = smul.addr %s413, 2
      %s417 = sadd.s32 %s415, %s416
      %s418 = smul.addr %s417, 2
      %s419 = scalar_lea.vmem %s6, %s418
      %s420 = smul.u32 16, %s23
      %s421 = ssub.s32 34, %s420
      %p422 = scmp.lt.s32.totalorder %s421, 16
      %s423 = scalar_select %p422, %s421, 16
      %s424 = smul.u32 8, %s423
      %s425 = smul.u32 %s424, 5
      %p426 = scmp.lt.s32.totalorder %s22, 1
      %s427 = scalar_select %p426, %s22, 1
      %p428 = scmp.lt.s32.totalorder %s420, 33
      %s429 = scalar_select %p428, %s420, 33
      %s430 = smul.addr %s429, 5
      %s431 = smul.addr %s427, 170
      %s432 = sadd.s32 %s430, %s431
      %s433 = smul.addr %s432, 8
      %s434 = scalar_lea.vmem %s0, %s433
      %s435 = smul.u32 16, %s23
      %s436 = ssub.s32 34, %s435
      %p437 = scmp.lt.s32.totalorder %s436, 16
      %s438 = scalar_select %p437, %s436, 16
      %s439 = smul.u32 8, %s438
      %s440 = smul.u32 %s439, 5
      %s441 = sadd.s32 %s23, 1
      %s442 = smul.u32 %s441, 8
      %s443 = smul.u32 2, %s442
      %p444 = scmp.lt.s32.totalorder %s22, 1
      %s445 = scalar_select %p444, %s22, 1
      %p446 = scmp.lt.s32.totalorder %s443, 33
      %s447 = scalar_select %p446, %s443, 33
      %s448 = smul.addr %s447, 5
      %s449 = smul.addr %s445, 170
      %s450 = sadd.s32 %s448, %s449
      %s451 = smul.addr %s450, 8
      %s452 = scalar_lea.vmem %s1, %s451
      %s453 = sadd.s32 %s23, 1
      %s454 = smul.u32 %s453, 8
      %s455 = smul.u32 2, %s454
      %s456 = smul.u32 16, %s23
      %s457 = ssub.s32 34, %s456
      %p458 = scmp.lt.s32.totalorder %s457, 16
      %s459 = scalar_select %p458, %s457, 16
      %s460 = smul.u32 8, %s459
      %s461 = smul.u32 %s460, 5
      %p462 = scmp.lt.s32.totalorder %s22, 1
      %s463 = scalar_select %p462, %s22, 1
      %p464 = scmp.lt.s32.totalorder %s456, 33
      %s465 = scalar_select %p464, %s456, 33
      %s466 = smul.addr %s465, 5
      %s467 = smul.addr %s463, 170
      %s468 = sadd.s32 %s466, %s467
      %s469 = smul.addr %s468, 8
      %s470 = scalar_lea.vmem %s2, %s469
      %s471 = smul.u32 16, %s23
      %s472 = ssub.s32 34, %s471
      %p473 = scmp.lt.s32.totalorder %s472, 16
      %s474 = scalar_select %p473, %s472, 16
      %s475 = smul.u32 8, %s474
      %s476 = smul.u32 %s475, 5
      %s477 = sadd.s32 %s23, 1
      %s478 = smul.u32 %s477, 8
      %s479 = smul.u32 2, %s478
      %p480 = scmp.lt.s32.totalorder %s22, 1
      %s481 = scalar_select %p480, %s22, 1
      %p482 = scmp.lt.s32.totalorder %s479, 33
      %s483 = scalar_select %p482, %s479, 33
      %s484 = smul.addr %s483, 5
      %s485 = smul.addr %s481, 170
      %s486 = sadd.s32 %s484, %s485
      %s487 = smul.addr %s486, 8
      %s488 = scalar_lea.vmem %s3, %s487
      %s489 = sadd.s32 %s23, 1
      %s490 = smul.u32 %s489, 8
      %s491 = smul.u32 2, %s490
      %s492 = smul.u32 %s22, 2
      %s493 = sadd.s32 %s492, %s23
      %s494 = smul.u32 64, %s493
      %p495 = scmp.lt.s32.totalorder %s494, 255
      %s496 = scalar_select %p495, %s494, 255
      %s497 = smul.addr %s496, 8
      %s498 = scalar_lea.vmem %s5, %s497
      %s499 = smul.u32 %s22, 2
      %s500 = sadd.s32 %s499, %s23
      %s501 = smul.u32 64, %s500
      %p502 = scmp.lt.s32.totalorder %s22, 1
      %s503 = scalar_select %p502, %s22, 1
      %p504 = scmp.lt.s32.totalorder %s23, 1
      %s505 = scalar_select %p504, %s23, 1
      %s506 = smul.addr %s503, 2
      %s507 = sadd.s32 %s505, %s506
      %s508 = smul.addr %s507, 2
      %s509 = scalar_lea.vmem %s6, %s508
      %v510 = vld [vmem:[%s434] sm:$0xff]
      %v511 = vld [vmem:[%s434 + $0x8] sm:$0xff]
      %v512 = vld [vmem:[%s434 + $0x10] sm:$0xff]
      %v513 = vld [vmem:[%s434 + $0x18] sm:$0xff]
      %v514 = vld [vmem:[%s434 + $0x20] sm:$0x3]
      %v515 = vld [vmem:[%s434 + $0x28] sm:$0xff]
      %v516 = vld [vmem:[%s434 + $0x30] sm:$0xff]
      %v517 = vld [vmem:[%s434 + $0x38] sm:$0xff]
      %v518 = vld [vmem:[%s434 + $0x40] sm:$0xff]
      %v519 = vld [vmem:[%s434 + $0x48] sm:$0x3]
      %v520 = vld [vmem:[%s434 + $0x50] sm:$0xff]
      %v521 = vld [vmem:[%s434 + $0x58] sm:$0xff]
      %v522 = vld [vmem:[%s434 + $0x60] sm:$0xff]
      %v523 = vld [vmem:[%s434 + $0x68] sm:$0xff]
      %v524 = vld [vmem:[%s434 + $0x70] sm:$0x3]
      %v525 = vld [vmem:[%s434 + $0x78] sm:$0xff]
      %v526 = vld [vmem:[%s434 + $0x80] sm:$0xff]
      %v527 = vld [vmem:[%s434 + $0x88] sm:$0xff]
      %v528 = vld [vmem:[%s434 + $0x90] sm:$0xff]
      %v529 = vld [vmem:[%s434 + $0x98] sm:$0x3]
      %v530 = vld [vmem:[%s434 + $0xa0] sm:$0xff]
      %v531 = vld [vmem:[%s434 + $0xa8] sm:$0xff]
      %v532 = vld [vmem:[%s434 + $0xb0] sm:$0xff]
      %v533 = vld [vmem:[%s434 + $0xb8] sm:$0xff]
      %v534 = vld [vmem:[%s434 + $0xc0] sm:$0x3]
      %v535 = vld [vmem:[%s434 + $0xc8] sm:$0xff]
      %v536 = vld [vmem:[%s434 + $0xd0] sm:$0xff]
      %v537 = vld [vmem:[%s434 + $0xd8] sm:$0xff]
      %v538 = vld [vmem:[%s434 + $0xe0] sm:$0xff]
      %v539 = vld [vmem:[%s434 + $0xe8] sm:$0x3]
      %v540 = vld [vmem:[%s434 + $0xf0] sm:$0xff]
      %v541 = vld [vmem:[%s434 + $0xf8] sm:$0xff]
      %v542 = vld [vmem:[%s434 + $0x100] sm:$0xff]
      %v543 = vld [vmem:[%s434 + $0x108] sm:$0xff]
      %v544 = vld [vmem:[%s434 + $0x110] sm:$0x3]
      %v545 = vld [vmem:[%s434 + $0x118] sm:$0xff]
      %v546 = vld [vmem:[%s434 + $0x120] sm:$0xff]
      %v547 = vld [vmem:[%s434 + $0x128] sm:$0xff]
      %v548 = vld [vmem:[%s434 + $0x130] sm:$0xff]
      %v549 = vld [vmem:[%s434 + $0x138] sm:$0x3]
      %v550 = vld [vmem:[%s434 + $0x140] sm:$0xff]
      %v551 = vld [vmem:[%s434 + $0x148] sm:$0xff]
      %v552 = vld [vmem:[%s434 + $0x150] sm:$0xff]
      %v553 = vld [vmem:[%s434 + $0x158] sm:$0xff]
      %v554 = vld [vmem:[%s434 + $0x160] sm:$0x3]
      %v555 = vld [vmem:[%s434 + $0x168] sm:$0xff]
      %v556 = vld [vmem:[%s434 + $0x170] sm:$0xff]
      %v557 = vld [vmem:[%s434 + $0x178] sm:$0xff]
      %v558 = vld [vmem:[%s434 + $0x180] sm:$0xff]
      %v559 = vld [vmem:[%s434 + $0x188] sm:$0x3]
      %v560 = vld [vmem:[%s434 + $0x190] sm:$0xff]
      %v561 = vld [vmem:[%s434 + $0x198] sm:$0xff]
      %v562 = vld [vmem:[%s434 + $0x1a0] sm:$0xff]
      %v563 = vld [vmem:[%s434 + $0x1a8] sm:$0xff]
      %v564 = vld [vmem:[%s434 + $0x1b0] sm:$0x3]
      %v565 = vld [vmem:[%s434 + $0x1b8] sm:$0xff]
      %v566 = vld [vmem:[%s434 + $0x1c0] sm:$0xff]
      %v567 = vld [vmem:[%s434 + $0x1c8] sm:$0xff]
      %v568 = vld [vmem:[%s434 + $0x1d0] sm:$0xff]
      %v569 = vld [vmem:[%s434 + $0x1d8] sm:$0x3]
      %v570 = vld [vmem:[%s434 + $0x1e0] sm:$0xff]
      %v571 = vld [vmem:[%s434 + $0x1e8] sm:$0xff]
      %v572 = vld [vmem:[%s434 + $0x1f0] sm:$0xff]
      %v573 = vld [vmem:[%s434 + $0x1f8] sm:$0xff]
      %v574 = vld [vmem:[%s434 + $0x200] sm:$0x3]
      %v575 = vld [vmem:[%s434 + $0x208] sm:$0xff]
      %v576 = vld [vmem:[%s434 + $0x210] sm:$0xff]
      %v577 = vld [vmem:[%s434 + $0x218] sm:$0xff]
      %v578 = vld [vmem:[%s434 + $0x220] sm:$0xff]
      %v579 = vld [vmem:[%s434 + $0x228] sm:$0x3]
      %v580 = vld [vmem:[%s434 + $0x230] sm:$0xff]
      %v581 = vld [vmem:[%s434 + $0x238] sm:$0xff]
      %v582 = vld [vmem:[%s434 + $0x240] sm:$0xff]
      %v583 = vld [vmem:[%s434 + $0x248] sm:$0xff]
      %v584 = vld [vmem:[%s434 + $0x250] sm:$0x3]
      %v585 = vld [vmem:[%s434 + $0x258] sm:$0xff]
      %v586 = vld [vmem:[%s434 + $0x260] sm:$0xff]
      %v587 = vld [vmem:[%s434 + $0x268] sm:$0xff]
      %v588 = vld [vmem:[%s434 + $0x270] sm:$0xff]
      %v589 = vld [vmem:[%s434 + $0x278] sm:$0x3]
      %v590 = vld [vmem:[%s452] sm:$0xff]
      %v591 = vld [vmem:[%s452 + $0x8] sm:$0xff]
      %v592 = vld [vmem:[%s452 + $0x10] sm:$0xff]
      %v593 = vld [vmem:[%s452 + $0x18] sm:$0xff]
      %v594 = vld [vmem:[%s452 + $0x20] sm:$0x3]
      %v595 = vld [vmem:[%s452 + $0x28] sm:$0xff]
      %v596 = vld [vmem:[%s452 + $0x30] sm:$0xff]
      %v597 = vld [vmem:[%s452 + $0x38] sm:$0xff]
      %v598 = vld [vmem:[%s452 + $0x40] sm:$0xff]
      %v599 = vld [vmem:[%s452 + $0x48] sm:$0x3]
      %v600 = vld [vmem:[%s470] sm:$0xff]
      %v601 = vld [vmem:[%s470 + $0x8] sm:$0xff]
      %v602 = vld [vmem:[%s470 + $0x10] sm:$0xff]
      %v603 = vld [vmem:[%s470 + $0x18] sm:$0xff]
      %v604 = vld [vmem:[%s470 + $0x20] sm:$0x3]
      %v605 = vld [vmem:[%s470 + $0x28] sm:$0xff]
      %v606 = vld [vmem:[%s470 + $0x30] sm:$0xff]
      %v607 = vld [vmem:[%s470 + $0x38] sm:$0xff]
      %v608 = vld [vmem:[%s470 + $0x40] sm:$0xff]
      %v609 = vld [vmem:[%s470 + $0x48] sm:$0x3]
      %v610 = vld [vmem:[%s470 + $0x50] sm:$0xff]
      %v611 = vld [vmem:[%s470 + $0x58] sm:$0xff]
      %v612 = vld [vmem:[%s470 + $0x60] sm:$0xff]
      %v613 = vld [vmem:[%s470 + $0x68] sm:$0xff]
      %v614 = vld [vmem:[%s470 + $0x70] sm:$0x3]
      %v615 = vld [vmem:[%s470 + $0x78] sm:$0xff]
      %v616 = vld [vmem:[%s470 + $0x80] sm:$0xff]
      %v617 = vld [vmem:[%s470 + $0x88] sm:$0xff]
      %v618 = vld [vmem:[%s470 + $0x90] sm:$0xff]
      %v619 = vld [vmem:[%s470 + $0x98] sm:$0x3]
      %v620 = vld [vmem:[%s470 + $0xa0] sm:$0xff]
      %v621 = vld [vmem:[%s470 + $0xa8] sm:$0xff]
      %v622 = vld [vmem:[%s470 + $0xb0] sm:$0xff]
      %v623 = vld [vmem:[%s470 + $0xb8] sm:$0xff]
      %v624 = vld [vmem:[%s470 + $0xc0] sm:$0x3]
      %v625 = vld [vmem:[%s470 + $0xc8] sm:$0xff]
      %v626 = vld [vmem:[%s470 + $0xd0] sm:$0xff]
      %v627 = vld [vmem:[%s470 + $0xd8] sm:$0xff]
      %v628 = vld [vmem:[%s470 + $0xe0] sm:$0xff]
      %v629 = vld [vmem:[%s470 + $0xe8] sm:$0x3]
      %v630 = vld [vmem:[%s470 + $0xf0] sm:$0xff]
      %v631 = vld [vmem:[%s470 + $0xf8] sm:$0xff]
      %v632 = vld [vmem:[%s470 + $0x100] sm:$0xff]
      %v633 = vld [vmem:[%s470 + $0x108] sm:$0xff]
      %v634 = vld [vmem:[%s470 + $0x110] sm:$0x3]
      %v635 = vld [vmem:[%s470 + $0x118] sm:$0xff]
      %v636 = vld [vmem:[%s470 + $0x120] sm:$0xff]
      %v637 = vld [vmem:[%s470 + $0x128] sm:$0xff]
      %v638 = vld [vmem:[%s470 + $0x130] sm:$0xff]
      %v639 = vld [vmem:[%s470 + $0x138] sm:$0x3]
      %v640 = vld [vmem:[%s470 + $0x140] sm:$0xff]
      %v641 = vld [vmem:[%s470 + $0x148] sm:$0xff]
      %v642 = vld [vmem:[%s470 + $0x150] sm:$0xff]
      %v643 = vld [vmem:[%s470 + $0x158] sm:$0xff]
      %v644 = vld [vmem:[%s470 + $0x160] sm:$0x3]
      %v645 = vld [vmem:[%s470 + $0x168] sm:$0xff]
      %v646 = vld [vmem:[%s470 + $0x170] sm:$0xff]
      %v647 = vld [vmem:[%s470 + $0x178] sm:$0xff]
      %v648 = vld [vmem:[%s470 + $0x180] sm:$0xff]
      %v649 = vld [vmem:[%s470 + $0x188] sm:$0x3]
      %v650 = vld [vmem:[%s470 + $0x190] sm:$0xff]
      %v651 = vld [vmem:[%s470 + $0x198] sm:$0xff]
      %v652 = vld [vmem:[%s470 + $0x1a0] sm:$0xff]
      %v653 = vld [vmem:[%s470 + $0x1a8] sm:$0xff]
      %v654 = vld [vmem:[%s470 + $0x1b0] sm:$0x3]
      %v655 = vld [vmem:[%s470 + $0x1b8] sm:$0xff]
      %v656 = vld [vmem:[%s470 + $0x1c0] sm:$0xff]
      %v657 = vld [vmem:[%s470 + $0x1c8] sm:$0xff]
      %v658 = vld [vmem:[%s470 + $0x1d0] sm:$0xff]
      %v659 = vld [vmem:[%s470 + $0x1d8] sm:$0x3]
      %v660 = vld [vmem:[%s470 + $0x1e0] sm:$0xff]
      %v661 = vld [vmem:[%s470 + $0x1e8] sm:$0xff]
      %v662 = vld [vmem:[%s470 + $0x1f0] sm:$0xff]
      %v663 = vld [vmem:[%s470 + $0x1f8] sm:$0xff]
      %v664 = vld [vmem:[%s470 + $0x200] sm:$0x3]
      %v665 = vld [vmem:[%s470 + $0x208] sm:$0xff]
      %v666 = vld [vmem:[%s470 + $0x210] sm:$0xff]
      %v667 = vld [vmem:[%s470 + $0x218] sm:$0xff]
      %v668 = vld [vmem:[%s470 + $0x220] sm:$0xff]
      %v669 = vld [vmem:[%s470 + $0x228] sm:$0x3]
      %v670 = vld [vmem:[%s470 + $0x230] sm:$0xff]
      %v671 = vld [vmem:[%s470 + $0x238] sm:$0xff]
      %v672 = vld [vmem:[%s470 + $0x240] sm:$0xff]
      %v673 = vld [vmem:[%s470 + $0x248] sm:$0xff]
      %v674 = vld [vmem:[%s470 + $0x250] sm:$0x3]
      %v675 = vld [vmem:[%s470 + $0x258] sm:$0xff]
      %v676 = vld [vmem:[%s470 + $0x260] sm:$0xff]
      %v677 = vld [vmem:[%s470 + $0x268] sm:$0xff]
      %v678 = vld [vmem:[%s470 + $0x270] sm:$0xff]
      %v679 = vld [vmem:[%s470 + $0x278] sm:$0x3]
      %v680 = vld [vmem:[%s488] sm:$0xff]
      %v681 = vld [vmem:[%s488 + $0x8] sm:$0xff]
      %v682 = vld [vmem:[%s488 + $0x10] sm:$0xff]
      %v683 = vld [vmem:[%s488 + $0x18] sm:$0xff]
      %v684 = vld [vmem:[%s488 + $0x20] sm:$0x3]
      %v685 = vld [vmem:[%s488 + $0x28] sm:$0xff]
      %v686 = vld [vmem:[%s488 + $0x30] sm:$0xff]
      %v687 = vld [vmem:[%s488 + $0x38] sm:$0xff]
      %v688 = vld [vmem:[%s488 + $0x40] sm:$0xff]
      %v689 = vld [vmem:[%s488 + $0x48] sm:$0x3]
      %780 = vrot.lane.b32.xlu0 %v600, 4
      %v781 = vpop.permute.xlu0 %780
      %782 = vrot.lane.b32.xlu0 %v601, 4
      %v783 = vpop.permute.xlu0 %782
      %784 = vrot.lane.b32.xlu0 %v602, 4
      %v785 = vpop.permute.xlu0 %784
      %786 = vrot.lane.b32.xlu0 %v603, 4
      %v787 = vpop.permute.xlu0 %786
      %788 = vrot.lane.b32.xlu0 %v604, 4
      %v789 = vpop.permute.xlu0 %788
      %790 = vrot.lane.b32.xlu0 %v605, 4
      %v791 = vpop.permute.xlu0 %790
      %792 = vrot.lane.b32.xlu0 %v606, 4
      %v793 = vpop.permute.xlu0 %792
      %794 = vrot.lane.b32.xlu0 %v607, 4
      %v795 = vpop.permute.xlu0 %794
      %796 = vrot.lane.b32.xlu0 %v608, 4
      %v797 = vpop.permute.xlu0 %796
      %798 = vrot.lane.b32.xlu0 %v609, 4
      %v799 = vpop.permute.xlu0 %798
      %800 = vrot.lane.b32.xlu0 %v610, 4
      %v801 = vpop.permute.xlu0 %800
      %802 = vrot.lane.b32.xlu0 %v611, 4
      %v803 = vpop.permute.xlu0 %802
      %804 = vrot.lane.b32.xlu0 %v612, 4
      %v805 = vpop.permute.xlu0 %804
      %806 = vrot.lane.b32.xlu0 %v613, 4
      %v807 = vpop.permute.xlu0 %806
      %808 = vrot.lane.b32.xlu0 %v614, 4
      %v809 = vpop.permute.xlu0 %808
      %810 = vrot.lane.b32.xlu0 %v615, 4
      %v811 = vpop.permute.xlu0 %810
      %812 = vrot.lane.b32.xlu0 %v616, 4
      %v813 = vpop.permute.xlu0 %812
      %814 = vrot.lane.b32.xlu0 %v617, 4
      %v815 = vpop.permute.xlu0 %814
      %816 = vrot.lane.b32.xlu0 %v618, 4
      %v817 = vpop.permute.xlu0 %816
      %818 = vrot.lane.b32.xlu0 %v619, 4
      %v819 = vpop.permute.xlu0 %818
      %820 = vrot.lane.b32.xlu0 %v620, 4
      %v821 = vpop.permute.xlu0 %820
      %822 = vrot.lane.b32.xlu0 %v621, 4
      %v823 = vpop.permute.xlu0 %822
      %824 = vrot.lane.b32.xlu0 %v622, 4
      %v825 = vpop.permute.xlu0 %824
      %826 = vrot.lane.b32.xlu0 %v623, 4
      %v827 = vpop.permute.xlu0 %826
      %828 = vrot.lane.b32.xlu0 %v624, 4
      %v829 = vpop.permute.xlu0 %828
      %830 = vrot.lane.b32.xlu0 %v625, 4
      %v831 = vpop.permute.xlu0 %830
      %832 = vrot.lane.b32.xlu0 %v626, 4
      %v833 = vpop.permute.xlu0 %832
      %834 = vrot.lane.b32.xlu0 %v627, 4
      %v835 = vpop.permute.xlu0 %834
      %836 = vrot.lane.b32.xlu0 %v628, 4
      %v837 = vpop.permute.xlu0 %836
      %838 = vrot.lane.b32.xlu0 %v629, 4
      %v839 = vpop.permute.xlu0 %838
      %840 = vrot.lane.b32.xlu0 %v630, 4
      %v841 = vpop.permute.xlu0 %840
      %842 = vrot.lane.b32.xlu0 %v631, 4
      %v843 = vpop.permute.xlu0 %842
      %844 = vrot.lane.b32.xlu0 %v632, 4
      %v845 = vpop.permute.xlu0 %844
      %846 = vrot.lane.b32.xlu0 %v633, 4
      %v847 = vpop.permute.xlu0 %846
      %848 = vrot.lane.b32.xlu0 %v634, 4
      %v849 = vpop.permute.xlu0 %848
      %850 = vrot.lane.b32.xlu0 %v635, 4
      %v851 = vpop.permute.xlu0 %850
      %852 = vrot.lane.b32.xlu0 %v636, 4
      %v853 = vpop.permute.xlu0 %852
      %854 = vrot.lane.b32.xlu0 %v637, 4
      %v855 = vpop.permute.xlu0 %854
      %856 = vrot.lane.b32.xlu0 %v638, 4
      %v857 = vpop.permute.xlu0 %856
      %858 = vrot.lane.b32.xlu0 %v639, 4
      %v859 = vpop.permute.xlu0 %858
      %860 = vrot.lane.b32.xlu0 %v640, 4
      %v861 = vpop.permute.xlu0 %860
      %862 = vrot.lane.b32.xlu0 %v641, 4
      %v863 = vpop.permute.xlu0 %862
      %864 = vrot.lane.b32.xlu0 %v642, 4
      %v865 = vpop.permute.xlu0 %864
      %866 = vrot.lane.b32.xlu0 %v643, 4
      %v867 = vpop.permute.xlu0 %866
      %868 = vrot.lane.b32.xlu0 %v644, 4
      %v869 = vpop.permute.xlu0 %868
      %870 = vrot.lane.b32.xlu0 %v645, 4
      %v871 = vpop.permute.xlu0 %870
      %872 = vrot.lane.b32.xlu0 %v646, 4
      %v873 = vpop.permute.xlu0 %872
      %874 = vrot.lane.b32.xlu0 %v647, 4
      %v875 = vpop.permute.xlu0 %874
      %876 = vrot.lane.b32.xlu0 %v648, 4
      %v877 = vpop.permute.xlu0 %876
      %878 = vrot.lane.b32.xlu0 %v649, 4
      %v879 = vpop.permute.xlu0 %878
      %880 = vrot.lane.b32.xlu0 %v650, 4
      %v881 = vpop.permute.xlu0 %880
      %882 = vrot.lane.b32.xlu0 %v651, 4
      %v883 = vpop.permute.xlu0 %882
      %884 = vrot.lane.b32.xlu0 %v652, 4
      %v885 = vpop.permute.xlu0 %884
      %886 = vrot.lane.b32.xlu0 %v653, 4
      %v887 = vpop.permute.xlu0 %886
      %888 = vrot.lane.b32.xlu0 %v654, 4
      %v889 = vpop.permute.xlu0 %888
      %890 = vrot.lane.b32.xlu0 %v655, 4
      %v891 = vpop.permute.xlu0 %890
      %892 = vrot.lane.b32.xlu0 %v656, 4
      %v893 = vpop.permute.xlu0 %892
      %894 = vrot.lane.b32.xlu0 %v657, 4
      %v895 = vpop.permute.xlu0 %894
      %896 = vrot.lane.b32.xlu0 %v658, 4
      %v897 = vpop.permute.xlu0 %896
      %898 = vrot.lane.b32.xlu0 %v659, 4
      %v899 = vpop.permute.xlu0 %898
      %900 = vrot.lane.b32.xlu0 %v660, 4
      %v901 = vpop.permute.xlu0 %900
      %902 = vrot.lane.b32.xlu0 %v661, 4
      %v903 = vpop.permute.xlu0 %902
      %904 = vrot.lane.b32.xlu0 %v662, 4
      %v905 = vpop.permute.xlu0 %904
      %906 = vrot.lane.b32.xlu0 %v663, 4
      %v907 = vpop.permute.xlu0 %906
      %908 = vrot.lane.b32.xlu0 %v664, 4
      %v909 = vpop.permute.xlu0 %908
      %910 = vrot.lane.b32.xlu0 %v665, 4
      %v911 = vpop.permute.xlu0 %910
      %912 = vrot.lane.b32.xlu0 %v666, 4
      %v913 = vpop.permute.xlu0 %912
      %914 = vrot.lane.b32.xlu0 %v667, 4
      %v915 = vpop.permute.xlu0 %914
      %916 = vrot.lane.b32.xlu0 %v668, 4
      %v917 = vpop.permute.xlu0 %916
      %918 = vrot.lane.b32.xlu0 %v669, 4
      %v919 = vpop.permute.xlu0 %918
      %920 = vrot.lane.b32.xlu0 %v670, 4
      %v921 = vpop.permute.xlu0 %920
      %922 = vrot.lane.b32.xlu0 %v671, 4
      %v923 = vpop.permute.xlu0 %922
      %924 = vrot.lane.b32.xlu0 %v672, 4
      %v925 = vpop.permute.xlu0 %924
      %926 = vrot.lane.b32.xlu0 %v673, 4
      %v927 = vpop.permute.xlu0 %926
      %928 = vrot.lane.b32.xlu0 %v674, 4
      %v929 = vpop.permute.xlu0 %928
      %930 = vrot.lane.b32.xlu0 %v675, 4
      %v931 = vpop.permute.xlu0 %930
      %932 = vrot.lane.b32.xlu0 %v676, 4
      %v933 = vpop.permute.xlu0 %932
      %934 = vrot.lane.b32.xlu0 %v677, 4
      %v935 = vpop.permute.xlu0 %934
      %936 = vrot.lane.b32.xlu0 %v678, 4
      %v937 = vpop.permute.xlu0 %936
      %938 = vrot.lane.b32.xlu0 %v679, 4
      %v939 = vpop.permute.xlu0 %938
      %940 = vrot.lane.b32.xlu0 %v680, 4
      %v941 = vpop.permute.xlu0 %940
      %942 = vrot.lane.b32.xlu0 %v681, 4
      %v943 = vpop.permute.xlu0 %942
      %944 = vrot.lane.b32.xlu0 %v682, 4
      %v945 = vpop.permute.xlu0 %944
      %946 = vrot.lane.b32.xlu0 %v683, 4
      %v947 = vpop.permute.xlu0 %946
      %948 = vrot.lane.b32.xlu0 %v684, 4
      %v949 = vpop.permute.xlu0 %948
      %950 = vrot.lane.b32.xlu0 %v685, 4
      %v951 = vpop.permute.xlu0 %950
      %952 = vrot.lane.b32.xlu0 %v686, 4
      %v953 = vpop.permute.xlu0 %952
      %954 = vrot.lane.b32.xlu0 %v687, 4
      %v955 = vpop.permute.xlu0 %954
      %956 = vrot.lane.b32.xlu0 %v688, 4
      %v957 = vpop.permute.xlu0 %956
      %958 = vrot.lane.b32.xlu0 %v689, 4
      %v959 = vpop.permute.xlu0 %958
      %vm1050 = vcmask 31744
      %v1051 = vsel %vm1050, %v510, %v781
      %v1052 = vsel %vm1050, %v511, %v783
      %v1053 = vsel %vm1050, %v512, %v785
      %v1054 = vsel %vm1050, %v513, %v787
      %v1055 = vsel %vm1050, %v514, %v789
      %v1056 = vsel %vm1050, %v515, %v791
      %v1057 = vsel %vm1050, %v516, %v793
      %v1058 = vsel %vm1050, %v517, %v795
      %v1059 = vsel %vm1050, %v518, %v797
      %v1060 = vsel %vm1050, %v519, %v799
      %v1061 = vsel %vm1050, %v520, %v801
      %v1062 = vsel %vm1050, %v521, %v803
      %v1063 = vsel %vm1050, %v522, %v805
      %v1064 = vsel %vm1050, %v523, %v807
      %v1065 = vsel %vm1050, %v524, %v809
      %v1066 = vsel %vm1050, %v525, %v811
      %v1067 = vsel %vm1050, %v526, %v813
      %v1068 = vsel %vm1050, %v527, %v815
      %v1069 = vsel %vm1050, %v528, %v817
      %v1070 = vsel %vm1050, %v529, %v819
      %v1071 = vsel %vm1050, %v530, %v821
      %v1072 = vsel %vm1050, %v531, %v823
      %v1073 = vsel %vm1050, %v532, %v825
      %v1074 = vsel %vm1050, %v533, %v827
      %v1075 = vsel %vm1050, %v534, %v829
      %v1076 = vsel %vm1050, %v535, %v831
      %v1077 = vsel %vm1050, %v536, %v833
      %v1078 = vsel %vm1050, %v537, %v835
      %v1079 = vsel %vm1050, %v538, %v837
      %v1080 = vsel %vm1050, %v539, %v839
      %v1081 = vsel %vm1050, %v540, %v841
      %v1082 = vsel %vm1050, %v541, %v843
      %v1083 = vsel %vm1050, %v542, %v845
      %v1084 = vsel %vm1050, %v543, %v847
      %v1085 = vsel %vm1050, %v544, %v849
      %v1086 = vsel %vm1050, %v545, %v851
      %v1087 = vsel %vm1050, %v546, %v853
      %v1088 = vsel %vm1050, %v547, %v855
      %v1089 = vsel %vm1050, %v548, %v857
      %v1090 = vsel %vm1050, %v549, %v859
      %v1091 = vsel %vm1050, %v550, %v861
      %v1092 = vsel %vm1050, %v551, %v863
      %v1093 = vsel %vm1050, %v552, %v865
      %v1094 = vsel %vm1050, %v553, %v867
      %v1095 = vsel %vm1050, %v554, %v869
      %v1096 = vsel %vm1050, %v555, %v871
      %v1097 = vsel %vm1050, %v556, %v873
      %v1098 = vsel %vm1050, %v557, %v875
      %v1099 = vsel %vm1050, %v558, %v877
      %v1100 = vsel %vm1050, %v559, %v879
      %v1101 = vsel %vm1050, %v560, %v881
      %v1102 = vsel %vm1050, %v561, %v883
      %v1103 = vsel %vm1050, %v562, %v885
      %v1104 = vsel %vm1050, %v563, %v887
      %v1105 = vsel %vm1050, %v564, %v889
      %v1106 = vsel %vm1050, %v565, %v891
      %v1107 = vsel %vm1050, %v566, %v893
      %v1108 = vsel %vm1050, %v567, %v895
      %v1109 = vsel %vm1050, %v568, %v897
      %v1110 = vsel %vm1050, %v569, %v899
      %v1111 = vsel %vm1050, %v570, %v901
      %v1112 = vsel %vm1050, %v571, %v903
      %v1113 = vsel %vm1050, %v572, %v905
      %v1114 = vsel %vm1050, %v573, %v907
      %v1115 = vsel %vm1050, %v574, %v909
      %v1116 = vsel %vm1050, %v575, %v911
      %v1117 = vsel %vm1050, %v576, %v913
      %v1118 = vsel %vm1050, %v577, %v915
      %v1119 = vsel %vm1050, %v578, %v917
      %v1120 = vsel %vm1050, %v579, %v919
      %v1121 = vsel %vm1050, %v580, %v921
      %v1122 = vsel %vm1050, %v581, %v923
      %v1123 = vsel %vm1050, %v582, %v925
      %v1124 = vsel %vm1050, %v583, %v927
      %v1125 = vsel %vm1050, %v584, %v929
      %v1126 = vsel %vm1050, %v585, %v931
      %v1127 = vsel %vm1050, %v586, %v933
      %v1128 = vsel %vm1050, %v587, %v935
      %v1129 = vsel %vm1050, %v588, %v937
      %v1130 = vsel %vm1050, %v589, %v939
      %v1131 = vsel %vm1050, %v590, %v941
      %v1132 = vsel %vm1050, %v591, %v943
      %v1133 = vsel %vm1050, %v592, %v945
      %v1134 = vsel %vm1050, %v593, %v947
      %v1135 = vsel %vm1050, %v594, %v949
      %v1136 = vsel %vm1050, %v595, %v951
      %v1137 = vsel %vm1050, %v596, %v953
      %v1138 = vsel %vm1050, %v597, %v955
      %v1139 = vsel %vm1050, %v598, %v957
      %v1140 = vsel %vm1050, %v599, %v959
      %vm1221 = vcmask 1046528
      %v1222 = vrot.slane %v1051, 1
      %v1223 = vrot.slane %v1052, 1
      %v1224 = vsel %vm1221, %v1222, %v1223
      %v1225 = vrot.slane %v1053, 1
      %v1226 = vsel %vm1221, %v1223, %v1225
      %v1227 = vrot.slane %v1054, 1
      %v1228 = vsel %vm1221, %v1225, %v1227
      %v1229 = vrot.slane %v1055, 1
      %v1230 = vsel %vm1221, %v1227, %v1229
      %v1231 = vrot.slane %v1056, 1
      %v1232 = vrot.slane %v1057, 1
      %v1233 = vsel %vm1221, %v1231, %v1232
      %v1234 = vrot.slane %v1058, 1
      %v1235 = vsel %vm1221, %v1232, %v1234
      %v1236 = vrot.slane %v1059, 1
      %v1237 = vsel %vm1221, %v1234, %v1236
      %v1238 = vrot.slane %v1060, 1
      %v1239 = vsel %vm1221, %v1236, %v1238
      %v1240 = vrot.slane %v1061, 1
      %v1241 = vrot.slane %v1062, 1
      %v1242 = vsel %vm1221, %v1240, %v1241
      %v1243 = vrot.slane %v1063, 1
      %v1244 = vsel %vm1221, %v1241, %v1243
      %v1245 = vrot.slane %v1064, 1
      %v1246 = vsel %vm1221, %v1243, %v1245
      %v1247 = vrot.slane %v1065, 1
      %v1248 = vsel %vm1221, %v1245, %v1247
      %v1249 = vrot.slane %v1066, 1
      %v1250 = vrot.slane %v1067, 1
      %v1251 = vsel %vm1221, %v1249, %v1250
      %v1252 = vrot.slane %v1068, 1
      %v1253 = vsel %vm1221, %v1250, %v1252
      %v1254 = vrot.slane %v1069, 1
      %v1255 = vsel %vm1221, %v1252, %v1254
      %v1256 = vrot.slane %v1070, 1
      %v1257 = vsel %vm1221, %v1254, %v1256
      %v1258 = vrot.slane %v1071, 1
      %v1259 = vrot.slane %v1072, 1
      %v1260 = vsel %vm1221, %v1258, %v1259
      %v1261 = vrot.slane %v1073, 1
      %v1262 = vsel %vm1221, %v1259, %v1261
      %v1263 = vrot.slane %v1074, 1
      %v1264 = vsel %vm1221, %v1261, %v1263
      %v1265 = vrot.slane %v1075, 1
      %v1266 = vsel %vm1221, %v1263, %v1265
      %v1267 = vrot.slane %v1076, 1
      %v1268 = vrot.slane %v1077, 1
      %v1269 = vsel %vm1221, %v1267, %v1268
      %v1270 = vrot.slane %v1078, 1
      %v1271 = vsel %vm1221, %v1268, %v1270
      %v1272 = vrot.slane %v1079, 1
      %v1273 = vsel %vm1221, %v1270, %v1272
      %v1274 = vrot.slane %v1080, 1
      %v1275 = vsel %vm1221, %v1272, %v1274
      %v1276 = vrot.slane %v1081, 1
      %v1277 = vrot.slane %v1082, 1
      %v1278 = vsel %vm1221, %v1276, %v1277
      %v1279 = vrot.slane %v1083, 1
      %v1280 = vsel %vm1221, %v1277, %v1279
      %v1281 = vrot.slane %v1084, 1
      %v1282 = vsel %vm1221, %v1279, %v1281
      %v1283 = vrot.slane %v1085, 1
      %v1284 = vsel %vm1221, %v1281, %v1283
      %v1285 = vrot.slane %v1086, 1
      %v1286 = vrot.slane %v1087, 1
      %v1287 = vsel %vm1221, %v1285, %v1286
      %v1288 = vrot.slane %v1088, 1
      %v1289 = vsel %vm1221, %v1286, %v1288
      %v1290 = vrot.slane %v1089, 1
      %v1291 = vsel %vm1221, %v1288, %v1290
      %v1292 = vrot.slane %v1090, 1
      %v1293 = vsel %vm1221, %v1290, %v1292
      %v1294 = vrot.slane %v1091, 1
      %v1295 = vrot.slane %v1092, 1
      %v1296 = vsel %vm1221, %v1294, %v1295
      %v1297 = vrot.slane %v1093, 1
      %v1298 = vsel %vm1221, %v1295, %v1297
      %v1299 = vrot.slane %v1094, 1
      %v1300 = vsel %vm1221, %v1297, %v1299
      %v1301 = vrot.slane %v1095, 1
      %v1302 = vsel %vm1221, %v1299, %v1301
      %v1303 = vrot.slane %v1096, 1
      %v1304 = vrot.slane %v1097, 1
      %v1305 = vsel %vm1221, %v1303, %v1304
      %v1306 = vrot.slane %v1098, 1
      %v1307 = vsel %vm1221, %v1304, %v1306
      %v1308 = vrot.slane %v1099, 1
      %v1309 = vsel %vm1221, %v1306, %v1308
      %v1310 = vrot.slane %v1100, 1
      %v1311 = vsel %vm1221, %v1308, %v1310
      %v1312 = vrot.slane %v1101, 1
      %v1313 = vrot.slane %v1102, 1
      %v1314 = vsel %vm1221, %v1312, %v1313
      %v1315 = vrot.slane %v1103, 1
      %v1316 = vsel %vm1221, %v1313, %v1315
      %v1317 = vrot.slane %v1104, 1
      %v1318 = vsel %vm1221, %v1315, %v1317
      %v1319 = vrot.slane %v1105, 1
      %v1320 = vsel %vm1221, %v1317, %v1319
      %v1321 = vrot.slane %v1106, 1
      %v1322 = vrot.slane %v1107, 1
      %v1323 = vsel %vm1221, %v1321, %v1322
      %v1324 = vrot.slane %v1108, 1
      %v1325 = vsel %vm1221, %v1322, %v1324
      %v1326 = vrot.slane %v1109, 1
      %v1327 = vsel %vm1221, %v1324, %v1326
      %v1328 = vrot.slane %v1110, 1
      %v1329 = vsel %vm1221, %v1326, %v1328
      %v1330 = vrot.slane %v1111, 1
      %v1331 = vrot.slane %v1112, 1
      %v1332 = vsel %vm1221, %v1330, %v1331
      %v1333 = vrot.slane %v1113, 1
      %v1334 = vsel %vm1221, %v1331, %v1333
      %v1335 = vrot.slane %v1114, 1
      %v1336 = vsel %vm1221, %v1333, %v1335
      %v1337 = vrot.slane %v1115, 1
      %v1338 = vsel %vm1221, %v1335, %v1337
      %v1339 = vrot.slane %v1116, 1
      %v1340 = vrot.slane %v1117, 1
      %v1341 = vsel %vm1221, %v1339, %v1340
      %v1342 = vrot.slane %v1118, 1
      %v1343 = vsel %vm1221, %v1340, %v1342
      %v1344 = vrot.slane %v1119, 1
      %v1345 = vsel %vm1221, %v1342, %v1344
      %v1346 = vrot.slane %v1120, 1
      %v1347 = vsel %vm1221, %v1344, %v1346
      %v1348 = vrot.slane %v1121, 1
      %v1349 = vrot.slane %v1122, 1
      %v1350 = vsel %vm1221, %v1348, %v1349
      %v1351 = vrot.slane %v1123, 1
      %v1352 = vsel %vm1221, %v1349, %v1351
      %v1353 = vrot.slane %v1124, 1
      %v1354 = vsel %vm1221, %v1351, %v1353
      %v1355 = vrot.slane %v1125, 1
      %v1356 = vsel %vm1221, %v1353, %v1355
      %v1357 = vrot.slane %v1126, 1
      %v1358 = vrot.slane %v1127, 1
      %v1359 = vsel %vm1221, %v1357, %v1358
      %v1360 = vrot.slane %v1128, 1
      %v1361 = vsel %vm1221, %v1358, %v1360
      %v1362 = vrot.slane %v1129, 1
      %v1363 = vsel %vm1221, %v1360, %v1362
      %v1364 = vrot.slane %v1130, 1
      %v1365 = vsel %vm1221, %v1362, %v1364
      %vm1366 = vcmask 1045504
      %v1367 = vrot.slane %v1051, 2
      %v1368 = vrot.slane %v1052, 2
      %v1369 = vsel %vm1366, %v1367, %v1368
      %v1370 = vrot.slane %v1053, 2
      %v1371 = vsel %vm1366, %v1368, %v1370
      %v1372 = vrot.slane %v1054, 2
      %v1373 = vsel %vm1366, %v1370, %v1372
      %v1374 = vrot.slane %v1055, 2
      %v1375 = vsel %vm1366, %v1372, %v1374
      %v1376 = vrot.slane %v1056, 2
      %v1377 = vrot.slane %v1057, 2
      %v1378 = vsel %vm1366, %v1376, %v1377
      %v1379 = vrot.slane %v1058, 2
      %v1380 = vsel %vm1366, %v1377, %v1379
      %v1381 = vrot.slane %v1059, 2
      %v1382 = vsel %vm1366, %v1379, %v1381
      %v1383 = vrot.slane %v1060, 2
      %v1384 = vsel %vm1366, %v1381, %v1383
      %v1385 = vrot.slane %v1061, 2
      %v1386 = vrot.slane %v1062, 2
      %v1387 = vsel %vm1366, %v1385, %v1386
      %v1388 = vrot.slane %v1063, 2
      %v1389 = vsel %vm1366, %v1386, %v1388
      %v1390 = vrot.slane %v1064, 2
      %v1391 = vsel %vm1366, %v1388, %v1390
      %v1392 = vrot.slane %v1065, 2
      %v1393 = vsel %vm1366, %v1390, %v1392
      %v1394 = vrot.slane %v1066, 2
      %v1395 = vrot.slane %v1067, 2
      %v1396 = vsel %vm1366, %v1394, %v1395
      %v1397 = vrot.slane %v1068, 2
      %v1398 = vsel %vm1366, %v1395, %v1397
      %v1399 = vrot.slane %v1069, 2
      %v1400 = vsel %vm1366, %v1397, %v1399
      %v1401 = vrot.slane %v1070, 2
      %v1402 = vsel %vm1366, %v1399, %v1401
      %v1403 = vrot.slane %v1071, 2
      %v1404 = vrot.slane %v1072, 2
      %v1405 = vsel %vm1366, %v1403, %v1404
      %v1406 = vrot.slane %v1073, 2
      %v1407 = vsel %vm1366, %v1404, %v1406
      %v1408 = vrot.slane %v1074, 2
      %v1409 = vsel %vm1366, %v1406, %v1408
      %v1410 = vrot.slane %v1075, 2
      %v1411 = vsel %vm1366, %v1408, %v1410
      %v1412 = vrot.slane %v1076, 2
      %v1413 = vrot.slane %v1077, 2
      %v1414 = vsel %vm1366, %v1412, %v1413
      %v1415 = vrot.slane %v1078, 2
      %v1416 = vsel %vm1366, %v1413, %v1415
      %v1417 = vrot.slane %v1079, 2
      %v1418 = vsel %vm1366, %v1415, %v1417
      %v1419 = vrot.slane %v1080, 2
      %v1420 = vsel %vm1366, %v1417, %v1419
      %v1421 = vrot.slane %v1081, 2
      %v1422 = vrot.slane %v1082, 2
      %v1423 = vsel %vm1366, %v1421, %v1422
      %v1424 = vrot.slane %v1083, 2
      %v1425 = vsel %vm1366, %v1422, %v1424
      %v1426 = vrot.slane %v1084, 2
      %v1427 = vsel %vm1366, %v1424, %v1426
      %v1428 = vrot.slane %v1085, 2
      %v1429 = vsel %vm1366, %v1426, %v1428
      %v1430 = vrot.slane %v1086, 2
      %v1431 = vrot.slane %v1087, 2
      %v1432 = vsel %vm1366, %v1430, %v1431
      %v1433 = vrot.slane %v1088, 2
      %v1434 = vsel %vm1366, %v1431, %v1433
      %v1435 = vrot.slane %v1089, 2
      %v1436 = vsel %vm1366, %v1433, %v1435
      %v1437 = vrot.slane %v1090, 2
      %v1438 = vsel %vm1366, %v1435, %v1437
      %v1439 = vrot.slane %v1091, 2
      %v1440 = vrot.slane %v1092, 2
      %v1441 = vsel %vm1366, %v1439, %v1440
      %v1442 = vrot.slane %v1093, 2
      %v1443 = vsel %vm1366, %v1440, %v1442
      %v1444 = vrot.slane %v1094, 2
      %v1445 = vsel %vm1366, %v1442, %v1444
      %v1446 = vrot.slane %v1095, 2
      %v1447 = vsel %vm1366, %v1444, %v1446
      %v1448 = vrot.slane %v1096, 2
      %v1449 = vrot.slane %v1097, 2
      %v1450 = vsel %vm1366, %v1448, %v1449
      %v1451 = vrot.slane %v1098, 2
      %v1452 = vsel %vm1366, %v1449, %v1451
      %v1453 = vrot.slane %v1099, 2
      %v1454 = vsel %vm1366, %v1451, %v1453
      %v1455 = vrot.slane %v1100, 2
      %v1456 = vsel %vm1366, %v1453, %v1455
      %v1457 = vrot.slane %v1101, 2
      %v1458 = vrot.slane %v1102, 2
      %v1459 = vsel %vm1366, %v1457, %v1458
      %v1460 = vrot.slane %v1103, 2
      %v1461 = vsel %vm1366, %v1458, %v1460
      %v1462 = vrot.slane %v1104, 2
      %v1463 = vsel %vm1366, %v1460, %v1462
      %v1464 = vrot.slane %v1105, 2
      %v1465 = vsel %vm1366, %v1462, %v1464
      %v1466 = vrot.slane %v1106, 2
      %v1467 = vrot.slane %v1107, 2
      %v1468 = vsel %vm1366, %v1466, %v1467
      %v1469 = vrot.slane %v1108, 2
      %v1470 = vsel %vm1366, %v1467, %v1469
      %v1471 = vrot.slane %v1109, 2
      %v1472 = vsel %vm1366, %v1469, %v1471
      %v1473 = vrot.slane %v1110, 2
      %v1474 = vsel %vm1366, %v1471, %v1473
      %v1475 = vrot.slane %v1111, 2
      %v1476 = vrot.slane %v1112, 2
      %v1477 = vsel %vm1366, %v1475, %v1476
      %v1478 = vrot.slane %v1113, 2
      %v1479 = vsel %vm1366, %v1476, %v1478
      %v1480 = vrot.slane %v1114, 2
      %v1481 = vsel %vm1366, %v1478, %v1480
      %v1482 = vrot.slane %v1115, 2
      %v1483 = vsel %vm1366, %v1480, %v1482
      %v1484 = vrot.slane %v1116, 2
      %v1485 = vrot.slane %v1117, 2
      %v1486 = vsel %vm1366, %v1484, %v1485
      %v1487 = vrot.slane %v1118, 2
      %v1488 = vsel %vm1366, %v1485, %v1487
      %v1489 = vrot.slane %v1119, 2
      %v1490 = vsel %vm1366, %v1487, %v1489
      %v1491 = vrot.slane %v1120, 2
      %v1492 = vsel %vm1366, %v1489, %v1491
      %v1493 = vrot.slane %v1121, 2
      %v1494 = vrot.slane %v1122, 2
      %v1495 = vsel %vm1366, %v1493, %v1494
      %v1496 = vrot.slane %v1123, 2
      %v1497 = vsel %vm1366, %v1494, %v1496
      %v1498 = vrot.slane %v1124, 2
      %v1499 = vsel %vm1366, %v1496, %v1498
      %v1500 = vrot.slane %v1125, 2
      %v1501 = vsel %vm1366, %v1498, %v1500
      %v1502 = vrot.slane %v1126, 2
      %v1503 = vrot.slane %v1127, 2
      %v1504 = vsel %vm1366, %v1502, %v1503
      %v1505 = vrot.slane %v1128, 2
      %v1506 = vsel %vm1366, %v1503, %v1505
      %v1507 = vrot.slane %v1129, 2
      %v1508 = vsel %vm1366, %v1505, %v1507
      %v1509 = vrot.slane %v1130, 2
      %v1510 = vsel %vm1366, %v1507, %v1509
      %v1516 = vrot.slane %v1131, 1
      %v1517 = vrot.slane %v1132, 1
      %v1518 = vsel %vm1221, %v1516, %v1517
      %v1519 = vrot.slane %v1133, 1
      %v1520 = vsel %vm1221, %v1517, %v1519
      %v1521 = vrot.slane %v1134, 1
      %v1522 = vsel %vm1221, %v1519, %v1521
      %v1523 = vrot.slane %v1135, 1
      %v1524 = vsel %vm1221, %v1521, %v1523
      %v1525 = vrot.slane %v1131, 2
      %v1526 = vrot.slane %v1132, 2
      %v1527 = vsel %vm1366, %v1525, %v1526
      %v1528 = vrot.slane %v1133, 2
      %v1529 = vsel %vm1366, %v1526, %v1528
      %v1530 = vrot.slane %v1134, 2
      %v1531 = vsel %vm1366, %v1528, %v1530
      %v1532 = vrot.slane %v1135, 2
      %v1533 = vsel %vm1366, %v1530, %v1532
      %v1539 = vrot.slane %v1136, 1
      %v1540 = vrot.slane %v1137, 1
      %v1541 = vsel %vm1221, %v1539, %v1540
      %v1542 = vrot.slane %v1138, 1
      %v1543 = vsel %vm1221, %v1540, %v1542
      %v1544 = vrot.slane %v1139, 1
      %v1545 = vsel %vm1221, %v1542, %v1544
      %v1546 = vrot.slane %v1140, 1
      %v1547 = vsel %vm1221, %v1544, %v1546
      %v1548 = vrot.slane %v1136, 2
      %v1549 = vrot.slane %v1137, 2
      %v1550 = vsel %vm1366, %v1548, %v1549
      %v1551 = vrot.slane %v1138, 2
      %v1552 = vsel %vm1366, %v1549, %v1551
      %v1553 = vrot.slane %v1139, 2
      %v1554 = vsel %vm1366, %v1551, %v1553
      %v1555 = vrot.slane %v1140, 2
      %v1556 = vsel %vm1366, %v1553, %v1555
      %1557 = vrot.lane.b32.xlu0 %v1224, 8
      %v1558 = vpop.permute.xlu0 %1557
      %1559 = vrot.lane.b32.xlu0 %v1226, 8
      %v1560 = vpop.permute.xlu0 %1559
      %1561 = vrot.lane.b32.xlu0 %v1228, 8
      %v1562 = vpop.permute.xlu0 %1561
      %1563 = vrot.lane.b32.xlu0 %v1230, 8
      %v1564 = vpop.permute.xlu0 %1563
      %1565 = vrot.lane.b32.xlu0 %v1233, 8
      %v1566 = vpop.permute.xlu0 %1565
      %1567 = vrot.lane.b32.xlu0 %v1235, 8
      %v1568 = vpop.permute.xlu0 %1567
      %1569 = vrot.lane.b32.xlu0 %v1237, 8
      %v1570 = vpop.permute.xlu0 %1569
      %1571 = vrot.lane.b32.xlu0 %v1239, 8
      %v1572 = vpop.permute.xlu0 %1571
      %1573 = vrot.lane.b32.xlu0 %v1242, 8
      %v1574 = vpop.permute.xlu0 %1573
      %1575 = vrot.lane.b32.xlu0 %v1244, 8
      %v1576 = vpop.permute.xlu0 %1575
      %1577 = vrot.lane.b32.xlu0 %v1246, 8
      %v1578 = vpop.permute.xlu0 %1577
      %1579 = vrot.lane.b32.xlu0 %v1248, 8
      %v1580 = vpop.permute.xlu0 %1579
      %1581 = vrot.lane.b32.xlu0 %v1251, 8
      %v1582 = vpop.permute.xlu0 %1581
      %1583 = vrot.lane.b32.xlu0 %v1253, 8
      %v1584 = vpop.permute.xlu0 %1583
      %1585 = vrot.lane.b32.xlu0 %v1255, 8
      %v1586 = vpop.permute.xlu0 %1585
      %1587 = vrot.lane.b32.xlu0 %v1257, 8
      %v1588 = vpop.permute.xlu0 %1587
      %1589 = vrot.lane.b32.xlu0 %v1260, 8
      %v1590 = vpop.permute.xlu0 %1589
      %1591 = vrot.lane.b32.xlu0 %v1262, 8
      %v1592 = vpop.permute.xlu0 %1591
      %1593 = vrot.lane.b32.xlu0 %v1264, 8
      %v1594 = vpop.permute.xlu0 %1593
      %1595 = vrot.lane.b32.xlu0 %v1266, 8
      %v1596 = vpop.permute.xlu0 %1595
      %1597 = vrot.lane.b32.xlu0 %v1269, 8
      %v1598 = vpop.permute.xlu0 %1597
      %1599 = vrot.lane.b32.xlu0 %v1271, 8
      %v1600 = vpop.permute.xlu0 %1599
      %1601 = vrot.lane.b32.xlu0 %v1273, 8
      %v1602 = vpop.permute.xlu0 %1601
      %1603 = vrot.lane.b32.xlu0 %v1275, 8
      %v1604 = vpop.permute.xlu0 %1603
      %1605 = vrot.lane.b32.xlu0 %v1278, 8
      %v1606 = vpop.permute.xlu0 %1605
      %1607 = vrot.lane.b32.xlu0 %v1280, 8
      %v1608 = vpop.permute.xlu0 %1607
      %1609 = vrot.lane.b32.xlu0 %v1282, 8
      %v1610 = vpop.permute.xlu0 %1609
      %1611 = vrot.lane.b32.xlu0 %v1284, 8
      %v1612 = vpop.permute.xlu0 %1611
      %1613 = vrot.lane.b32.xlu0 %v1287, 8
      %v1614 = vpop.permute.xlu0 %1613
      %1615 = vrot.lane.b32.xlu0 %v1289, 8
      %v1616 = vpop.permute.xlu0 %1615
      %1617 = vrot.lane.b32.xlu0 %v1291, 8
      %v1618 = vpop.permute.xlu0 %1617
      %1619 = vrot.lane.b32.xlu0 %v1293, 8
      %v1620 = vpop.permute.xlu0 %1619
      %1621 = vrot.lane.b32.xlu0 %v1296, 8
      %v1622 = vpop.permute.xlu0 %1621
      %1623 = vrot.lane.b32.xlu0 %v1298, 8
      %v1624 = vpop.permute.xlu0 %1623
      %1625 = vrot.lane.b32.xlu0 %v1300, 8
      %v1626 = vpop.permute.xlu0 %1625
      %1627 = vrot.lane.b32.xlu0 %v1302, 8
      %v1628 = vpop.permute.xlu0 %1627
      %1629 = vrot.lane.b32.xlu0 %v1305, 8
      %v1630 = vpop.permute.xlu0 %1629
      %1631 = vrot.lane.b32.xlu0 %v1307, 8
      %v1632 = vpop.permute.xlu0 %1631
      %1633 = vrot.lane.b32.xlu0 %v1309, 8
      %v1634 = vpop.permute.xlu0 %1633
      %1635 = vrot.lane.b32.xlu0 %v1311, 8
      %v1636 = vpop.permute.xlu0 %1635
      %1637 = vrot.lane.b32.xlu0 %v1314, 8
      %v1638 = vpop.permute.xlu0 %1637
      %1639 = vrot.lane.b32.xlu0 %v1316, 8
      %v1640 = vpop.permute.xlu0 %1639
      %1641 = vrot.lane.b32.xlu0 %v1318, 8
      %v1642 = vpop.permute.xlu0 %1641
      %1643 = vrot.lane.b32.xlu0 %v1320, 8
      %v1644 = vpop.permute.xlu0 %1643
      %1645 = vrot.lane.b32.xlu0 %v1323, 8
      %v1646 = vpop.permute.xlu0 %1645
      %1647 = vrot.lane.b32.xlu0 %v1325, 8
      %v1648 = vpop.permute.xlu0 %1647
      %1649 = vrot.lane.b32.xlu0 %v1327, 8
      %v1650 = vpop.permute.xlu0 %1649
      %1651 = vrot.lane.b32.xlu0 %v1329, 8
      %v1652 = vpop.permute.xlu0 %1651
      %1653 = vrot.lane.b32.xlu0 %v1332, 8
      %v1654 = vpop.permute.xlu0 %1653
      %1655 = vrot.lane.b32.xlu0 %v1334, 8
      %v1656 = vpop.permute.xlu0 %1655
      %1657 = vrot.lane.b32.xlu0 %v1336, 8
      %v1658 = vpop.permute.xlu0 %1657
      %1659 = vrot.lane.b32.xlu0 %v1338, 8
      %v1660 = vpop.permute.xlu0 %1659
      %1661 = vrot.lane.b32.xlu0 %v1341, 8
      %v1662 = vpop.permute.xlu0 %1661
      %1663 = vrot.lane.b32.xlu0 %v1343, 8
      %v1664 = vpop.permute.xlu0 %1663
      %1665 = vrot.lane.b32.xlu0 %v1345, 8
      %v1666 = vpop.permute.xlu0 %1665
      %1667 = vrot.lane.b32.xlu0 %v1347, 8
      %v1668 = vpop.permute.xlu0 %1667
      %1669 = vrot.lane.b32.xlu0 %v1350, 8
      %v1670 = vpop.permute.xlu0 %1669
      %1671 = vrot.lane.b32.xlu0 %v1352, 8
      %v1672 = vpop.permute.xlu0 %1671
      %1673 = vrot.lane.b32.xlu0 %v1354, 8
      %v1674 = vpop.permute.xlu0 %1673
      %1675 = vrot.lane.b32.xlu0 %v1356, 8
      %v1676 = vpop.permute.xlu0 %1675
      %1677 = vrot.lane.b32.xlu0 %v1359, 8
      %v1678 = vpop.permute.xlu0 %1677
      %1679 = vrot.lane.b32.xlu0 %v1361, 8
      %v1680 = vpop.permute.xlu0 %1679
      %1681 = vrot.lane.b32.xlu0 %v1363, 8
      %v1682 = vpop.permute.xlu0 %1681
      %1683 = vrot.lane.b32.xlu0 %v1365, 8
      %v1684 = vpop.permute.xlu0 %1683
      %1749 = vrot.lane.b32.xlu0 %v1369, 16
      %v1750 = vpop.permute.xlu0 %1749
      %1751 = vrot.lane.b32.xlu0 %v1371, 16
      %v1752 = vpop.permute.xlu0 %1751
      %1753 = vrot.lane.b32.xlu0 %v1373, 16
      %v1754 = vpop.permute.xlu0 %1753
      %1755 = vrot.lane.b32.xlu0 %v1375, 16
      %v1756 = vpop.permute.xlu0 %1755
      %1757 = vrot.lane.b32.xlu0 %v1378, 16
      %v1758 = vpop.permute.xlu0 %1757
      %1759 = vrot.lane.b32.xlu0 %v1380, 16
      %v1760 = vpop.permute.xlu0 %1759
      %1761 = vrot.lane.b32.xlu0 %v1382, 16
      %v1762 = vpop.permute.xlu0 %1761
      %1763 = vrot.lane.b32.xlu0 %v1384, 16
      %v1764 = vpop.permute.xlu0 %1763
      %1765 = vrot.lane.b32.xlu0 %v1387, 16
      %v1766 = vpop.permute.xlu0 %1765
      %1767 = vrot.lane.b32.xlu0 %v1389, 16
      %v1768 = vpop.permute.xlu0 %1767
      %1769 = vrot.lane.b32.xlu0 %v1391, 16
      %v1770 = vpop.permute.xlu0 %1769
      %1771 = vrot.lane.b32.xlu0 %v1393, 16
      %v1772 = vpop.permute.xlu0 %1771
      %1773 = vrot.lane.b32.xlu0 %v1396, 16
      %v1774 = vpop.permute.xlu0 %1773
      %1775 = vrot.lane.b32.xlu0 %v1398, 16
      %v1776 = vpop.permute.xlu0 %1775
      %1777 = vrot.lane.b32.xlu0 %v1400, 16
      %v1778 = vpop.permute.xlu0 %1777
      %1779 = vrot.lane.b32.xlu0 %v1402, 16
      %v1780 = vpop.permute.xlu0 %1779
      %1781 = vrot.lane.b32.xlu0 %v1405, 16
      %v1782 = vpop.permute.xlu0 %1781
      %1783 = vrot.lane.b32.xlu0 %v1407, 16
      %v1784 = vpop.permute.xlu0 %1783
      %1785 = vrot.lane.b32.xlu0 %v1409, 16
      %v1786 = vpop.permute.xlu0 %1785
      %1787 = vrot.lane.b32.xlu0 %v1411, 16
      %v1788 = vpop.permute.xlu0 %1787
      %1789 = vrot.lane.b32.xlu0 %v1414, 16
      %v1790 = vpop.permute.xlu0 %1789
      %1791 = vrot.lane.b32.xlu0 %v1416, 16
      %v1792 = vpop.permute.xlu0 %1791
      %1793 = vrot.lane.b32.xlu0 %v1418, 16
      %v1794 = vpop.permute.xlu0 %1793
      %1795 = vrot.lane.b32.xlu0 %v1420, 16
      %v1796 = vpop.permute.xlu0 %1795
      %1797 = vrot.lane.b32.xlu0 %v1423, 16
      %v1798 = vpop.permute.xlu0 %1797
      %1799 = vrot.lane.b32.xlu0 %v1425, 16
      %v1800 = vpop.permute.xlu0 %1799
      %1801 = vrot.lane.b32.xlu0 %v1427, 16
      %v1802 = vpop.permute.xlu0 %1801
      %1803 = vrot.lane.b32.xlu0 %v1429, 16
      %v1804 = vpop.permute.xlu0 %1803
      %1805 = vrot.lane.b32.xlu0 %v1432, 16
      %v1806 = vpop.permute.xlu0 %1805
      %1807 = vrot.lane.b32.xlu0 %v1434, 16
      %v1808 = vpop.permute.xlu0 %1807
      %1809 = vrot.lane.b32.xlu0 %v1436, 16
      %v1810 = vpop.permute.xlu0 %1809
      %1811 = vrot.lane.b32.xlu0 %v1438, 16
      %v1812 = vpop.permute.xlu0 %1811
      %1813 = vrot.lane.b32.xlu0 %v1441, 16
      %v1814 = vpop.permute.xlu0 %1813
      %1815 = vrot.lane.b32.xlu0 %v1443, 16
      %v1816 = vpop.permute.xlu0 %1815
      %1817 = vrot.lane.b32.xlu0 %v1445, 16
      %v1818 = vpop.permute.xlu0 %1817
      %1819 = vrot.lane.b32.xlu0 %v1447, 16
      %v1820 = vpop.permute.xlu0 %1819
      %1821 = vrot.lane.b32.xlu0 %v1450, 16
      %v1822 = vpop.permute.xlu0 %1821
      %1823 = vrot.lane.b32.xlu0 %v1452, 16
      %v1824 = vpop.permute.xlu0 %1823
      %1825 = vrot.lane.b32.xlu0 %v1454, 16
      %v1826 = vpop.permute.xlu0 %1825
      %1827 = vrot.lane.b32.xlu0 %v1456, 16
      %v1828 = vpop.permute.xlu0 %1827
      %1829 = vrot.lane.b32.xlu0 %v1459, 16
      %v1830 = vpop.permute.xlu0 %1829
      %1831 = vrot.lane.b32.xlu0 %v1461, 16
      %v1832 = vpop.permute.xlu0 %1831
      %1833 = vrot.lane.b32.xlu0 %v1463, 16
      %v1834 = vpop.permute.xlu0 %1833
      %1835 = vrot.lane.b32.xlu0 %v1465, 16
      %v1836 = vpop.permute.xlu0 %1835
      %1837 = vrot.lane.b32.xlu0 %v1468, 16
      %v1838 = vpop.permute.xlu0 %1837
      %1839 = vrot.lane.b32.xlu0 %v1470, 16
      %v1840 = vpop.permute.xlu0 %1839
      %1841 = vrot.lane.b32.xlu0 %v1472, 16
      %v1842 = vpop.permute.xlu0 %1841
      %1843 = vrot.lane.b32.xlu0 %v1474, 16
      %v1844 = vpop.permute.xlu0 %1843
      %1845 = vrot.lane.b32.xlu0 %v1477, 16
      %v1846 = vpop.permute.xlu0 %1845
      %1847 = vrot.lane.b32.xlu0 %v1479, 16
      %v1848 = vpop.permute.xlu0 %1847
      %1849 = vrot.lane.b32.xlu0 %v1481, 16
      %v1850 = vpop.permute.xlu0 %1849
      %1851 = vrot.lane.b32.xlu0 %v1483, 16
      %v1852 = vpop.permute.xlu0 %1851
      %1853 = vrot.lane.b32.xlu0 %v1486, 16
      %v1854 = vpop.permute.xlu0 %1853
      %1855 = vrot.lane.b32.xlu0 %v1488, 16
      %v1856 = vpop.permute.xlu0 %1855
      %1857 = vrot.lane.b32.xlu0 %v1490, 16
      %v1858 = vpop.permute.xlu0 %1857
      %1859 = vrot.lane.b32.xlu0 %v1492, 16
      %v1860 = vpop.permute.xlu0 %1859
      %1861 = vrot.lane.b32.xlu0 %v1495, 16
      %v1862 = vpop.permute.xlu0 %1861
      %1863 = vrot.lane.b32.xlu0 %v1497, 16
      %v1864 = vpop.permute.xlu0 %1863
      %1865 = vrot.lane.b32.xlu0 %v1499, 16
      %v1866 = vpop.permute.xlu0 %1865
      %1867 = vrot.lane.b32.xlu0 %v1501, 16
      %v1868 = vpop.permute.xlu0 %1867
      %1869 = vrot.lane.b32.xlu0 %v1504, 16
      %v1870 = vpop.permute.xlu0 %1869
      %1871 = vrot.lane.b32.xlu0 %v1506, 16
      %v1872 = vpop.permute.xlu0 %1871
      %1873 = vrot.lane.b32.xlu0 %v1508, 16
      %v1874 = vpop.permute.xlu0 %1873
      %1875 = vrot.lane.b32.xlu0 %v1510, 16
      %v1876 = vpop.permute.xlu0 %1875
      %1941 = vrot.lane.b32.xlu0 %v1056, 24
      %v1942 = vpop.permute.xlu0 %1941
      %1943 = vrot.lane.b32.xlu0 %v1057, 24
      %v1944 = vpop.permute.xlu0 %1943
      %1945 = vrot.lane.b32.xlu0 %v1058, 24
      %v1946 = vpop.permute.xlu0 %1945
      %1947 = vrot.lane.b32.xlu0 %v1059, 24
      %v1948 = vpop.permute.xlu0 %1947
      %1949 = vrot.lane.b32.xlu0 %v1061, 24
      %v1950 = vpop.permute.xlu0 %1949
      %1951 = vrot.lane.b32.xlu0 %v1062, 24
      %v1952 = vpop.permute.xlu0 %1951
      %1953 = vrot.lane.b32.xlu0 %v1063, 24
      %v1954 = vpop.permute.xlu0 %1953
      %1955 = vrot.lane.b32.xlu0 %v1064, 24
      %v1956 = vpop.permute.xlu0 %1955
      %1957 = vrot.lane.b32.xlu0 %v1066, 24
      %v1958 = vpop.permute.xlu0 %1957
      %1959 = vrot.lane.b32.xlu0 %v1067, 24
      %v1960 = vpop.permute.xlu0 %1959
      %1961 = vrot.lane.b32.xlu0 %v1068, 24
      %v1962 = vpop.permute.xlu0 %1961
      %1963 = vrot.lane.b32.xlu0 %v1069, 24
      %v1964 = vpop.permute.xlu0 %1963
      %1965 = vrot.lane.b32.xlu0 %v1071, 24
      %v1966 = vpop.permute.xlu0 %1965
      %1967 = vrot.lane.b32.xlu0 %v1072, 24
      %v1968 = vpop.permute.xlu0 %1967
      %1969 = vrot.lane.b32.xlu0 %v1073, 24
      %v1970 = vpop.permute.xlu0 %1969
      %1971 = vrot.lane.b32.xlu0 %v1074, 24
      %v1972 = vpop.permute.xlu0 %1971
      %1973 = vrot.lane.b32.xlu0 %v1076, 24
      %v1974 = vpop.permute.xlu0 %1973
      %1975 = vrot.lane.b32.xlu0 %v1077, 24
      %v1976 = vpop.permute.xlu0 %1975
      %1977 = vrot.lane.b32.xlu0 %v1078, 24
      %v1978 = vpop.permute.xlu0 %1977
      %1979 = vrot.lane.b32.xlu0 %v1079, 24
      %v1980 = vpop.permute.xlu0 %1979
      %1981 = vrot.lane.b32.xlu0 %v1081, 24
      %v1982 = vpop.permute.xlu0 %1981
      %1983 = vrot.lane.b32.xlu0 %v1082, 24
      %v1984 = vpop.permute.xlu0 %1983
      %1985 = vrot.lane.b32.xlu0 %v1083, 24
      %v1986 = vpop.permute.xlu0 %1985
      %1987 = vrot.lane.b32.xlu0 %v1084, 24
      %v1988 = vpop.permute.xlu0 %1987
      %1989 = vrot.lane.b32.xlu0 %v1086, 24
      %v1990 = vpop.permute.xlu0 %1989
      %1991 = vrot.lane.b32.xlu0 %v1087, 24
      %v1992 = vpop.permute.xlu0 %1991
      %1993 = vrot.lane.b32.xlu0 %v1088, 24
      %v1994 = vpop.permute.xlu0 %1993
      %1995 = vrot.lane.b32.xlu0 %v1089, 24
      %v1996 = vpop.permute.xlu0 %1995
      %1997 = vrot.lane.b32.xlu0 %v1091, 24
      %v1998 = vpop.permute.xlu0 %1997
      %1999 = vrot.lane.b32.xlu0 %v1092, 24
      %v2000 = vpop.permute.xlu0 %1999
      %2001 = vrot.lane.b32.xlu0 %v1093, 24
      %v2002 = vpop.permute.xlu0 %2001
      %2003 = vrot.lane.b32.xlu0 %v1094, 24
      %v2004 = vpop.permute.xlu0 %2003
      %2005 = vrot.lane.b32.xlu0 %v1096, 24
      %v2006 = vpop.permute.xlu0 %2005
      %2007 = vrot.lane.b32.xlu0 %v1097, 24
      %v2008 = vpop.permute.xlu0 %2007
      %2009 = vrot.lane.b32.xlu0 %v1098, 24
      %v2010 = vpop.permute.xlu0 %2009
      %2011 = vrot.lane.b32.xlu0 %v1099, 24
      %v2012 = vpop.permute.xlu0 %2011
      %2013 = vrot.lane.b32.xlu0 %v1101, 24
      %v2014 = vpop.permute.xlu0 %2013
      %2015 = vrot.lane.b32.xlu0 %v1102, 24
      %v2016 = vpop.permute.xlu0 %2015
      %2017 = vrot.lane.b32.xlu0 %v1103, 24
      %v2018 = vpop.permute.xlu0 %2017
      %2019 = vrot.lane.b32.xlu0 %v1104, 24
      %v2020 = vpop.permute.xlu0 %2019
      %2021 = vrot.lane.b32.xlu0 %v1106, 24
      %v2022 = vpop.permute.xlu0 %2021
      %2023 = vrot.lane.b32.xlu0 %v1107, 24
      %v2024 = vpop.permute.xlu0 %2023
      %2025 = vrot.lane.b32.xlu0 %v1108, 24
      %v2026 = vpop.permute.xlu0 %2025
      %2027 = vrot.lane.b32.xlu0 %v1109, 24
      %v2028 = vpop.permute.xlu0 %2027
      %2029 = vrot.lane.b32.xlu0 %v1111, 24
      %v2030 = vpop.permute.xlu0 %2029
      %2031 = vrot.lane.b32.xlu0 %v1112, 24
      %v2032 = vpop.permute.xlu0 %2031
      %2033 = vrot.lane.b32.xlu0 %v1113, 24
      %v2034 = vpop.permute.xlu0 %2033
      %2035 = vrot.lane.b32.xlu0 %v1114, 24
      %v2036 = vpop.permute.xlu0 %2035
      %2037 = vrot.lane.b32.xlu0 %v1116, 24
      %v2038 = vpop.permute.xlu0 %2037
      %2039 = vrot.lane.b32.xlu0 %v1117, 24
      %v2040 = vpop.permute.xlu0 %2039
      %2041 = vrot.lane.b32.xlu0 %v1118, 24
      %v2042 = vpop.permute.xlu0 %2041
      %2043 = vrot.lane.b32.xlu0 %v1119, 24
      %v2044 = vpop.permute.xlu0 %2043
      %2045 = vrot.lane.b32.xlu0 %v1121, 24
      %v2046 = vpop.permute.xlu0 %2045
      %2047 = vrot.lane.b32.xlu0 %v1122, 24
      %v2048 = vpop.permute.xlu0 %2047
      %2049 = vrot.lane.b32.xlu0 %v1123, 24
      %v2050 = vpop.permute.xlu0 %2049
      %2051 = vrot.lane.b32.xlu0 %v1124, 24
      %v2052 = vpop.permute.xlu0 %2051
      %2053 = vrot.lane.b32.xlu0 %v1126, 24
      %v2054 = vpop.permute.xlu0 %2053
      %2055 = vrot.lane.b32.xlu0 %v1127, 24
      %v2056 = vpop.permute.xlu0 %2055
      %2057 = vrot.lane.b32.xlu0 %v1128, 24
      %v2058 = vpop.permute.xlu0 %2057
      %2059 = vrot.lane.b32.xlu0 %v1129, 24
      %v2060 = vpop.permute.xlu0 %2059
      %2061 = vrot.lane.b32.xlu0 %v1131, 24
      %v2062 = vpop.permute.xlu0 %2061
      %2063 = vrot.lane.b32.xlu0 %v1132, 24
      %v2064 = vpop.permute.xlu0 %2063
      %2065 = vrot.lane.b32.xlu0 %v1133, 24
      %v2066 = vpop.permute.xlu0 %2065
      %2067 = vrot.lane.b32.xlu0 %v1134, 24
      %v2068 = vpop.permute.xlu0 %2067
      %2133 = vrot.lane.b32.xlu0 %v1233, 32
      %v2134 = vpop.permute.xlu0 %2133
      %2135 = vrot.lane.b32.xlu0 %v1235, 32
      %v2136 = vpop.permute.xlu0 %2135
      %2137 = vrot.lane.b32.xlu0 %v1237, 32
      %v2138 = vpop.permute.xlu0 %2137
      %2139 = vrot.lane.b32.xlu0 %v1239, 32
      %v2140 = vpop.permute.xlu0 %2139
      %2141 = vrot.lane.b32.xlu0 %v1242, 32
      %v2142 = vpop.permute.xlu0 %2141
      %2143 = vrot.lane.b32.xlu0 %v1244, 32
      %v2144 = vpop.permute.xlu0 %2143
      %2145 = vrot.lane.b32.xlu0 %v1246, 32
      %v2146 = vpop.permute.xlu0 %2145
      %2147 = vrot.lane.b32.xlu0 %v1248, 32
      %v2148 = vpop.permute.xlu0 %2147
      %2149 = vrot.lane.b32.xlu0 %v1251, 32
      %v2150 = vpop.permute.xlu0 %2149
      %2151 = vrot.lane.b32.xlu0 %v1253, 32
      %v2152 = vpop.permute.xlu0 %2151
      %2153 = vrot.lane.b32.xlu0 %v1255, 32
      %v2154 = vpop.permute.xlu0 %2153
      %2155 = vrot.lane.b32.xlu0 %v1257, 32
      %v2156 = vpop.permute.xlu0 %2155
      %2157 = vrot.lane.b32.xlu0 %v1260, 32
      %v2158 = vpop.permute.xlu0 %2157
      %2159 = vrot.lane.b32.xlu0 %v1262, 32
      %v2160 = vpop.permute.xlu0 %2159
      %2161 = vrot.lane.b32.xlu0 %v1264, 32
      %v2162 = vpop.permute.xlu0 %2161
      %2163 = vrot.lane.b32.xlu0 %v1266, 32
      %v2164 = vpop.permute.xlu0 %2163
      %2165 = vrot.lane.b32.xlu0 %v1269, 32
      %v2166 = vpop.permute.xlu0 %2165
      %2167 = vrot.lane.b32.xlu0 %v1271, 32
      %v2168 = vpop.permute.xlu0 %2167
      %2169 = vrot.lane.b32.xlu0 %v1273, 32
      %v2170 = vpop.permute.xlu0 %2169
      %2171 = vrot.lane.b32.xlu0 %v1275, 32
      %v2172 = vpop.permute.xlu0 %2171
      %2173 = vrot.lane.b32.xlu0 %v1278, 32
      %v2174 = vpop.permute.xlu0 %2173
      %2175 = vrot.lane.b32.xlu0 %v1280, 32
      %v2176 = vpop.permute.xlu0 %2175
      %2177 = vrot.lane.b32.xlu0 %v1282, 32
      %v2178 = vpop.permute.xlu0 %2177
      %2179 = vrot.lane.b32.xlu0 %v1284, 32
      %v2180 = vpop.permute.xlu0 %2179
      %2181 = vrot.lane.b32.xlu0 %v1287, 32
      %v2182 = vpop.permute.xlu0 %2181
      %2183 = vrot.lane.b32.xlu0 %v1289, 32
      %v2184 = vpop.permute.xlu0 %2183
      %2185 = vrot.lane.b32.xlu0 %v1291, 32
      %v2186 = vpop.permute.xlu0 %2185
      %2187 = vrot.lane.b32.xlu0 %v1293, 32
      %v2188 = vpop.permute.xlu0 %2187
      %2189 = vrot.lane.b32.xlu0 %v1296, 32
      %v2190 = vpop.permute.xlu0 %2189
      %2191 = vrot.lane.b32.xlu0 %v1298, 32
      %v2192 = vpop.permute.xlu0 %2191
      %2193 = vrot.lane.b32.xlu0 %v1300, 32
      %v2194 = vpop.permute.xlu0 %2193
      %2195 = vrot.lane.b32.xlu0 %v1302, 32
      %v2196 = vpop.permute.xlu0 %2195
      %2197 = vrot.lane.b32.xlu0 %v1305, 32
      %v2198 = vpop.permute.xlu0 %2197
      %2199 = vrot.lane.b32.xlu0 %v1307, 32
      %v2200 = vpop.permute.xlu0 %2199
      %2201 = vrot.lane.b32.xlu0 %v1309, 32
      %v2202 = vpop.permute.xlu0 %2201
      %2203 = vrot.lane.b32.xlu0 %v1311, 32
      %v2204 = vpop.permute.xlu0 %2203
      %2205 = vrot.lane.b32.xlu0 %v1314, 32
      %v2206 = vpop.permute.xlu0 %2205
      %2207 = vrot.lane.b32.xlu0 %v1316, 32
      %v2208 = vpop.permute.xlu0 %2207
      %2209 = vrot.lane.b32.xlu0 %v1318, 32
      %v2210 = vpop.permute.xlu0 %2209
      %2211 = vrot.lane.b32.xlu0 %v1320, 32
      %v2212 = vpop.permute.xlu0 %2211
      %2213 = vrot.lane.b32.xlu0 %v1323, 32
      %v2214 = vpop.permute.xlu0 %2213
      %2215 = vrot.lane.b32.xlu0 %v1325, 32
      %v2216 = vpop.permute.xlu0 %2215
      %2217 = vrot.lane.b32.xlu0 %v1327, 32
      %v2218 = vpop.permute.xlu0 %2217
      %2219 = vrot.lane.b32.xlu0 %v1329, 32
      %v2220 = vpop.permute.xlu0 %2219
      %2221 = vrot.lane.b32.xlu0 %v1332, 32
      %v2222 = vpop.permute.xlu0 %2221
      %2223 = vrot.lane.b32.xlu0 %v1334, 32
      %v2224 = vpop.permute.xlu0 %2223
      %2225 = vrot.lane.b32.xlu0 %v1336, 32
      %v2226 = vpop.permute.xlu0 %2225
      %2227 = vrot.lane.b32.xlu0 %v1338, 32
      %v2228 = vpop.permute.xlu0 %2227
      %2229 = vrot.lane.b32.xlu0 %v1341, 32
      %v2230 = vpop.permute.xlu0 %2229
      %2231 = vrot.lane.b32.xlu0 %v1343, 32
      %v2232 = vpop.permute.xlu0 %2231
      %2233 = vrot.lane.b32.xlu0 %v1345, 32
      %v2234 = vpop.permute.xlu0 %2233
      %2235 = vrot.lane.b32.xlu0 %v1347, 32
      %v2236 = vpop.permute.xlu0 %2235
      %2237 = vrot.lane.b32.xlu0 %v1350, 32
      %v2238 = vpop.permute.xlu0 %2237
      %2239 = vrot.lane.b32.xlu0 %v1352, 32
      %v2240 = vpop.permute.xlu0 %2239
      %2241 = vrot.lane.b32.xlu0 %v1354, 32
      %v2242 = vpop.permute.xlu0 %2241
      %2243 = vrot.lane.b32.xlu0 %v1356, 32
      %v2244 = vpop.permute.xlu0 %2243
      %2245 = vrot.lane.b32.xlu0 %v1359, 32
      %v2246 = vpop.permute.xlu0 %2245
      %2247 = vrot.lane.b32.xlu0 %v1361, 32
      %v2248 = vpop.permute.xlu0 %2247
      %2249 = vrot.lane.b32.xlu0 %v1363, 32
      %v2250 = vpop.permute.xlu0 %2249
      %2251 = vrot.lane.b32.xlu0 %v1365, 32
      %v2252 = vpop.permute.xlu0 %2251
      %2253 = vrot.lane.b32.xlu0 %v1518, 32
      %v2254 = vpop.permute.xlu0 %2253
      %2255 = vrot.lane.b32.xlu0 %v1520, 32
      %v2256 = vpop.permute.xlu0 %2255
      %2257 = vrot.lane.b32.xlu0 %v1522, 32
      %v2258 = vpop.permute.xlu0 %2257
      %2259 = vrot.lane.b32.xlu0 %v1524, 32
      %v2260 = vpop.permute.xlu0 %2259
      %2325 = vrot.lane.b32.xlu0 %v1378, 40
      %v2326 = vpop.permute.xlu0 %2325
      %2327 = vrot.lane.b32.xlu0 %v1380, 40
      %v2328 = vpop.permute.xlu0 %2327
      %2329 = vrot.lane.b32.xlu0 %v1382, 40
      %v2330 = vpop.permute.xlu0 %2329
      %2331 = vrot.lane.b32.xlu0 %v1384, 40
      %v2332 = vpop.permute.xlu0 %2331
      %2333 = vrot.lane.b32.xlu0 %v1387, 40
      %v2334 = vpop.permute.xlu0 %2333
      %2335 = vrot.lane.b32.xlu0 %v1389, 40
      %v2336 = vpop.permute.xlu0 %2335
      %2337 = vrot.lane.b32.xlu0 %v1391, 40
      %v2338 = vpop.permute.xlu0 %2337
      %2339 = vrot.lane.b32.xlu0 %v1393, 40
      %v2340 = vpop.permute.xlu0 %2339
      %2341 = vrot.lane.b32.xlu0 %v1396, 40
      %v2342 = vpop.permute.xlu0 %2341
      %2343 = vrot.lane.b32.xlu0 %v1398, 40
      %v2344 = vpop.permute.xlu0 %2343
      %2345 = vrot.lane.b32.xlu0 %v1400, 40
      %v2346 = vpop.permute.xlu0 %2345
      %2347 = vrot.lane.b32.xlu0 %v1402, 40
      %v2348 = vpop.permute.xlu0 %2347
      %2349 = vrot.lane.b32.xlu0 %v1405, 40
      %v2350 = vpop.permute.xlu0 %2349
      %2351 = vrot.lane.b32.xlu0 %v1407, 40
      %v2352 = vpop.permute.xlu0 %2351
      %2353 = vrot.lane.b32.xlu0 %v1409, 40
      %v2354 = vpop.permute.xlu0 %2353
      %2355 = vrot.lane.b32.xlu0 %v1411, 40
      %v2356 = vpop.permute.xlu0 %2355
      %2357 = vrot.lane.b32.xlu0 %v1414, 40
      %v2358 = vpop.permute.xlu0 %2357
      %2359 = vrot.lane.b32.xlu0 %v1416, 40
      %v2360 = vpop.permute.xlu0 %2359
      %2361 = vrot.lane.b32.xlu0 %v1418, 40
      %v2362 = vpop.permute.xlu0 %2361
      %2363 = vrot.lane.b32.xlu0 %v1420, 40
      %v2364 = vpop.permute.xlu0 %2363
      %2365 = vrot.lane.b32.xlu0 %v1423, 40
      %v2366 = vpop.permute.xlu0 %2365
      %2367 = vrot.lane.b32.xlu0 %v1425, 40
      %v2368 = vpop.permute.xlu0 %2367
      %2369 = vrot.lane.b32.xlu0 %v1427, 40
      %v2370 = vpop.permute.xlu0 %2369
      %2371 = vrot.lane.b32.xlu0 %v1429, 40
      %v2372 = vpop.permute.xlu0 %2371
      %2373 = vrot.lane.b32.xlu0 %v1432, 40
      %v2374 = vpop.permute.xlu0 %2373
      %2375 = vrot.lane.b32.xlu0 %v1434, 40
      %v2376 = vpop.permute.xlu0 %2375
      %2377 = vrot.lane.b32.xlu0 %v1436, 40
      %v2378 = vpop.permute.xlu0 %2377
      %2379 = vrot.lane.b32.xlu0 %v1438, 40
      %v2380 = vpop.permute.xlu0 %2379
      %2381 = vrot.lane.b32.xlu0 %v1441, 40
      %v2382 = vpop.permute.xlu0 %2381
      %2383 = vrot.lane.b32.xlu0 %v1443, 40
      %v2384 = vpop.permute.xlu0 %2383
      %2385 = vrot.lane.b32.xlu0 %v1445, 40
      %v2386 = vpop.permute.xlu0 %2385
      %2387 = vrot.lane.b32.xlu0 %v1447, 40
      %v2388 = vpop.permute.xlu0 %2387
      %2389 = vrot.lane.b32.xlu0 %v1450, 40
      %v2390 = vpop.permute.xlu0 %2389
      %2391 = vrot.lane.b32.xlu0 %v1452, 40
      %v2392 = vpop.permute.xlu0 %2391
      %2393 = vrot.lane.b32.xlu0 %v1454, 40
      %v2394 = vpop.permute.xlu0 %2393
      %2395 = vrot.lane.b32.xlu0 %v1456, 40
      %v2396 = vpop.permute.xlu0 %2395
      %2397 = vrot.lane.b32.xlu0 %v1459, 40
      %v2398 = vpop.permute.xlu0 %2397
      %2399 = vrot.lane.b32.xlu0 %v1461, 40
      %v2400 = vpop.permute.xlu0 %2399
      %2401 = vrot.lane.b32.xlu0 %v1463, 40
      %v2402 = vpop.permute.xlu0 %2401
      %2403 = vrot.lane.b32.xlu0 %v1465, 40
      %v2404 = vpop.permute.xlu0 %2403
      %2405 = vrot.lane.b32.xlu0 %v1468, 40
      %v2406 = vpop.permute.xlu0 %2405
      %2407 = vrot.lane.b32.xlu0 %v1470, 40
      %v2408 = vpop.permute.xlu0 %2407
      %2409 = vrot.lane.b32.xlu0 %v1472, 40
      %v2410 = vpop.permute.xlu0 %2409
      %2411 = vrot.lane.b32.xlu0 %v1474, 40
      %v2412 = vpop.permute.xlu0 %2411
      %2413 = vrot.lane.b32.xlu0 %v1477, 40
      %v2414 = vpop.permute.xlu0 %2413
      %2415 = vrot.lane.b32.xlu0 %v1479, 40
      %v2416 = vpop.permute.xlu0 %2415
      %2417 = vrot.lane.b32.xlu0 %v1481, 40
      %v2418 = vpop.permute.xlu0 %2417
      %2419 = vrot.lane.b32.xlu0 %v1483, 40
      %v2420 = vpop.permute.xlu0 %2419
      %2421 = vrot.lane.b32.xlu0 %v1486, 40
      %v2422 = vpop.permute.xlu0 %2421
      %2423 = vrot.lane.b32.xlu0 %v1488, 40
      %v2424 = vpop.permute.xlu0 %2423
      %2425 = vrot.lane.b32.xlu0 %v1490, 40
      %v2426 = vpop.permute.xlu0 %2425
      %2427 = vrot.lane.b32.xlu0 %v1492, 40
      %v2428 = vpop.permute.xlu0 %2427
      %2429 = vrot.lane.b32.xlu0 %v1495, 40
      %v2430 = vpop.permute.xlu0 %2429
      %2431 = vrot.lane.b32.xlu0 %v1497, 40
      %v2432 = vpop.permute.xlu0 %2431
      %2433 = vrot.lane.b32.xlu0 %v1499, 40
      %v2434 = vpop.permute.xlu0 %2433
      %2435 = vrot.lane.b32.xlu0 %v1501, 40
      %v2436 = vpop.permute.xlu0 %2435
      %2437 = vrot.lane.b32.xlu0 %v1504, 40
      %v2438 = vpop.permute.xlu0 %2437
      %2439 = vrot.lane.b32.xlu0 %v1506, 40
      %v2440 = vpop.permute.xlu0 %2439
      %2441 = vrot.lane.b32.xlu0 %v1508, 40
      %v2442 = vpop.permute.xlu0 %2441
      %2443 = vrot.lane.b32.xlu0 %v1510, 40
      %v2444 = vpop.permute.xlu0 %2443
      %2445 = vrot.lane.b32.xlu0 %v1527, 40
      %v2446 = vpop.permute.xlu0 %2445
      %2447 = vrot.lane.b32.xlu0 %v1529, 40
      %v2448 = vpop.permute.xlu0 %2447
      %2449 = vrot.lane.b32.xlu0 %v1531, 40
      %v2450 = vpop.permute.xlu0 %2449
      %2451 = vrot.lane.b32.xlu0 %v1533, 40
      %v2452 = vpop.permute.xlu0 %2451
      %2517 = vrot.lane.b32.xlu0 %v1061, 48
      %v2518 = vpop.permute.xlu0 %2517
      %2519 = vrot.lane.b32.xlu0 %v1062, 48
      %v2520 = vpop.permute.xlu0 %2519
      %2521 = vrot.lane.b32.xlu0 %v1063, 48
      %v2522 = vpop.permute.xlu0 %2521
      %2523 = vrot.lane.b32.xlu0 %v1064, 48
      %v2524 = vpop.permute.xlu0 %2523
      %2525 = vrot.lane.b32.xlu0 %v1066, 48
      %v2526 = vpop.permute.xlu0 %2525
      %2527 = vrot.lane.b32.xlu0 %v1067, 48
      %v2528 = vpop.permute.xlu0 %2527
      %2529 = vrot.lane.b32.xlu0 %v1068, 48
      %v2530 = vpop.permute.xlu0 %2529
      %2531 = vrot.lane.b32.xlu0 %v1069, 48
      %v2532 = vpop.permute.xlu0 %2531
      %2533 = vrot.lane.b32.xlu0 %v1071, 48
      %v2534 = vpop.permute.xlu0 %2533
      %2535 = vrot.lane.b32.xlu0 %v1072, 48
      %v2536 = vpop.permute.xlu0 %2535
      %2537 = vrot.lane.b32.xlu0 %v1073, 48
      %v2538 = vpop.permute.xlu0 %2537
      %2539 = vrot.lane.b32.xlu0 %v1074, 48
      %v2540 = vpop.permute.xlu0 %2539
      %2541 = vrot.lane.b32.xlu0 %v1076, 48
      %v2542 = vpop.permute.xlu0 %2541
      %2543 = vrot.lane.b32.xlu0 %v1077, 48
      %v2544 = vpop.permute.xlu0 %2543
      %2545 = vrot.lane.b32.xlu0 %v1078, 48
      %v2546 = vpop.permute.xlu0 %2545
      %2547 = vrot.lane.b32.xlu0 %v1079, 48
      %v2548 = vpop.permute.xlu0 %2547
      %2549 = vrot.lane.b32.xlu0 %v1081, 48
      %v2550 = vpop.permute.xlu0 %2549
      %2551 = vrot.lane.b32.xlu0 %v1082, 48
      %v2552 = vpop.permute.xlu0 %2551
      %2553 = vrot.lane.b32.xlu0 %v1083, 48
      %v2554 = vpop.permute.xlu0 %2553
      %2555 = vrot.lane.b32.xlu0 %v1084, 48
      %v2556 = vpop.permute.xlu0 %2555
      %2557 = vrot.lane.b32.xlu0 %v1086, 48
      %v2558 = vpop.permute.xlu0 %2557
      %2559 = vrot.lane.b32.xlu0 %v1087, 48
      %v2560 = vpop.permute.xlu0 %2559
      %2561 = vrot.lane.b32.xlu0 %v1088, 48
      %v2562 = vpop.permute.xlu0 %2561
      %2563 = vrot.lane.b32.xlu0 %v1089, 48
      %v2564 = vpop.permute.xlu0 %2563
      %2565 = vrot.lane.b32.xlu0 %v1091, 48
      %v2566 = vpop.permute.xlu0 %2565
      %2567 = vrot.lane.b32.xlu0 %v1092, 48
      %v2568 = vpop.permute.xlu0 %2567
      %2569 = vrot.lane.b32.xlu0 %v1093, 48
      %v2570 = vpop.permute.xlu0 %2569
      %2571 = vrot.lane.b32.xlu0 %v1094, 48
      %v2572 = vpop.permute.xlu0 %2571
      %2573 = vrot.lane.b32.xlu0 %v1096, 48
      %v2574 = vpop.permute.xlu0 %2573
      %2575 = vrot.lane.b32.xlu0 %v1097, 48
      %v2576 = vpop.permute.xlu0 %2575
      %2577 = vrot.lane.b32.xlu0 %v1098, 48
      %v2578 = vpop.permute.xlu0 %2577
      %2579 = vrot.lane.b32.xlu0 %v1099, 48
      %v2580 = vpop.permute.xlu0 %2579
      %2581 = vrot.lane.b32.xlu0 %v1101, 48
      %v2582 = vpop.permute.xlu0 %2581
      %2583 = vrot.lane.b32.xlu0 %v1102, 48
      %v2584 = vpop.permute.xlu0 %2583
      %2585 = vrot.lane.b32.xlu0 %v1103, 48
      %v2586 = vpop.permute.xlu0 %2585
      %2587 = vrot.lane.b32.xlu0 %v1104, 48
      %v2588 = vpop.permute.xlu0 %2587
      %2589 = vrot.lane.b32.xlu0 %v1106, 48
      %v2590 = vpop.permute.xlu0 %2589
      %2591 = vrot.lane.b32.xlu0 %v1107, 48
      %v2592 = vpop.permute.xlu0 %2591
      %2593 = vrot.lane.b32.xlu0 %v1108, 48
      %v2594 = vpop.permute.xlu0 %2593
      %2595 = vrot.lane.b32.xlu0 %v1109, 48
      %v2596 = vpop.permute.xlu0 %2595
      %2597 = vrot.lane.b32.xlu0 %v1111, 48
      %v2598 = vpop.permute.xlu0 %2597
      %2599 = vrot.lane.b32.xlu0 %v1112, 48
      %v2600 = vpop.permute.xlu0 %2599
      %2601 = vrot.lane.b32.xlu0 %v1113, 48
      %v2602 = vpop.permute.xlu0 %2601
      %2603 = vrot.lane.b32.xlu0 %v1114, 48
      %v2604 = vpop.permute.xlu0 %2603
      %2605 = vrot.lane.b32.xlu0 %v1116, 48
      %v2606 = vpop.permute.xlu0 %2605
      %2607 = vrot.lane.b32.xlu0 %v1117, 48
      %v2608 = vpop.permute.xlu0 %2607
      %2609 = vrot.lane.b32.xlu0 %v1118, 48
      %v2610 = vpop.permute.xlu0 %2609
      %2611 = vrot.lane.b32.xlu0 %v1119, 48
      %v2612 = vpop.permute.xlu0 %2611
      %2613 = vrot.lane.b32.xlu0 %v1121, 48
      %v2614 = vpop.permute.xlu0 %2613
      %2615 = vrot.lane.b32.xlu0 %v1122, 48
      %v2616 = vpop.permute.xlu0 %2615
      %2617 = vrot.lane.b32.xlu0 %v1123, 48
      %v2618 = vpop.permute.xlu0 %2617
      %2619 = vrot.lane.b32.xlu0 %v1124, 48
      %v2620 = vpop.permute.xlu0 %2619
      %2621 = vrot.lane.b32.xlu0 %v1126, 48
      %v2622 = vpop.permute.xlu0 %2621
      %2623 = vrot.lane.b32.xlu0 %v1127, 48
      %v2624 = vpop.permute.xlu0 %2623
      %2625 = vrot.lane.b32.xlu0 %v1128, 48
      %v2626 = vpop.permute.xlu0 %2625
      %2627 = vrot.lane.b32.xlu0 %v1129, 48
      %v2628 = vpop.permute.xlu0 %2627
      %2629 = vrot.lane.b32.xlu0 %v1131, 48
      %v2630 = vpop.permute.xlu0 %2629
      %2631 = vrot.lane.b32.xlu0 %v1132, 48
      %v2632 = vpop.permute.xlu0 %2631
      %2633 = vrot.lane.b32.xlu0 %v1133, 48
      %v2634 = vpop.permute.xlu0 %2633
      %2635 = vrot.lane.b32.xlu0 %v1134, 48
      %v2636 = vpop.permute.xlu0 %2635
      %2637 = vrot.lane.b32.xlu0 %v1136, 48
      %v2638 = vpop.permute.xlu0 %2637
      %2639 = vrot.lane.b32.xlu0 %v1137, 48
      %v2640 = vpop.permute.xlu0 %2639
      %2641 = vrot.lane.b32.xlu0 %v1138, 48
      %v2642 = vpop.permute.xlu0 %2641
      %2643 = vrot.lane.b32.xlu0 %v1139, 48
      %v2644 = vpop.permute.xlu0 %2643
      %2709 = vrot.lane.b32.xlu0 %v1242, 56
      %v2710 = vpop.permute.xlu0 %2709
      %2711 = vrot.lane.b32.xlu0 %v1244, 56
      %v2712 = vpop.permute.xlu0 %2711
      %2713 = vrot.lane.b32.xlu0 %v1246, 56
      %v2714 = vpop.permute.xlu0 %2713
      %2715 = vrot.lane.b32.xlu0 %v1248, 56
      %v2716 = vpop.permute.xlu0 %2715
      %2717 = vrot.lane.b32.xlu0 %v1251, 56
      %v2718 = vpop.permute.xlu0 %2717
      %2719 = vrot.lane.b32.xlu0 %v1253, 56
      %v2720 = vpop.permute.xlu0 %2719
      %2721 = vrot.lane.b32.xlu0 %v1255, 56
      %v2722 = vpop.permute.xlu0 %2721
      %2723 = vrot.lane.b32.xlu0 %v1257, 56
      %v2724 = vpop.permute.xlu0 %2723
      %2725 = vrot.lane.b32.xlu0 %v1260, 56
      %v2726 = vpop.permute.xlu0 %2725
      %2727 = vrot.lane.b32.xlu0 %v1262, 56
      %v2728 = vpop.permute.xlu0 %2727
      %2729 = vrot.lane.b32.xlu0 %v1264, 56
      %v2730 = vpop.permute.xlu0 %2729
      %2731 = vrot.lane.b32.xlu0 %v1266, 56
      %v2732 = vpop.permute.xlu0 %2731
      %2733 = vrot.lane.b32.xlu0 %v1269, 56
      %v2734 = vpop.permute.xlu0 %2733
      %2735 = vrot.lane.b32.xlu0 %v1271, 56
      %v2736 = vpop.permute.xlu0 %2735
      %2737 = vrot.lane.b32.xlu0 %v1273, 56
      %v2738 = vpop.permute.xlu0 %2737
      %2739 = vrot.lane.b32.xlu0 %v1275, 56
      %v2740 = vpop.permute.xlu0 %2739
      %2741 = vrot.lane.b32.xlu0 %v1278, 56
      %v2742 = vpop.permute.xlu0 %2741
      %2743 = vrot.lane.b32.xlu0 %v1280, 56
      %v2744 = vpop.permute.xlu0 %2743
      %2745 = vrot.lane.b32.xlu0 %v1282, 56
      %v2746 = vpop.permute.xlu0 %2745
      %2747 = vrot.lane.b32.xlu0 %v1284, 56
      %v2748 = vpop.permute.xlu0 %2747
      %2749 = vrot.lane.b32.xlu0 %v1287, 56
      %v2750 = vpop.permute.xlu0 %2749
      %2751 = vrot.lane.b32.xlu0 %v1289, 56
      %v2752 = vpop.permute.xlu0 %2751
      %2753 = vrot.lane.b32.xlu0 %v1291, 56
      %v2754 = vpop.permute.xlu0 %2753
      %2755 = vrot.lane.b32.xlu0 %v1293, 56
      %v2756 = vpop.permute.xlu0 %2755
      %2757 = vrot.lane.b32.xlu0 %v1296, 56
      %v2758 = vpop.permute.xlu0 %2757
      %2759 = vrot.lane.b32.xlu0 %v1298, 56
      %v2760 = vpop.permute.xlu0 %2759
      %2761 = vrot.lane.b32.xlu0 %v1300, 56
      %v2762 = vpop.permute.xlu0 %2761
      %2763 = vrot.lane.b32.xlu0 %v1302, 56
      %v2764 = vpop.permute.xlu0 %2763
      %2765 = vrot.lane.b32.xlu0 %v1305, 56
      %v2766 = vpop.permute.xlu0 %2765
      %2767 = vrot.lane.b32.xlu0 %v1307, 56
      %v2768 = vpop.permute.xlu0 %2767
      %2769 = vrot.lane.b32.xlu0 %v1309, 56
      %v2770 = vpop.permute.xlu0 %2769
      %2771 = vrot.lane.b32.xlu0 %v1311, 56
      %v2772 = vpop.permute.xlu0 %2771
      %2773 = vrot.lane.b32.xlu0 %v1314, 56
      %v2774 = vpop.permute.xlu0 %2773
      %2775 = vrot.lane.b32.xlu0 %v1316, 56
      %v2776 = vpop.permute.xlu0 %2775
      %2777 = vrot.lane.b32.xlu0 %v1318, 56
      %v2778 = vpop.permute.xlu0 %2777
      %2779 = vrot.lane.b32.xlu0 %v1320, 56
      %v2780 = vpop.permute.xlu0 %2779
      %2781 = vrot.lane.b32.xlu0 %v1323, 56
      %v2782 = vpop.permute.xlu0 %2781
      %2783 = vrot.lane.b32.xlu0 %v1325, 56
      %v2784 = vpop.permute.xlu0 %2783
      %2785 = vrot.lane.b32.xlu0 %v1327, 56
      %v2786 = vpop.permute.xlu0 %2785
      %2787 = vrot.lane.b32.xlu0 %v1329, 56
      %v2788 = vpop.permute.xlu0 %2787
      %2789 = vrot.lane.b32.xlu0 %v1332, 56
      %v2790 = vpop.permute.xlu0 %2789
      %2791 = vrot.lane.b32.xlu0 %v1334, 56
      %v2792 = vpop.permute.xlu0 %2791
      %2793 = vrot.lane.b32.xlu0 %v1336, 56
      %v2794 = vpop.permute.xlu0 %2793
      %2795 = vrot.lane.b32.xlu0 %v1338, 56
      %v2796 = vpop.permute.xlu0 %2795
      %2797 = vrot.lane.b32.xlu0 %v1341, 56
      %v2798 = vpop.permute.xlu0 %2797
      %2799 = vrot.lane.b32.xlu0 %v1343, 56
      %v2800 = vpop.permute.xlu0 %2799
      %2801 = vrot.lane.b32.xlu0 %v1345, 56
      %v2802 = vpop.permute.xlu0 %2801
      %2803 = vrot.lane.b32.xlu0 %v1347, 56
      %v2804 = vpop.permute.xlu0 %2803
      %2805 = vrot.lane.b32.xlu0 %v1350, 56
      %v2806 = vpop.permute.xlu0 %2805
      %2807 = vrot.lane.b32.xlu0 %v1352, 56
      %v2808 = vpop.permute.xlu0 %2807
      %2809 = vrot.lane.b32.xlu0 %v1354, 56
      %v2810 = vpop.permute.xlu0 %2809
      %2811 = vrot.lane.b32.xlu0 %v1356, 56
      %v2812 = vpop.permute.xlu0 %2811
      %2813 = vrot.lane.b32.xlu0 %v1359, 56
      %v2814 = vpop.permute.xlu0 %2813
      %2815 = vrot.lane.b32.xlu0 %v1361, 56
      %v2816 = vpop.permute.xlu0 %2815
      %2817 = vrot.lane.b32.xlu0 %v1363, 56
      %v2818 = vpop.permute.xlu0 %2817
      %2819 = vrot.lane.b32.xlu0 %v1365, 56
      %v2820 = vpop.permute.xlu0 %2819
      %2821 = vrot.lane.b32.xlu0 %v1518, 56
      %v2822 = vpop.permute.xlu0 %2821
      %2823 = vrot.lane.b32.xlu0 %v1520, 56
      %v2824 = vpop.permute.xlu0 %2823
      %2825 = vrot.lane.b32.xlu0 %v1522, 56
      %v2826 = vpop.permute.xlu0 %2825
      %2827 = vrot.lane.b32.xlu0 %v1524, 56
      %v2828 = vpop.permute.xlu0 %2827
      %2829 = vrot.lane.b32.xlu0 %v1541, 56
      %v2830 = vpop.permute.xlu0 %2829
      %2831 = vrot.lane.b32.xlu0 %v1543, 56
      %v2832 = vpop.permute.xlu0 %2831
      %2833 = vrot.lane.b32.xlu0 %v1545, 56
      %v2834 = vpop.permute.xlu0 %2833
      %2835 = vrot.lane.b32.xlu0 %v1547, 56
      %v2836 = vpop.permute.xlu0 %2835
      %2901 = vrot.lane.b32.xlu0 %v1387, 64
      %v2902 = vpop.permute.xlu0 %2901
      %2903 = vrot.lane.b32.xlu0 %v1389, 64
      %v2904 = vpop.permute.xlu0 %2903
      %2905 = vrot.lane.b32.xlu0 %v1391, 64
      %v2906 = vpop.permute.xlu0 %2905
      %2907 = vrot.lane.b32.xlu0 %v1393, 64
      %v2908 = vpop.permute.xlu0 %2907
      %2909 = vrot.lane.b32.xlu0 %v1396, 64
      %v2910 = vpop.permute.xlu0 %2909
      %2911 = vrot.lane.b32.xlu0 %v1398, 64
      %v2912 = vpop.permute.xlu0 %2911
      %2913 = vrot.lane.b32.xlu0 %v1400, 64
      %v2914 = vpop.permute.xlu0 %2913
      %2915 = vrot.lane.b32.xlu0 %v1402, 64
      %v2916 = vpop.permute.xlu0 %2915
      %2917 = vrot.lane.b32.xlu0 %v1405, 64
      %v2918 = vpop.permute.xlu0 %2917
      %2919 = vrot.lane.b32.xlu0 %v1407, 64
      %v2920 = vpop.permute.xlu0 %2919
      %2921 = vrot.lane.b32.xlu0 %v1409, 64
      %v2922 = vpop.permute.xlu0 %2921
      %2923 = vrot.lane.b32.xlu0 %v1411, 64
      %v2924 = vpop.permute.xlu0 %2923
      %2925 = vrot.lane.b32.xlu0 %v1414, 64
      %v2926 = vpop.permute.xlu0 %2925
      %2927 = vrot.lane.b32.xlu0 %v1416, 64
      %v2928 = vpop.permute.xlu0 %2927
      %2929 = vrot.lane.b32.xlu0 %v1418, 64
      %v2930 = vpop.permute.xlu0 %2929
      %2931 = vrot.lane.b32.xlu0 %v1420, 64
      %v2932 = vpop.permute.xlu0 %2931
      %2933 = vrot.lane.b32.xlu0 %v1423, 64
      %v2934 = vpop.permute.xlu0 %2933
      %2935 = vrot.lane.b32.xlu0 %v1425, 64
      %v2936 = vpop.permute.xlu0 %2935
      %2937 = vrot.lane.b32.xlu0 %v1427, 64
      %v2938 = vpop.permute.xlu0 %2937
      %2939 = vrot.lane.b32.xlu0 %v1429, 64
      %v2940 = vpop.permute.xlu0 %2939
      %2941 = vrot.lane.b32.xlu0 %v1432, 64
      %v2942 = vpop.permute.xlu0 %2941
      %2943 = vrot.lane.b32.xlu0 %v1434, 64
      %v2944 = vpop.permute.xlu0 %2943
      %2945 = vrot.lane.b32.xlu0 %v1436, 64
      %v2946 = vpop.permute.xlu0 %2945
      %2947 = vrot.lane.b32.xlu0 %v1438, 64
      %v2948 = vpop.permute.xlu0 %2947
      %2949 = vrot.lane.b32.xlu0 %v1441, 64
      %v2950 = vpop.permute.xlu0 %2949
      %2951 = vrot.lane.b32.xlu0 %v1443, 64
      %v2952 = vpop.permute.xlu0 %2951
      %2953 = vrot.lane.b32.xlu0 %v1445, 64
      %v2954 = vpop.permute.xlu0 %2953
      %2955 = vrot.lane.b32.xlu0 %v1447, 64
      %v2956 = vpop.permute.xlu0 %2955
      %2957 = vrot.lane.b32.xlu0 %v1450, 64
      %v2958 = vpop.permute.xlu0 %2957
      %2959 = vrot.lane.b32.xlu0 %v1452, 64
      %v2960 = vpop.permute.xlu0 %2959
      %2961 = vrot.lane.b32.xlu0 %v1454, 64
      %v2962 = vpop.permute.xlu0 %2961
      %2963 = vrot.lane.b32.xlu0 %v1456, 64
      %v2964 = vpop.permute.xlu0 %2963
      %2965 = vrot.lane.b32.xlu0 %v1459, 64
      %v2966 = vpop.permute.xlu0 %2965
      %2967 = vrot.lane.b32.xlu0 %v1461, 64
      %v2968 = vpop.permute.xlu0 %2967
      %2969 = vrot.lane.b32.xlu0 %v1463, 64
      %v2970 = vpop.permute.xlu0 %2969
      %2971 = vrot.lane.b32.xlu0 %v1465, 64
      %v2972 = vpop.permute.xlu0 %2971
      %2973 = vrot.lane.b32.xlu0 %v1468, 64
      %v2974 = vpop.permute.xlu0 %2973
      %2975 = vrot.lane.b32.xlu0 %v1470, 64
      %v2976 = vpop.permute.xlu0 %2975
      %2977 = vrot.lane.b32.xlu0 %v1472, 64
      %v2978 = vpop.permute.xlu0 %2977
      %2979 = vrot.lane.b32.xlu0 %v1474, 64
      %v2980 = vpop.permute.xlu0 %2979
      %2981 = vrot.lane.b32.xlu0 %v1477, 64
      %v2982 = vpop.permute.xlu0 %2981
      %2983 = vrot.lane.b32.xlu0 %v1479, 64
      %v2984 = vpop.permute.xlu0 %2983
      %2985 = vrot.lane.b32.xlu0 %v1481, 64
      %v2986 = vpop.permute.xlu0 %2985
      %2987 = vrot.lane.b32.xlu0 %v1483, 64
      %v2988 = vpop.permute.xlu0 %2987
      %2989 = vrot.lane.b32.xlu0 %v1486, 64
      %v2990 = vpop.permute.xlu0 %2989
      %2991 = vrot.lane.b32.xlu0 %v1488, 64
      %v2992 = vpop.permute.xlu0 %2991
      %2993 = vrot.lane.b32.xlu0 %v1490, 64
      %v2994 = vpop.permute.xlu0 %2993
      %2995 = vrot.lane.b32.xlu0 %v1492, 64
      %v2996 = vpop.permute.xlu0 %2995
      %2997 = vrot.lane.b32.xlu0 %v1495, 64
      %v2998 = vpop.permute.xlu0 %2997
      %2999 = vrot.lane.b32.xlu0 %v1497, 64
      %v3000 = vpop.permute.xlu0 %2999
      %3001 = vrot.lane.b32.xlu0 %v1499, 64
      %v3002 = vpop.permute.xlu0 %3001
      %3003 = vrot.lane.b32.xlu0 %v1501, 64
      %v3004 = vpop.permute.xlu0 %3003
      %3005 = vrot.lane.b32.xlu0 %v1504, 64
      %v3006 = vpop.permute.xlu0 %3005
      %3007 = vrot.lane.b32.xlu0 %v1506, 64
      %v3008 = vpop.permute.xlu0 %3007
      %3009 = vrot.lane.b32.xlu0 %v1508, 64
      %v3010 = vpop.permute.xlu0 %3009
      %3011 = vrot.lane.b32.xlu0 %v1510, 64
      %v3012 = vpop.permute.xlu0 %3011
      %3013 = vrot.lane.b32.xlu0 %v1527, 64
      %v3014 = vpop.permute.xlu0 %3013
      %3015 = vrot.lane.b32.xlu0 %v1529, 64
      %v3016 = vpop.permute.xlu0 %3015
      %3017 = vrot.lane.b32.xlu0 %v1531, 64
      %v3018 = vpop.permute.xlu0 %3017
      %3019 = vrot.lane.b32.xlu0 %v1533, 64
      %v3020 = vpop.permute.xlu0 %3019
      %3021 = vrot.lane.b32.xlu0 %v1550, 64
      %v3022 = vpop.permute.xlu0 %3021
      %3023 = vrot.lane.b32.xlu0 %v1552, 64
      %v3024 = vpop.permute.xlu0 %3023
      %3025 = vrot.lane.b32.xlu0 %v1554, 64
      %v3026 = vpop.permute.xlu0 %3025
      %3027 = vrot.lane.b32.xlu0 %v1556, 64
      %v3028 = vpop.permute.xlu0 %3027
      %vm3093 = vcmask 64512
      %v3094 = vsel %vm3093, %v1051, %v1558
      %v3095 = vsel %vm3093, %v1052, %v1560
      %v3096 = vsel %vm3093, %v1053, %v1562
      %v3097 = vsel %vm3093, %v1054, %v1564
      %v3098 = vsel %vm3093, %v1056, %v1566
      %v3099 = vsel %vm3093, %v1057, %v1568
      %v3100 = vsel %vm3093, %v1058, %v1570
      %v3101 = vsel %vm3093, %v1059, %v1572
      %v3102 = vsel %vm3093, %v1061, %v1574
      %v3103 = vsel %vm3093, %v1062, %v1576
      %v3104 = vsel %vm3093, %v1063, %v1578
      %v3105 = vsel %vm3093, %v1064, %v1580
      %v3106 = vsel %vm3093, %v1066, %v1582
      %v3107 = vsel %vm3093, %v1067, %v1584
      %v3108 = vsel %vm3093, %v1068, %v1586
      %v3109 = vsel %vm3093, %v1069, %v1588
      %v3110 = vsel %vm3093, %v1071, %v1590
      %v3111 = vsel %vm3093, %v1072, %v1592
      %v3112 = vsel %vm3093, %v1073, %v1594
      %v3113 = vsel %vm3093, %v1074, %v1596
      %v3114 = vsel %vm3093, %v1076, %v1598
      %v3115 = vsel %vm3093, %v1077, %v1600
      %v3116 = vsel %vm3093, %v1078, %v1602
      %v3117 = vsel %vm3093, %v1079, %v1604
      %v3118 = vsel %vm3093, %v1081, %v1606
      %v3119 = vsel %vm3093, %v1082, %v1608
      %v3120 = vsel %vm3093, %v1083, %v1610
      %v3121 = vsel %vm3093, %v1084, %v1612
      %v3122 = vsel %vm3093, %v1086, %v1614
      %v3123 = vsel %vm3093, %v1087, %v1616
      %v3124 = vsel %vm3093, %v1088, %v1618
      %v3125 = vsel %vm3093, %v1089, %v1620
      %v3126 = vsel %vm3093, %v1091, %v1622
      %v3127 = vsel %vm3093, %v1092, %v1624
      %v3128 = vsel %vm3093, %v1093, %v1626
      %v3129 = vsel %vm3093, %v1094, %v1628
      %v3130 = vsel %vm3093, %v1096, %v1630
      %v3131 = vsel %vm3093, %v1097, %v1632
      %v3132 = vsel %vm3093, %v1098, %v1634
      %v3133 = vsel %vm3093, %v1099, %v1636
      %v3134 = vsel %vm3093, %v1101, %v1638
      %v3135 = vsel %vm3093, %v1102, %v1640
      %v3136 = vsel %vm3093, %v1103, %v1642
      %v3137 = vsel %vm3093, %v1104, %v1644
      %v3138 = vsel %vm3093, %v1106, %v1646
      %v3139 = vsel %vm3093, %v1107, %v1648
      %v3140 = vsel %vm3093, %v1108, %v1650
      %v3141 = vsel %vm3093, %v1109, %v1652
      %v3142 = vsel %vm3093, %v1111, %v1654
      %v3143 = vsel %vm3093, %v1112, %v1656
      %v3144 = vsel %vm3093, %v1113, %v1658
      %v3145 = vsel %vm3093, %v1114, %v1660
      %v3146 = vsel %vm3093, %v1116, %v1662
      %v3147 = vsel %vm3093, %v1117, %v1664
      %v3148 = vsel %vm3093, %v1118, %v1666
      %v3149 = vsel %vm3093, %v1119, %v1668
      %v3150 = vsel %vm3093, %v1121, %v1670
      %v3151 = vsel %vm3093, %v1122, %v1672
      %v3152 = vsel %vm3093, %v1123, %v1674
      %v3153 = vsel %vm3093, %v1124, %v1676
      %v3154 = vsel %vm3093, %v1126, %v1678
      %v3155 = vsel %vm3093, %v1127, %v1680
      %v3156 = vsel %vm3093, %v1128, %v1682
      %v3157 = vsel %vm3093, %v1129, %v1684
      %vm3158 = vcmask 130048
      %v3159 = vsel %vm3158, %v3094, %v1750
      %v3160 = vsel %vm3158, %v3095, %v1752
      %v3161 = vsel %vm3158, %v3096, %v1754
      %v3162 = vsel %vm3158, %v3097, %v1756
      %v3163 = vsel %vm3158, %v3098, %v1758
      %v3164 = vsel %vm3158, %v3099, %v1760
      %v3165 = vsel %vm3158, %v3100, %v1762
      %v3166 = vsel %vm3158, %v3101, %v1764
      %v3167 = vsel %vm3158, %v3102, %v1766
      %v3168 = vsel %vm3158, %v3103, %v1768
      %v3169 = vsel %vm3158, %v3104, %v1770
      %v3170 = vsel %vm3158, %v3105, %v1772
      %v3171 = vsel %vm3158, %v3106, %v1774
      %v3172 = vsel %vm3158, %v3107, %v1776
      %v3173 = vsel %vm3158, %v3108, %v1778
      %v3174 = vsel %vm3158, %v3109, %v1780
      %v3175 = vsel %vm3158, %v3110, %v1782
      %v3176 = vsel %vm3158, %v3111, %v1784
      %v3177 = vsel %vm3158, %v3112, %v1786
      %v3178 = vsel %vm3158, %v3113, %v1788
      %v3179 = vsel %vm3158, %v3114, %v1790
      %v3180 = vsel %vm3158, %v3115, %v1792
      %v3181 = vsel %vm3158, %v3116, %v1794
      %v3182 = vsel %vm3158, %v3117, %v1796
      %v3183 = vsel %vm3158, %v3118, %v1798
      %v3184 = vsel %vm3158, %v3119, %v1800
      %v3185 = vsel %vm3158, %v3120, %v1802
      %v3186 = vsel %vm3158, %v3121, %v1804
      %v3187 = vsel %vm3158, %v3122, %v1806
      %v3188 = vsel %vm3158, %v3123, %v1808
      %v3189 = vsel %vm3158, %v3124, %v1810
      %v3190 = vsel %vm3158, %v3125, %v1812
      %v3191 = vsel %vm3158, %v3126, %v1814
      %v3192 = vsel %vm3158, %v3127, %v1816
      %v3193 = vsel %vm3158, %v3128, %v1818
      %v3194 = vsel %vm3158, %v3129, %v1820
      %v3195 = vsel %vm3158, %v3130, %v1822
      %v3196 = vsel %vm3158, %v3131, %v1824
      %v3197 = vsel %vm3158, %v3132, %v1826
      %v3198 = vsel %vm3158, %v3133, %v1828
      %v3199 = vsel %vm3158, %v3134, %v1830
      %v3200 = vsel %vm3158, %v3135, %v1832
      %v3201 = vsel %vm3158, %v3136, %v1834
      %v3202 = vsel %vm3158, %v3137, %v1836
      %v3203 = vsel %vm3158, %v3138, %v1838
      %v3204 = vsel %vm3158, %v3139, %v1840
      %v3205 = vsel %vm3158, %v3140, %v1842
      %v3206 = vsel %vm3158, %v3141, %v1844
      %v3207 = vsel %vm3158, %v3142, %v1846
      %v3208 = vsel %vm3158, %v3143, %v1848
      %v3209 = vsel %vm3158, %v3144, %v1850
      %v3210 = vsel %vm3158, %v3145, %v1852
      %v3211 = vsel %vm3158, %v3146, %v1854
      %v3212 = vsel %vm3158, %v3147, %v1856
      %v3213 = vsel %vm3158, %v3148, %v1858
      %v3214 = vsel %vm3158, %v3149, %v1860
      %v3215 = vsel %vm3158, %v3150, %v1862
      %v3216 = vsel %vm3158, %v3151, %v1864
      %v3217 = vsel %vm3158, %v3152, %v1866
      %v3218 = vsel %vm3158, %v3153, %v1868
      %v3219 = vsel %vm3158, %v3154, %v1870
      %v3220 = vsel %vm3158, %v3155, %v1872
      %v3221 = vsel %vm3158, %v3156, %v1874
      %v3222 = vsel %vm3158, %v3157, %v1876
      %vm3223 = vcmask 195584
      %v3224 = vsel %vm3223, %v3159, %v1942
      %v3225 = vsel %vm3223, %v3160, %v1944
      %v3226 = vsel %vm3223, %v3161, %v1946
      %v3227 = vsel %vm3223, %v3162, %v1948
      %v3228 = vsel %vm3223, %v3163, %v1950
      %v3229 = vsel %vm3223, %v3164, %v1952
      %v3230 = vsel %vm3223, %v3165, %v1954
      %v3231 = vsel %vm3223, %v3166, %v1956
      %v3232 = vsel %vm3223, %v3167, %v1958
      %v3233 = vsel %vm3223, %v3168, %v1960
      %v3234 = vsel %vm3223, %v3169, %v1962
      %v3235 = vsel %vm3223, %v3170, %v1964
      %v3236 = vsel %vm3223, %v3171, %v1966
      %v3237 = vsel %vm3223, %v3172, %v1968
      %v3238 = vsel %vm3223, %v3173, %v1970
      %v3239 = vsel %vm3223, %v3174, %v1972
      %v3240 = vsel %vm3223, %v3175, %v1974
      %v3241 = vsel %vm3223, %v3176, %v1976
      %v3242 = vsel %vm3223, %v3177, %v1978
      %v3243 = vsel %vm3223, %v3178, %v1980
      %v3244 = vsel %vm3223, %v3179, %v1982
      %v3245 = vsel %vm3223, %v3180, %v1984
      %v3246 = vsel %vm3223, %v3181, %v1986
      %v3247 = vsel %vm3223, %v3182, %v1988
      %v3248 = vsel %vm3223, %v3183, %v1990
      %v3249 = vsel %vm3223, %v3184, %v1992
      %v3250 = vsel %vm3223, %v3185, %v1994
      %v3251 = vsel %vm3223, %v3186, %v1996
      %v3252 = vsel %vm3223, %v3187, %v1998
      %v3253 = vsel %vm3223, %v3188, %v2000
      %v3254 = vsel %vm3223, %v3189, %v2002
      %v3255 = vsel %vm3223, %v3190, %v2004
      %v3256 = vsel %vm3223, %v3191, %v2006
      %v3257 = vsel %vm3223, %v3192, %v2008
      %v3258 = vsel %vm3223, %v3193, %v2010
      %v3259 = vsel %vm3223, %v3194, %v2012
      %v3260 = vsel %vm3223, %v3195, %v2014
      %v3261 = vsel %vm3223, %v3196, %v2016
      %v3262 = vsel %vm3223, %v3197, %v2018
      %v3263 = vsel %vm3223, %v3198, %v2020
      %v3264 = vsel %vm3223, %v3199, %v2022
      %v3265 = vsel %vm3223, %v3200, %v2024
      %v3266 = vsel %vm3223, %v3201, %v2026
      %v3267 = vsel %vm3223, %v3202, %v2028
      %v3268 = vsel %vm3223, %v3203, %v2030
      %v3269 = vsel %vm3223, %v3204, %v2032
      %v3270 = vsel %vm3223, %v3205, %v2034
      %v3271 = vsel %vm3223, %v3206, %v2036
      %v3272 = vsel %vm3223, %v3207, %v2038
      %v3273 = vsel %vm3223, %v3208, %v2040
      %v3274 = vsel %vm3223, %v3209, %v2042
      %v3275 = vsel %vm3223, %v3210, %v2044
      %v3276 = vsel %vm3223, %v3211, %v2046
      %v3277 = vsel %vm3223, %v3212, %v2048
      %v3278 = vsel %vm3223, %v3213, %v2050
      %v3279 = vsel %vm3223, %v3214, %v2052
      %v3280 = vsel %vm3223, %v3215, %v2054
      %v3281 = vsel %vm3223, %v3216, %v2056
      %v3282 = vsel %vm3223, %v3217, %v2058
      %v3283 = vsel %vm3223, %v3218, %v2060
      %v3284 = vsel %vm3223, %v3219, %v2062
      %v3285 = vsel %vm3223, %v3220, %v2064
      %v3286 = vsel %vm3223, %v3221, %v2066
      %v3287 = vsel %vm3223, %v3222, %v2068
      %vm3288 = vcmask 261120
      %v3289 = vsel %vm3288, %v3224, %v2134
      %v3290 = vsel %vm3288, %v3225, %v2136
      %v3291 = vsel %vm3288, %v3226, %v2138
      %v3292 = vsel %vm3288, %v3227, %v2140
      %v3293 = vsel %vm3288, %v3228, %v2142
      %v3294 = vsel %vm3288, %v3229, %v2144
      %v3295 = vsel %vm3288, %v3230, %v2146
      %v3296 = vsel %vm3288, %v3231, %v2148
      %v3297 = vsel %vm3288, %v3232, %v2150
      %v3298 = vsel %vm3288, %v3233, %v2152
      %v3299 = vsel %vm3288, %v3234, %v2154
      %v3300 = vsel %vm3288, %v3235, %v2156
      %v3301 = vsel %vm3288, %v3236, %v2158
      %v3302 = vsel %vm3288, %v3237, %v2160
      %v3303 = vsel %vm3288, %v3238, %v2162
      %v3304 = vsel %vm3288, %v3239, %v2164
      %v3305 = vsel %vm3288, %v3240, %v2166
      %v3306 = vsel %vm3288, %v3241, %v2168
      %v3307 = vsel %vm3288, %v3242, %v2170
      %v3308 = vsel %vm3288, %v3243, %v2172
      %v3309 = vsel %vm3288, %v3244, %v2174
      %v3310 = vsel %vm3288, %v3245, %v2176
      %v3311 = vsel %vm3288, %v3246, %v2178
      %v3312 = vsel %vm3288, %v3247, %v2180
      %v3313 = vsel %vm3288, %v3248, %v2182
      %v3314 = vsel %vm3288, %v3249, %v2184
      %v3315 = vsel %vm3288, %v3250, %v2186
      %v3316 = vsel %vm3288, %v3251, %v2188
      %v3317 = vsel %vm3288, %v3252, %v2190
      %v3318 = vsel %vm3288, %v3253, %v2192
      %v3319 = vsel %vm3288, %v3254, %v2194
      %v3320 = vsel %vm3288, %v3255, %v2196
      %v3321 = vsel %vm3288, %v3256, %v2198
      %v3322 = vsel %vm3288, %v3257, %v2200
      %v3323 = vsel %vm3288, %v3258, %v2202
      %v3324 = vsel %vm3288, %v3259, %v2204
      %v3325 = vsel %vm3288, %v3260, %v2206
      %v3326 = vsel %vm3288, %v3261, %v2208
      %v3327 = vsel %vm3288, %v3262, %v2210
      %v3328 = vsel %vm3288, %v3263, %v2212
      %v3329 = vsel %vm3288, %v3264, %v2214
      %v3330 = vsel %vm3288, %v3265, %v2216
      %v3331 = vsel %vm3288, %v3266, %v2218
      %v3332 = vsel %vm3288, %v3267, %v2220
      %v3333 = vsel %vm3288, %v3268, %v2222
      %v3334 = vsel %vm3288, %v3269, %v2224
      %v3335 = vsel %vm3288, %v3270, %v2226
      %v3336 = vsel %vm3288, %v3271, %v2228
      %v3337 = vsel %vm3288, %v3272, %v2230
      %v3338 = vsel %vm3288, %v3273, %v2232
      %v3339 = vsel %vm3288, %v3274, %v2234
      %v3340 = vsel %vm3288, %v3275, %v2236
      %v3341 = vsel %vm3288, %v3276, %v2238
      %v3342 = vsel %vm3288, %v3277, %v2240
      %v3343 = vsel %vm3288, %v3278, %v2242
      %v3344 = vsel %vm3288, %v3279, %v2244
      %v3345 = vsel %vm3288, %v3280, %v2246
      %v3346 = vsel %vm3288, %v3281, %v2248
      %v3347 = vsel %vm3288, %v3282, %v2250
      %v3348 = vsel %vm3288, %v3283, %v2252
      %v3349 = vsel %vm3288, %v3284, %v2254
      %v3350 = vsel %vm3288, %v3285, %v2256
      %v3351 = vsel %vm3288, %v3286, %v2258
      %v3352 = vsel %vm3288, %v3287, %v2260
      %vm3353 = vcmask 326656
      %v3354 = vsel %vm3353, %v3289, %v2326
      %v3355 = vsel %vm3353, %v3290, %v2328
      %v3356 = vsel %vm3353, %v3291, %v2330
      %v3357 = vsel %vm3353, %v3292, %v2332
      %v3358 = vsel %vm3353, %v3293, %v2334
      %v3359 = vsel %vm3353, %v3294, %v2336
      %v3360 = vsel %vm3353, %v3295, %v2338
      %v3361 = vsel %vm3353, %v3296, %v2340
      %v3362 = vsel %vm3353, %v3297, %v2342
      %v3363 = vsel %vm3353, %v3298, %v2344
      %v3364 = vsel %vm3353, %v3299, %v2346
      %v3365 = vsel %vm3353, %v3300, %v2348
      %v3366 = vsel %vm3353, %v3301, %v2350
      %v3367 = vsel %vm3353, %v3302, %v2352
      %v3368 = vsel %vm3353, %v3303, %v2354
      %v3369 = vsel %vm3353, %v3304, %v2356
      %v3370 = vsel %vm3353, %v3305, %v2358
      %v3371 = vsel %vm3353, %v3306, %v2360
      %v3372 = vsel %vm3353, %v3307, %v2362
      %v3373 = vsel %vm3353, %v3308, %v2364
      %v3374 = vsel %vm3353, %v3309, %v2366
      %v3375 = vsel %vm3353, %v3310, %v2368
      %v3376 = vsel %vm3353, %v3311, %v2370
      %v3377 = vsel %vm3353, %v3312, %v2372
      %v3378 = vsel %vm3353, %v3313, %v2374
      %v3379 = vsel %vm3353, %v3314, %v2376
      %v3380 = vsel %vm3353, %v3315, %v2378
      %v3381 = vsel %vm3353, %v3316, %v2380
      %v3382 = vsel %vm3353, %v3317, %v2382
      %v3383 = vsel %vm3353, %v3318, %v2384
      %v3384 = vsel %vm3353, %v3319, %v2386
      %v3385 = vsel %vm3353, %v3320, %v2388
      %v3386 = vsel %vm3353, %v3321, %v2390
      %v3387 = vsel %vm3353, %v3322, %v2392
      %v3388 = vsel %vm3353, %v3323, %v2394
      %v3389 = vsel %vm3353, %v3324, %v2396
      %v3390 = vsel %vm3353, %v3325, %v2398
      %v3391 = vsel %vm3353, %v3326, %v2400
      %v3392 = vsel %vm3353, %v3327, %v2402
      %v3393 = vsel %vm3353, %v3328, %v2404
      %v3394 = vsel %vm3353, %v3329, %v2406
      %v3395 = vsel %vm3353, %v3330, %v2408
      %v3396 = vsel %vm3353, %v3331, %v2410
      %v3397 = vsel %vm3353, %v3332, %v2412
      %v3398 = vsel %vm3353, %v3333, %v2414
      %v3399 = vsel %vm3353, %v3334, %v2416
      %v3400 = vsel %vm3353, %v3335, %v2418
      %v3401 = vsel %vm3353, %v3336, %v2420
      %v3402 = vsel %vm3353, %v3337, %v2422
      %v3403 = vsel %vm3353, %v3338, %v2424
      %v3404 = vsel %vm3353, %v3339, %v2426
      %v3405 = vsel %vm3353, %v3340, %v2428
      %v3406 = vsel %vm3353, %v3341, %v2430
      %v3407 = vsel %vm3353, %v3342, %v2432
      %v3408 = vsel %vm3353, %v3343, %v2434
      %v3409 = vsel %vm3353, %v3344, %v2436
      %v3410 = vsel %vm3353, %v3345, %v2438
      %v3411 = vsel %vm3353, %v3346, %v2440
      %v3412 = vsel %vm3353, %v3347, %v2442
      %v3413 = vsel %vm3353, %v3348, %v2444
      %v3414 = vsel %vm3353, %v3349, %v2446
      %v3415 = vsel %vm3353, %v3350, %v2448
      %v3416 = vsel %vm3353, %v3351, %v2450
      %v3417 = vsel %vm3353, %v3352, %v2452
      %vm3418 = vcmask 392192
      %v3419 = vsel %vm3418, %v3354, %v2518
      %v3420 = vsel %vm3418, %v3355, %v2520
      %v3421 = vsel %vm3418, %v3356, %v2522
      %v3422 = vsel %vm3418, %v3357, %v2524
      %v3423 = vsel %vm3418, %v3358, %v2526
      %v3424 = vsel %vm3418, %v3359, %v2528
      %v3425 = vsel %vm3418, %v3360, %v2530
      %v3426 = vsel %vm3418, %v3361, %v2532
      %v3427 = vsel %vm3418, %v3362, %v2534
      %v3428 = vsel %vm3418, %v3363, %v2536
      %v3429 = vsel %vm3418, %v3364, %v2538
      %v3430 = vsel %vm3418, %v3365, %v2540
      %v3431 = vsel %vm3418, %v3366, %v2542
      %v3432 = vsel %vm3418, %v3367, %v2544
      %v3433 = vsel %vm3418, %v3368, %v2546
      %v3434 = vsel %vm3418, %v3369, %v2548
      %v3435 = vsel %vm3418, %v3370, %v2550
      %v3436 = vsel %vm3418, %v3371, %v2552
      %v3437 = vsel %vm3418, %v3372, %v2554
      %v3438 = vsel %vm3418, %v3373, %v2556
      %v3439 = vsel %vm3418, %v3374, %v2558
      %v3440 = vsel %vm3418, %v3375, %v2560
      %v3441 = vsel %vm3418, %v3376, %v2562
      %v3442 = vsel %vm3418, %v3377, %v2564
      %v3443 = vsel %vm3418, %v3378, %v2566
      %v3444 = vsel %vm3418, %v3379, %v2568
      %v3445 = vsel %vm3418, %v3380, %v2570
      %v3446 = vsel %vm3418, %v3381, %v2572
      %v3447 = vsel %vm3418, %v3382, %v2574
      %v3448 = vsel %vm3418, %v3383, %v2576
      %v3449 = vsel %vm3418, %v3384, %v2578
      %v3450 = vsel %vm3418, %v3385, %v2580
      %v3451 = vsel %vm3418, %v3386, %v2582
      %v3452 = vsel %vm3418, %v3387, %v2584
      %v3453 = vsel %vm3418, %v3388, %v2586
      %v3454 = vsel %vm3418, %v3389, %v2588
      %v3455 = vsel %vm3418, %v3390, %v2590
      %v3456 = vsel %vm3418, %v3391, %v2592
      %v3457 = vsel %vm3418, %v3392, %v2594
      %v3458 = vsel %vm3418, %v3393, %v2596
      %v3459 = vsel %vm3418, %v3394, %v2598
      %v3460 = vsel %vm3418, %v3395, %v2600
      %v3461 = vsel %vm3418, %v3396, %v2602
      %v3462 = vsel %vm3418, %v3397, %v2604
      %v3463 = vsel %vm3418, %v3398, %v2606
      %v3464 = vsel %vm3418, %v3399, %v2608
      %v3465 = vsel %vm3418, %v3400, %v2610
      %v3466 = vsel %vm3418, %v3401, %v2612
      %v3467 = vsel %vm3418, %v3402, %v2614
      %v3468 = vsel %vm3418, %v3403, %v2616
      %v3469 = vsel %vm3418, %v3404, %v2618
      %v3470 = vsel %vm3418, %v3405, %v2620
      %v3471 = vsel %vm3418, %v3406, %v2622
      %v3472 = vsel %vm3418, %v3407, %v2624
      %v3473 = vsel %vm3418, %v3408, %v2626
      %v3474 = vsel %vm3418, %v3409, %v2628
      %v3475 = vsel %vm3418, %v3410, %v2630
      %v3476 = vsel %vm3418, %v3411, %v2632
      %v3477 = vsel %vm3418, %v3412, %v2634
      %v3478 = vsel %vm3418, %v3413, %v2636
      %v3479 = vsel %vm3418, %v3414, %v2638
      %v3480 = vsel %vm3418, %v3415, %v2640
      %v3481 = vsel %vm3418, %v3416, %v2642
      %v3482 = vsel %vm3418, %v3417, %v2644
      %vm3483 = vcmask 457728
      %v3484 = vsel %vm3483, %v3419, %v2710
      %v3485 = vsel %vm3483, %v3420, %v2712
      %v3486 = vsel %vm3483, %v3421, %v2714
      %v3487 = vsel %vm3483, %v3422, %v2716
      %v3488 = vsel %vm3483, %v3423, %v2718
      %v3489 = vsel %vm3483, %v3424, %v2720
      %v3490 = vsel %vm3483, %v3425, %v2722
      %v3491 = vsel %vm3483, %v3426, %v2724
      %v3492 = vsel %vm3483, %v3427, %v2726
      %v3493 = vsel %vm3483, %v3428, %v2728
      %v3494 = vsel %vm3483, %v3429, %v2730
      %v3495 = vsel %vm3483, %v3430, %v2732
      %v3496 = vsel %vm3483, %v3431, %v2734
      %v3497 = vsel %vm3483, %v3432, %v2736
      %v3498 = vsel %vm3483, %v3433, %v2738
      %v3499 = vsel %vm3483, %v3434, %v2740
      %v3500 = vsel %vm3483, %v3435, %v2742
      %v3501 = vsel %vm3483, %v3436, %v2744
      %v3502 = vsel %vm3483, %v3437, %v2746
      %v3503 = vsel %vm3483, %v3438, %v2748
      %v3504 = vsel %vm3483, %v3439, %v2750
      %v3505 = vsel %vm3483, %v3440, %v2752
      %v3506 = vsel %vm3483, %v3441, %v2754
      %v3507 = vsel %vm3483, %v3442, %v2756
      %v3508 = vsel %vm3483, %v3443, %v2758
      %v3509 = vsel %vm3483, %v3444, %v2760
      %v3510 = vsel %vm3483, %v3445, %v2762
      %v3511 = vsel %vm3483, %v3446, %v2764
      %v3512 = vsel %vm3483, %v3447, %v2766
      %v3513 = vsel %vm3483, %v3448, %v2768
      %v3514 = vsel %vm3483, %v3449, %v2770
      %v3515 = vsel %vm3483, %v3450, %v2772
      %v3516 = vsel %vm3483, %v3451, %v2774
      %v3517 = vsel %vm3483, %v3452, %v2776
      %v3518 = vsel %vm3483, %v3453, %v2778
      %v3519 = vsel %vm3483, %v3454, %v2780
      %v3520 = vsel %vm3483, %v3455, %v2782
      %v3521 = vsel %vm3483, %v3456, %v2784
      %v3522 = vsel %vm3483, %v3457, %v2786
      %v3523 = vsel %vm3483, %v3458, %v2788
      %v3524 = vsel %vm3483, %v3459, %v2790
      %v3525 = vsel %vm3483, %v3460, %v2792
      %v3526 = vsel %vm3483, %v3461, %v2794
      %v3527 = vsel %vm3483, %v3462, %v2796
      %v3528 = vsel %vm3483, %v3463, %v2798
      %v3529 = vsel %vm3483, %v3464, %v2800
      %v3530 = vsel %vm3483, %v3465, %v2802
      %v3531 = vsel %vm3483, %v3466, %v2804
      %v3532 = vsel %vm3483, %v3467, %v2806
      %v3533 = vsel %vm3483, %v3468, %v2808
      %v3534 = vsel %vm3483, %v3469, %v2810
      %v3535 = vsel %vm3483, %v3470, %v2812
      %v3536 = vsel %vm3483, %v3471, %v2814
      %v3537 = vsel %vm3483, %v3472, %v2816
      %v3538 = vsel %vm3483, %v3473, %v2818
      %v3539 = vsel %vm3483, %v3474, %v2820
      %v3540 = vsel %vm3483, %v3475, %v2822
      %v3541 = vsel %vm3483, %v3476, %v2824
      %v3542 = vsel %vm3483, %v3477, %v2826
      %v3543 = vsel %vm3483, %v3478, %v2828
      %v3544 = vsel %vm3483, %v3479, %v2830
      %v3545 = vsel %vm3483, %v3480, %v2832
      %v3546 = vsel %vm3483, %v3481, %v2834
      %v3547 = vsel %vm3483, %v3482, %v2836
      %vm3548 = vcmask 523264
      %v3549 = vsel %vm3548, %v3484, %v2902
      %v3550 = vsel %vm3548, %v3485, %v2904
      %v3551 = vsel %vm3548, %v3486, %v2906
      %v3552 = vsel %vm3548, %v3487, %v2908
      %v3553 = vsel %vm3548, %v3488, %v2910
      %v3554 = vsel %vm3548, %v3489, %v2912
      %v3555 = vsel %vm3548, %v3490, %v2914
      %v3556 = vsel %vm3548, %v3491, %v2916
      %v3557 = vsel %vm3548, %v3492, %v2918
      %v3558 = vsel %vm3548, %v3493, %v2920
      %v3559 = vsel %vm3548, %v3494, %v2922
      %v3560 = vsel %vm3548, %v3495, %v2924
      %v3561 = vsel %vm3548, %v3496, %v2926
      %v3562 = vsel %vm3548, %v3497, %v2928
      %v3563 = vsel %vm3548, %v3498, %v2930
      %v3564 = vsel %vm3548, %v3499, %v2932
      %v3565 = vsel %vm3548, %v3500, %v2934
      %v3566 = vsel %vm3548, %v3501, %v2936
      %v3567 = vsel %vm3548, %v3502, %v2938
      %v3568 = vsel %vm3548, %v3503, %v2940
      %v3569 = vsel %vm3548, %v3504, %v2942
      %v3570 = vsel %vm3548, %v3505, %v2944
      %v3571 = vsel %vm3548, %v3506, %v2946
      %v3572 = vsel %vm3548, %v3507, %v2948
      %v3573 = vsel %vm3548, %v3508, %v2950
      %v3574 = vsel %vm3548, %v3509, %v2952
      %v3575 = vsel %vm3548, %v3510, %v2954
      %v3576 = vsel %vm3548, %v3511, %v2956
      %v3577 = vsel %vm3548, %v3512, %v2958
      %v3578 = vsel %vm3548, %v3513, %v2960
      %v3579 = vsel %vm3548, %v3514, %v2962
      %v3580 = vsel %vm3548, %v3515, %v2964
      %v3581 = vsel %vm3548, %v3516, %v2966
      %v3582 = vsel %vm3548, %v3517, %v2968
      %v3583 = vsel %vm3548, %v3518, %v2970
      %v3584 = vsel %vm3548, %v3519, %v2972
      %v3585 = vsel %vm3548, %v3520, %v2974
      %v3586 = vsel %vm3548, %v3521, %v2976
      %v3587 = vsel %vm3548, %v3522, %v2978
      %v3588 = vsel %vm3548, %v3523, %v2980
      %v3589 = vsel %vm3548, %v3524, %v2982
      %v3590 = vsel %vm3548, %v3525, %v2984
      %v3591 = vsel %vm3548, %v3526, %v2986
      %v3592 = vsel %vm3548, %v3527, %v2988
      %v3593 = vsel %vm3548, %v3528, %v2990
      %v3594 = vsel %vm3548, %v3529, %v2992
      %v3595 = vsel %vm3548, %v3530, %v2994
      %v3596 = vsel %vm3548, %v3531, %v2996
      %v3597 = vsel %vm3548, %v3532, %v2998
      %v3598 = vsel %vm3548, %v3533, %v3000
      %v3599 = vsel %vm3548, %v3534, %v3002
      %v3600 = vsel %vm3548, %v3535, %v3004
      %v3601 = vsel %vm3548, %v3536, %v3006
      %v3602 = vsel %vm3548, %v3537, %v3008
      %v3603 = vsel %vm3548, %v3538, %v3010
      %v3604 = vsel %vm3548, %v3539, %v3012
      %v3605 = vsel %vm3548, %v3540, %v3014
      %v3606 = vsel %vm3548, %v3541, %v3016
      %v3607 = vsel %vm3548, %v3542, %v3018
      %v3608 = vsel %vm3548, %v3543, %v3020
      %v3609 = vsel %vm3548, %v3544, %v3022
      %v3610 = vsel %vm3548, %v3545, %v3024
      %v3611 = vsel %vm3548, %v3546, %v3026
      %v3612 = vsel %vm3548, %v3547, %v3028
      %v3613 = vld [vmem:[%s4] sm:$0xff]
      %v3614 = vld [vmem:[%s4 + $0x8] sm:$0xff]
      %v3615 = vld [vmem:[%s4 + $0x10] sm:$0xff]
      %v3616 = vld [vmem:[%s4 + $0x18] sm:$0xff]
      %v3617 = vld [vmem:[%s4 + $0x20] sm:$0xff]
      %v3618 = vld [vmem:[%s4 + $0x28] sm:$0xff]
      %v3619 = vld [vmem:[%s4 + $0x30] sm:$0xff]
      %v3620 = vld [vmem:[%s4 + $0x38] sm:$0xff]
      %v3621 = vld [vmem:[%s4 + $0x40] sm:$0xff]
      %vm3622 = vcmask 588800
      %v3624 = vsel %vm3622, %v3549, 0
      %v3627 = vsel %vm3622, %v3550, 0
      %v3630 = vsel %vm3622, %v3551, 0
      %v3633 = vsel %vm3622, %v3552, 0
      %v3636 = vsel %vm3622, %v3553, 0
      %v3639 = vsel %vm3622, %v3554, 0
      %v3642 = vsel %vm3622, %v3555, 0
      %v3645 = vsel %vm3622, %v3556, 0
      %v3648 = vsel %vm3622, %v3557, 0
      %v3651 = vsel %vm3622, %v3558, 0
      %v3654 = vsel %vm3622, %v3559, 0
      %v3657 = vsel %vm3622, %v3560, 0
      %v3660 = vsel %vm3622, %v3561, 0
      %v3663 = vsel %vm3622, %v3562, 0
      %v3666 = vsel %vm3622, %v3563, 0
      %v3669 = vsel %vm3622, %v3564, 0
      %v3672 = vsel %vm3622, %v3565, 0
      %v3675 = vsel %vm3622, %v3566, 0
      %v3678 = vsel %vm3622, %v3567, 0
      %v3681 = vsel %vm3622, %v3568, 0
      %v3684 = vsel %vm3622, %v3569, 0
      %v3687 = vsel %vm3622, %v3570, 0
      %v3690 = vsel %vm3622, %v3571, 0
      %v3693 = vsel %vm3622, %v3572, 0
      %v3696 = vsel %vm3622, %v3573, 0
      %v3699 = vsel %vm3622, %v3574, 0
      %v3702 = vsel %vm3622, %v3575, 0
      %v3705 = vsel %vm3622, %v3576, 0
      %v3708 = vsel %vm3622, %v3577, 0
      %v3711 = vsel %vm3622, %v3578, 0
      %v3714 = vsel %vm3622, %v3579, 0
      %v3717 = vsel %vm3622, %v3580, 0
      %v3720 = vsel %vm3622, %v3581, 0
      %v3723 = vsel %vm3622, %v3582, 0
      %v3726 = vsel %vm3622, %v3583, 0
      %v3729 = vsel %vm3622, %v3584, 0
      %v3732 = vsel %vm3622, %v3585, 0
      %v3735 = vsel %vm3622, %v3586, 0
      %v3738 = vsel %vm3622, %v3587, 0
      %v3741 = vsel %vm3622, %v3588, 0
      %v3744 = vsel %vm3622, %v3589, 0
      %v3747 = vsel %vm3622, %v3590, 0
      %v3750 = vsel %vm3622, %v3591, 0
      %v3753 = vsel %vm3622, %v3592, 0
      %v3756 = vsel %vm3622, %v3593, 0
      %v3759 = vsel %vm3622, %v3594, 0
      %v3762 = vsel %vm3622, %v3595, 0
      %v3765 = vsel %vm3622, %v3596, 0
      %v3768 = vsel %vm3622, %v3597, 0
      %v3771 = vsel %vm3622, %v3598, 0
      %v3774 = vsel %vm3622, %v3599, 0
      %v3777 = vsel %vm3622, %v3600, 0
      %v3780 = vsel %vm3622, %v3601, 0
      %v3783 = vsel %vm3622, %v3602, 0
      %v3786 = vsel %vm3622, %v3603, 0
      %v3789 = vsel %vm3622, %v3604, 0
      %v3792 = vsel %vm3622, %v3605, 0
      %v3795 = vsel %vm3622, %v3606, 0
      %v3798 = vsel %vm3622, %v3607, 0
      %v3801 = vsel %vm3622, %v3608, 0
      %v3804 = vsel %vm3622, %v3609, 0
      %v3807 = vsel %vm3622, %v3610, 0
      %v3810 = vsel %vm3622, %v3611, 0
      %v3813 = vsel %vm3622, %v3612, 0
      %3815 = vmatpush.msra.mxu0 0.0
      %3816 = vmatpush.msra.mxu0 0.0
      %3817 = vmatpush.msra.mxu0 0.0
      %3818 = vmatpush.msra.mxu0 0.0
      %3819 = vmatpush.msra.mxu0 0.0
      %3820 = vmatpush.msra.mxu0 0.0
      %3821 = vmatpush.msra.mxu0 0.0
      %3822 = vmatpush.msra.mxu0 %v3621
      %3823 = vmatpush.msra.mxu0 %v3620
      %3824 = vmatpush.msra.mxu0 %v3619
      %3825 = vmatpush.msra.mxu0 %v3618
      %3826 = vmatpush.msra.mxu0 %v3617
      %3827 = vmatpush.msra.mxu0 %v3616
      %3828 = vmatpush.msra.mxu0 %v3615
      %3829 = vmatpush.msra.mxu0 %v3614
      %3830 = vmatpush.msra.mxu0 %v3613
      %3831 = vmatmul.f32.gmra.mxu0 %v3624
      %v3832 = vpop.f32.mrf.mxu0
      %v3833 = vadd.f32 0.0, %v3832
      %3834 = vmatmul.f32.gmra.mxu0 %v3627
      %v3835 = vpop.f32.mrf.mxu0
      %v3836 = vadd.f32 0.0, %v3835
      %3837 = vmatmul.f32.gmra.mxu0 %v3630
      %v3838 = vpop.f32.mrf.mxu0
      %v3839 = vadd.f32 0.0, %v3838
      %3840 = vmatmul.f32.gmra.mxu0 %v3633
      %v3841 = vpop.f32.mrf.mxu0
      %v3842 = vadd.f32 0.0, %v3841
      %3843 = vmatmul.f32.gmra.mxu0 %v3636
      %v3844 = vpop.f32.mrf.mxu0
      %v3845 = vadd.f32 0.0, %v3844
      %3846 = vmatmul.f32.gmra.mxu0 %v3639
      %v3847 = vpop.f32.mrf.mxu0
      %v3848 = vadd.f32 0.0, %v3847
      %3849 = vmatmul.f32.gmra.mxu0 %v3642
      %v3850 = vpop.f32.mrf.mxu0
      %v3851 = vadd.f32 0.0, %v3850
      %3852 = vmatmul.f32.gmra.mxu0 %v3645
      %v3853 = vpop.f32.mrf.mxu0
      %v3854 = vadd.f32 0.0, %v3853
      %3855 = vmatmul.f32.gmra.mxu0 %v3648
      %v3856 = vpop.f32.mrf.mxu0
      %v3857 = vadd.f32 0.0, %v3856
      %3858 = vmatmul.f32.gmra.mxu0 %v3651
      %v3859 = vpop.f32.mrf.mxu0
      %v3860 = vadd.f32 0.0, %v3859
      %3861 = vmatmul.f32.gmra.mxu0 %v3654
      %v3862 = vpop.f32.mrf.mxu0
      %v3863 = vadd.f32 0.0, %v3862
      %3864 = vmatmul.f32.gmra.mxu0 %v3657
      %v3865 = vpop.f32.mrf.mxu0
      %v3866 = vadd.f32 0.0, %v3865
      %3867 = vmatmul.f32.gmra.mxu0 %v3660
      %v3868 = vpop.f32.mrf.mxu0
      %v3869 = vadd.f32 0.0, %v3868
      %3870 = vmatmul.f32.gmra.mxu0 %v3663
      %v3871 = vpop.f32.mrf.mxu0
      %v3872 = vadd.f32 0.0, %v3871
      %3873 = vmatmul.f32.gmra.mxu0 %v3666
      %v3874 = vpop.f32.mrf.mxu0
      %v3875 = vadd.f32 0.0, %v3874
      %3876 = vmatmul.f32.gmra.mxu0 %v3669
      %v3877 = vpop.f32.mrf.mxu0
      %v3878 = vadd.f32 0.0, %v3877
      %3879 = vmatmul.f32.gmra.mxu0 %v3672
      %v3880 = vpop.f32.mrf.mxu0
      %v3881 = vadd.f32 0.0, %v3880
      %3882 = vmatmul.f32.gmra.mxu0 %v3675
      %v3883 = vpop.f32.mrf.mxu0
      %v3884 = vadd.f32 0.0, %v3883
      %3885 = vmatmul.f32.gmra.mxu0 %v3678
      %v3886 = vpop.f32.mrf.mxu0
      %v3887 = vadd.f32 0.0, %v3886
      %3888 = vmatmul.f32.gmra.mxu0 %v3681
      %v3889 = vpop.f32.mrf.mxu0
      %v3890 = vadd.f32 0.0, %v3889
      %3891 = vmatmul.f32.gmra.mxu0 %v3684
      %v3892 = vpop.f32.mrf.mxu0
      %v3893 = vadd.f32 0.0, %v3892
      %3894 = vmatmul.f32.gmra.mxu0 %v3687
      %v3895 = vpop.f32.mrf.mxu0
      %v3896 = vadd.f32 0.0, %v3895
      %3897 = vmatmul.f32.gmra.mxu0 %v3690
      %v3898 = vpop.f32.mrf.mxu0
      %v3899 = vadd.f32 0.0, %v3898
      %3900 = vmatmul.f32.gmra.mxu0 %v3693
      %v3901 = vpop.f32.mrf.mxu0
      %v3902 = vadd.f32 0.0, %v3901
      %3903 = vmatmul.f32.gmra.mxu0 %v3696
      %v3904 = vpop.f32.mrf.mxu0
      %v3905 = vadd.f32 0.0, %v3904
      %3906 = vmatmul.f32.gmra.mxu0 %v3699
      %v3907 = vpop.f32.mrf.mxu0
      %v3908 = vadd.f32 0.0, %v3907
      %3909 = vmatmul.f32.gmra.mxu0 %v3702
      %v3910 = vpop.f32.mrf.mxu0
      %v3911 = vadd.f32 0.0, %v3910
      %3912 = vmatmul.f32.gmra.mxu0 %v3705
      %v3913 = vpop.f32.mrf.mxu0
      %v3914 = vadd.f32 0.0, %v3913
      %3915 = vmatmul.f32.gmra.mxu0 %v3708
      %v3916 = vpop.f32.mrf.mxu0
      %v3917 = vadd.f32 0.0, %v3916
      %3918 = vmatmul.f32.gmra.mxu0 %v3711
      %v3919 = vpop.f32.mrf.mxu0
      %v3920 = vadd.f32 0.0, %v3919
      %3921 = vmatmul.f32.gmra.mxu0 %v3714
      %v3922 = vpop.f32.mrf.mxu0
      %v3923 = vadd.f32 0.0, %v3922
      %3924 = vmatmul.f32.gmra.mxu0 %v3717
      %v3925 = vpop.f32.mrf.mxu0
      %v3926 = vadd.f32 0.0, %v3925
      %3927 = vmatmul.f32.gmra.mxu0 %v3720
      %v3928 = vpop.f32.mrf.mxu0
      %v3929 = vadd.f32 0.0, %v3928
      %3930 = vmatmul.f32.gmra.mxu0 %v3723
      %v3931 = vpop.f32.mrf.mxu0
      %v3932 = vadd.f32 0.0, %v3931
      %3933 = vmatmul.f32.gmra.mxu0 %v3726
      %v3934 = vpop.f32.mrf.mxu0
      %v3935 = vadd.f32 0.0, %v3934
      %3936 = vmatmul.f32.gmra.mxu0 %v3729
      %v3937 = vpop.f32.mrf.mxu0
      %v3938 = vadd.f32 0.0, %v3937
      %3939 = vmatmul.f32.gmra.mxu0 %v3732
      %v3940 = vpop.f32.mrf.mxu0
      %v3941 = vadd.f32 0.0, %v3940
      %3942 = vmatmul.f32.gmra.mxu0 %v3735
      %v3943 = vpop.f32.mrf.mxu0
      %v3944 = vadd.f32 0.0, %v3943
      %3945 = vmatmul.f32.gmra.mxu0 %v3738
      %v3946 = vpop.f32.mrf.mxu0
      %v3947 = vadd.f32 0.0, %v3946
      %3948 = vmatmul.f32.gmra.mxu0 %v3741
      %v3949 = vpop.f32.mrf.mxu0
      %v3950 = vadd.f32 0.0, %v3949
      %3951 = vmatmul.f32.gmra.mxu0 %v3744
      %v3952 = vpop.f32.mrf.mxu0
      %v3953 = vadd.f32 0.0, %v3952
      %3954 = vmatmul.f32.gmra.mxu0 %v3747
      %v3955 = vpop.f32.mrf.mxu0
      %v3956 = vadd.f32 0.0, %v3955
      %3957 = vmatmul.f32.gmra.mxu0 %v3750
      %v3958 = vpop.f32.mrf.mxu0
      %v3959 = vadd.f32 0.0, %v3958
      %3960 = vmatmul.f32.gmra.mxu0 %v3753
      %v3961 = vpop.f32.mrf.mxu0
      %v3962 = vadd.f32 0.0, %v3961
      %3963 = vmatmul.f32.gmra.mxu0 %v3756
      %v3964 = vpop.f32.mrf.mxu0
      %v3965 = vadd.f32 0.0, %v3964
      %3966 = vmatmul.f32.gmra.mxu0 %v3759
      %v3967 = vpop.f32.mrf.mxu0
      %v3968 = vadd.f32 0.0, %v3967
      %3969 = vmatmul.f32.gmra.mxu0 %v3762
      %v3970 = vpop.f32.mrf.mxu0
      %v3971 = vadd.f32 0.0, %v3970
      %3972 = vmatmul.f32.gmra.mxu0 %v3765
      %v3973 = vpop.f32.mrf.mxu0
      %v3974 = vadd.f32 0.0, %v3973
      %3975 = vmatmul.f32.gmra.mxu0 %v3768
      %v3976 = vpop.f32.mrf.mxu0
      %v3977 = vadd.f32 0.0, %v3976
      %3978 = vmatmul.f32.gmra.mxu0 %v3771
      %v3979 = vpop.f32.mrf.mxu0
      %v3980 = vadd.f32 0.0, %v3979
      %3981 = vmatmul.f32.gmra.mxu0 %v3774
      %v3982 = vpop.f32.mrf.mxu0
      %v3983 = vadd.f32 0.0, %v3982
      %3984 = vmatmul.f32.gmra.mxu0 %v3777
      %v3985 = vpop.f32.mrf.mxu0
      %v3986 = vadd.f32 0.0, %v3985
      %3987 = vmatmul.f32.gmra.mxu0 %v3780
      %v3988 = vpop.f32.mrf.mxu0
      %v3989 = vadd.f32 0.0, %v3988
      %3990 = vmatmul.f32.gmra.mxu0 %v3783
      %v3991 = vpop.f32.mrf.mxu0
      %v3992 = vadd.f32 0.0, %v3991
      %3993 = vmatmul.f32.gmra.mxu0 %v3786
      %v3994 = vpop.f32.mrf.mxu0
      %v3995 = vadd.f32 0.0, %v3994
      %3996 = vmatmul.f32.gmra.mxu0 %v3789
      %v3997 = vpop.f32.mrf.mxu0
      %v3998 = vadd.f32 0.0, %v3997
      %3999 = vmatmul.f32.gmra.mxu0 %v3792
      %v4000 = vpop.f32.mrf.mxu0
      %v4001 = vadd.f32 0.0, %v4000
      %4002 = vmatmul.f32.gmra.mxu0 %v3795
      %v4003 = vpop.f32.mrf.mxu0
      %v4004 = vadd.f32 0.0, %v4003
      %4005 = vmatmul.f32.gmra.mxu0 %v3798
      %v4006 = vpop.f32.mrf.mxu0
      %v4007 = vadd.f32 0.0, %v4006
      %4008 = vmatmul.f32.gmra.mxu0 %v3801
      %v4009 = vpop.f32.mrf.mxu0
      %v4010 = vadd.f32 0.0, %v4009
      %4011 = vmatmul.f32.gmra.mxu0 %v3804
      %v4012 = vpop.f32.mrf.mxu0
      %v4013 = vadd.f32 0.0, %v4012
      %4014 = vmatmul.f32.gmra.mxu0 %v3807
      %v4015 = vpop.f32.mrf.mxu0
      %v4016 = vadd.f32 0.0, %v4015
      %4017 = vmatmul.f32.gmra.mxu0 %v3810
      %v4018 = vpop.f32.mrf.mxu0
      %v4019 = vadd.f32 0.0, %v4018
      %4020 = vmatmul.f32.gmra.mxu0 %v3813
      %v4021 = vpop.f32.mrf.mxu0
      %v4022 = vadd.f32 0.0, %v4021
      %4023 = vdwg.mxu0
      %4024 = vst.msk [vmem:[%s498] sm:$0xff] %vm3093, %v3833
      %4025 = vst.msk [vmem:[%s498 + $0x8] sm:$0xff] %vm3093, %v3836
      %4026 = vst.msk [vmem:[%s498 + $0x10] sm:$0xff] %vm3093, %v3839
      %4027 = vst.msk [vmem:[%s498 + $0x18] sm:$0xff] %vm3093, %v3842
      %4028 = vst.msk [vmem:[%s498 + $0x20] sm:$0xff] %vm3093, %v3845
      %4029 = vst.msk [vmem:[%s498 + $0x28] sm:$0xff] %vm3093, %v3848
      %4030 = vst.msk [vmem:[%s498 + $0x30] sm:$0xff] %vm3093, %v3851
      %4031 = vst.msk [vmem:[%s498 + $0x38] sm:$0xff] %vm3093, %v3854
      %4032 = vst.msk [vmem:[%s498 + $0x40] sm:$0xff] %vm3093, %v3857
      %4033 = vst.msk [vmem:[%s498 + $0x48] sm:$0xff] %vm3093, %v3860
      %4034 = vst.msk [vmem:[%s498 + $0x50] sm:$0xff] %vm3093, %v3863
      %4035 = vst.msk [vmem:[%s498 + $0x58] sm:$0xff] %vm3093, %v3866
      %4036 = vst.msk [vmem:[%s498 + $0x60] sm:$0xff] %vm3093, %v3869
      %4037 = vst.msk [vmem:[%s498 + $0x68] sm:$0xff] %vm3093, %v3872
      %4038 = vst.msk [vmem:[%s498 + $0x70] sm:$0xff] %vm3093, %v3875
      %4039 = vst.msk [vmem:[%s498 + $0x78] sm:$0xff] %vm3093, %v3878
      %4040 = vst.msk [vmem:[%s498 + $0x80] sm:$0xff] %vm3093, %v3881
      %4041 = vst.msk [vmem:[%s498 + $0x88] sm:$0xff] %vm3093, %v3884
      %4042 = vst.msk [vmem:[%s498 + $0x90] sm:$0xff] %vm3093, %v3887
      %4043 = vst.msk [vmem:[%s498 + $0x98] sm:$0xff] %vm3093, %v3890
      %4044 = vst.msk [vmem:[%s498 + $0xa0] sm:$0xff] %vm3093, %v3893
      %4045 = vst.msk [vmem:[%s498 + $0xa8] sm:$0xff] %vm3093, %v3896
      %4046 = vst.msk [vmem:[%s498 + $0xb0] sm:$0xff] %vm3093, %v3899
      %4047 = vst.msk [vmem:[%s498 + $0xb8] sm:$0xff] %vm3093, %v3902
      %4048 = vst.msk [vmem:[%s498 + $0xc0] sm:$0xff] %vm3093, %v3905
      %4049 = vst.msk [vmem:[%s498 + $0xc8] sm:$0xff] %vm3093, %v3908
      %4050 = vst.msk [vmem:[%s498 + $0xd0] sm:$0xff] %vm3093, %v3911
      %4051 = vst.msk [vmem:[%s498 + $0xd8] sm:$0xff] %vm3093, %v3914
      %4052 = vst.msk [vmem:[%s498 + $0xe0] sm:$0xff] %vm3093, %v3917
      %4053 = vst.msk [vmem:[%s498 + $0xe8] sm:$0xff] %vm3093, %v3920
      %4054 = vst.msk [vmem:[%s498 + $0xf0] sm:$0xff] %vm3093, %v3923
      %4055 = vst.msk [vmem:[%s498 + $0xf8] sm:$0xff] %vm3093, %v3926
      %4056 = vst.msk [vmem:[%s498 + $0x100] sm:$0xff] %vm3093, %v3929
      %4057 = vst.msk [vmem:[%s498 + $0x108] sm:$0xff] %vm3093, %v3932
      %4058 = vst.msk [vmem:[%s498 + $0x110] sm:$0xff] %vm3093, %v3935
      %4059 = vst.msk [vmem:[%s498 + $0x118] sm:$0xff] %vm3093, %v3938
      %4060 = vst.msk [vmem:[%s498 + $0x120] sm:$0xff] %vm3093, %v3941
      %4061 = vst.msk [vmem:[%s498 + $0x128] sm:$0xff] %vm3093, %v3944
      %4062 = vst.msk [vmem:[%s498 + $0x130] sm:$0xff] %vm3093, %v3947
      %4063 = vst.msk [vmem:[%s498 + $0x138] sm:$0xff] %vm3093, %v3950
      %4064 = vst.msk [vmem:[%s498 + $0x140] sm:$0xff] %vm3093, %v3953
      %4065 = vst.msk [vmem:[%s498 + $0x148] sm:$0xff] %vm3093, %v3956
      %4066 = vst.msk [vmem:[%s498 + $0x150] sm:$0xff] %vm3093, %v3959
      %4067 = vst.msk [vmem:[%s498 + $0x158] sm:$0xff] %vm3093, %v3962
      %4068 = vst.msk [vmem:[%s498 + $0x160] sm:$0xff] %vm3093, %v3965
      %4069 = vst.msk [vmem:[%s498 + $0x168] sm:$0xff] %vm3093, %v3968
      %4070 = vst.msk [vmem:[%s498 + $0x170] sm:$0xff] %vm3093, %v3971
      %4071 = vst.msk [vmem:[%s498 + $0x178] sm:$0xff] %vm3093, %v3974
      %4072 = vst.msk [vmem:[%s498 + $0x180] sm:$0xff] %vm3093, %v3977
      %4073 = vst.msk [vmem:[%s498 + $0x188] sm:$0xff] %vm3093, %v3980
      %4074 = vst.msk [vmem:[%s498 + $0x190] sm:$0xff] %vm3093, %v3983
      %4075 = vst.msk [vmem:[%s498 + $0x198] sm:$0xff] %vm3093, %v3986
      %4076 = vst.msk [vmem:[%s498 + $0x1a0] sm:$0xff] %vm3093, %v3989
      %4077 = vst.msk [vmem:[%s498 + $0x1a8] sm:$0xff] %vm3093, %v3992
      %4078 = vst.msk [vmem:[%s498 + $0x1b0] sm:$0xff] %vm3093, %v3995
      %4079 = vst.msk [vmem:[%s498 + $0x1b8] sm:$0xff] %vm3093, %v3998
      %4080 = vst.msk [vmem:[%s498 + $0x1c0] sm:$0xff] %vm3093, %v4001
      %4081 = vst.msk [vmem:[%s498 + $0x1c8] sm:$0xff] %vm3093, %v4004
      %4082 = vst.msk [vmem:[%s498 + $0x1d0] sm:$0xff] %vm3093, %v4007
      %4083 = vst.msk [vmem:[%s498 + $0x1d8] sm:$0xff] %vm3093, %v4010
      %4084 = vst.msk [vmem:[%s498 + $0x1e0] sm:$0xff] %vm3093, %v4013
      %4085 = vst.msk [vmem:[%s498 + $0x1e8] sm:$0xff] %vm3093, %v4016
      %4086 = vst.msk [vmem:[%s498 + $0x1f0] sm:$0xff] %vm3093, %v4019
      %4087 = vst.msk [vmem:[%s498 + $0x1f8] sm:$0xff] %vm3093, %v4022
      %v4088 = vsel %vm3093, %v3833, 0.0
      %v4089 = vsel %vm3093, %v3836, 0.0
      %v4090 = vadd.f32 %v4088, %v4089
      %v4091 = vsel %vm3093, %v3839, 0.0
      %v4092 = vadd.f32 %v4090, %v4091
      %v4093 = vsel %vm3093, %v3842, 0.0
      %v4094 = vadd.f32 %v4092, %v4093
      %v4095 = vsel %vm3093, %v3845, 0.0
      %v4096 = vadd.f32 %v4094, %v4095
      %v4097 = vsel %vm3093, %v3848, 0.0
      %v4098 = vadd.f32 %v4096, %v4097
      %v4099 = vsel %vm3093, %v3851, 0.0
      %v4100 = vadd.f32 %v4098, %v4099
      %v4101 = vsel %vm3093, %v3854, 0.0
      %v4102 = vadd.f32 %v4100, %v4101
      %v4103 = vsel %vm3093, %v3857, 0.0
      %v4104 = vadd.f32 %v4102, %v4103
      %v4105 = vsel %vm3093, %v3860, 0.0
      %v4106 = vadd.f32 %v4104, %v4105
      %v4107 = vsel %vm3093, %v3863, 0.0
      %v4108 = vadd.f32 %v4106, %v4107
      %v4109 = vsel %vm3093, %v3866, 0.0
      %v4110 = vadd.f32 %v4108, %v4109
      %v4111 = vsel %vm3093, %v3869, 0.0
      %v4112 = vadd.f32 %v4110, %v4111
      %v4113 = vsel %vm3093, %v3872, 0.0
      %v4114 = vadd.f32 %v4112, %v4113
      %v4115 = vsel %vm3093, %v3875, 0.0
      %v4116 = vadd.f32 %v4114, %v4115
      %v4117 = vsel %vm3093, %v3878, 0.0
      %v4118 = vadd.f32 %v4116, %v4117
      %v4119 = vsel %vm3093, %v3881, 0.0
      %v4120 = vadd.f32 %v4118, %v4119
      %v4121 = vsel %vm3093, %v3884, 0.0
      %v4122 = vadd.f32 %v4120, %v4121
      %v4123 = vsel %vm3093, %v3887, 0.0
      %v4124 = vadd.f32 %v4122, %v4123
      %v4125 = vsel %vm3093, %v3890, 0.0
      %v4126 = vadd.f32 %v4124, %v4125
      %v4127 = vsel %vm3093, %v3893, 0.0
      %v4128 = vadd.f32 %v4126, %v4127
      %v4129 = vsel %vm3093, %v3896, 0.0
      %v4130 = vadd.f32 %v4128, %v4129
      %v4131 = vsel %vm3093, %v3899, 0.0
      %v4132 = vadd.f32 %v4130, %v4131
      %v4133 = vsel %vm3093, %v3902, 0.0
      %v4134 = vadd.f32 %v4132, %v4133
      %v4135 = vsel %vm3093, %v3905, 0.0
      %v4136 = vadd.f32 %v4134, %v4135
      %v4137 = vsel %vm3093, %v3908, 0.0
      %v4138 = vadd.f32 %v4136, %v4137
      %v4139 = vsel %vm3093, %v3911, 0.0
      %v4140 = vadd.f32 %v4138, %v4139
      %v4141 = vsel %vm3093, %v3914, 0.0
      %v4142 = vadd.f32 %v4140, %v4141
      %v4143 = vsel %vm3093, %v3917, 0.0
      %v4144 = vadd.f32 %v4142, %v4143
      %v4145 = vsel %vm3093, %v3920, 0.0
      %v4146 = vadd.f32 %v4144, %v4145
      %v4147 = vsel %vm3093, %v3923, 0.0
      %v4148 = vadd.f32 %v4146, %v4147
      %v4149 = vsel %vm3093, %v3926, 0.0
      %v4150 = vadd.f32 %v4148, %v4149
      %v4151 = vsel %vm3093, %v3929, 0.0
      %v4152 = vadd.f32 %v4150, %v4151
      %v4153 = vsel %vm3093, %v3932, 0.0
      %v4154 = vadd.f32 %v4152, %v4153
      %v4155 = vsel %vm3093, %v3935, 0.0
      %v4156 = vadd.f32 %v4154, %v4155
      %v4157 = vsel %vm3093, %v3938, 0.0
      %v4158 = vadd.f32 %v4156, %v4157
      %v4159 = vsel %vm3093, %v3941, 0.0
      %v4160 = vadd.f32 %v4158, %v4159
      %v4161 = vsel %vm3093, %v3944, 0.0
      %v4162 = vadd.f32 %v4160, %v4161
      %v4163 = vsel %vm3093, %v3947, 0.0
      %v4164 = vadd.f32 %v4162, %v4163
      %v4165 = vsel %vm3093, %v3950, 0.0
      %v4166 = vadd.f32 %v4164, %v4165
      %v4167 = vsel %vm3093, %v3953, 0.0
      %v4168 = vadd.f32 %v4166, %v4167
      %v4169 = vsel %vm3093, %v3956, 0.0
      %v4170 = vadd.f32 %v4168, %v4169
      %v4171 = vsel %vm3093, %v3959, 0.0
      %v4172 = vadd.f32 %v4170, %v4171
      %v4173 = vsel %vm3093, %v3962, 0.0
      %v4174 = vadd.f32 %v4172, %v4173
      %v4175 = vsel %vm3093, %v3965, 0.0
      %v4176 = vadd.f32 %v4174, %v4175
      %v4177 = vsel %vm3093, %v3968, 0.0
      %v4178 = vadd.f32 %v4176, %v4177
      %v4179 = vsel %vm3093, %v3971, 0.0
      %v4180 = vadd.f32 %v4178, %v4179
      %v4181 = vsel %vm3093, %v3974, 0.0
      %v4182 = vadd.f32 %v4180, %v4181
      %v4183 = vsel %vm3093, %v3977, 0.0
      %v4184 = vadd.f32 %v4182, %v4183
      %v4185 = vsel %vm3093, %v3980, 0.0
      %v4186 = vadd.f32 %v4184, %v4185
      %v4187 = vsel %vm3093, %v3983, 0.0
      %v4188 = vadd.f32 %v4186, %v4187
      %v4189 = vsel %vm3093, %v3986, 0.0
      %v4190 = vadd.f32 %v4188, %v4189
      %v4191 = vsel %vm3093, %v3989, 0.0
      %v4192 = vadd.f32 %v4190, %v4191
      %v4193 = vsel %vm3093, %v3992, 0.0
      %v4194 = vadd.f32 %v4192, %v4193
      %v4195 = vsel %vm3093, %v3995, 0.0
      %v4196 = vadd.f32 %v4194, %v4195
      %v4197 = vsel %vm3093, %v3998, 0.0
      %v4198 = vadd.f32 %v4196, %v4197
      %v4199 = vsel %vm3093, %v4001, 0.0
      %v4200 = vadd.f32 %v4198, %v4199
      %v4201 = vsel %vm3093, %v4004, 0.0
      %v4202 = vadd.f32 %v4200, %v4201
      %v4203 = vsel %vm3093, %v4007, 0.0
      %v4204 = vadd.f32 %v4202, %v4203
      %v4205 = vsel %vm3093, %v4010, 0.0
      %v4206 = vadd.f32 %v4204, %v4205
      %v4207 = vsel %vm3093, %v4013, 0.0
      %v4208 = vadd.f32 %v4206, %v4207
      %v4209 = vsel %vm3093, %v4016, 0.0
      %v4210 = vadd.f32 %v4208, %v4209
      %v4211 = vsel %vm3093, %v4019, 0.0
      %v4212 = vadd.f32 %v4210, %v4211
      %v4213 = vsel %vm3093, %v4022, 0.0
      %v4214 = vadd.f32 %v4212, %v4213
      %v4215 = vrot.slane %v4214, 4
      %v4216 = vadd.f32 %v4214, %v4215
      %v4217 = vrot.slane %v4216, 2
      %v4218 = vadd.f32 %v4216, %v4217
      %v4219 = vrot.slane %v4218, 1
      %v4220 = vadd.f32 %v4218, %v4219
      %v4221 = vmul.f32 %v3833, %v3833
      %v4222 = vmul.f32 %v3836, %v3836
      %v4223 = vmul.f32 %v3839, %v3839
      %v4224 = vmul.f32 %v3842, %v3842
      %v4225 = vmul.f32 %v3845, %v3845
      %v4226 = vmul.f32 %v3848, %v3848
      %v4227 = vmul.f32 %v3851, %v3851
      %v4228 = vmul.f32 %v3854, %v3854
      %v4229 = vmul.f32 %v3857, %v3857
      %v4230 = vmul.f32 %v3860, %v3860
      %v4231 = vmul.f32 %v3863, %v3863
      %v4232 = vmul.f32 %v3866, %v3866
      %v4233 = vmul.f32 %v3869, %v3869
      %v4234 = vmul.f32 %v3872, %v3872
      %v4235 = vmul.f32 %v3875, %v3875
      %v4236 = vmul.f32 %v3878, %v3878
      %v4237 = vmul.f32 %v3881, %v3881
      %v4238 = vmul.f32 %v3884, %v3884
      %v4239 = vmul.f32 %v3887, %v3887
      %v4240 = vmul.f32 %v3890, %v3890
      %v4241 = vmul.f32 %v3893, %v3893
      %v4242 = vmul.f32 %v3896, %v3896
      %v4243 = vmul.f32 %v3899, %v3899
      %v4244 = vmul.f32 %v3902, %v3902
      %v4245 = vmul.f32 %v3905, %v3905
      %v4246 = vmul.f32 %v3908, %v3908
      %v4247 = vmul.f32 %v3911, %v3911
      %v4248 = vmul.f32 %v3914, %v3914
      %v4249 = vmul.f32 %v3917, %v3917
      %v4250 = vmul.f32 %v3920, %v3920
      %v4251 = vmul.f32 %v3923, %v3923
      %v4252 = vmul.f32 %v3926, %v3926
      %v4253 = vmul.f32 %v3929, %v3929
      %v4254 = vmul.f32 %v3932, %v3932
      %v4255 = vmul.f32 %v3935, %v3935
      %v4256 = vmul.f32 %v3938, %v3938
      %v4257 = vmul.f32 %v3941, %v3941
      %v4258 = vmul.f32 %v3944, %v3944
      %v4259 = vmul.f32 %v3947, %v3947
      %v4260 = vmul.f32 %v3950, %v3950
      %v4261 = vmul.f32 %v3953, %v3953
      %v4262 = vmul.f32 %v3956, %v3956
      %v4263 = vmul.f32 %v3959, %v3959
      %v4264 = vmul.f32 %v3962, %v3962
      %v4265 = vmul.f32 %v3965, %v3965
      %v4266 = vmul.f32 %v3968, %v3968
      %v4267 = vmul.f32 %v3971, %v3971
      %v4268 = vmul.f32 %v3974, %v3974
      %v4269 = vmul.f32 %v3977, %v3977
      %v4270 = vmul.f32 %v3980, %v3980
      %v4271 = vmul.f32 %v3983, %v3983
      %v4272 = vmul.f32 %v3986, %v3986
      %v4273 = vmul.f32 %v3989, %v3989
      %v4274 = vmul.f32 %v3992, %v3992
      %v4275 = vmul.f32 %v3995, %v3995
      %v4276 = vmul.f32 %v3998, %v3998
      %v4277 = vmul.f32 %v4001, %v4001
      %v4278 = vmul.f32 %v4004, %v4004
      %v4279 = vmul.f32 %v4007, %v4007
      %v4280 = vmul.f32 %v4010, %v4010
      %v4281 = vmul.f32 %v4013, %v4013
      %v4282 = vmul.f32 %v4016, %v4016
      %v4283 = vmul.f32 %v4019, %v4019
      %v4284 = vmul.f32 %v4022, %v4022
      %v4285 = vsel %vm3093, %v4221, 0.0
      %v4286 = vsel %vm3093, %v4222, 0.0
      %v4287 = vadd.f32 %v4285, %v4286
      %v4288 = vsel %vm3093, %v4223, 0.0
      %v4289 = vadd.f32 %v4287, %v4288
      %v4290 = vsel %vm3093, %v4224, 0.0
      %v4291 = vadd.f32 %v4289, %v4290
      %v4292 = vsel %vm3093, %v4225, 0.0
      %v4293 = vadd.f32 %v4291, %v4292
      %v4294 = vsel %vm3093, %v4226, 0.0
      %v4295 = vadd.f32 %v4293, %v4294
      %v4296 = vsel %vm3093, %v4227, 0.0
      %v4297 = vadd.f32 %v4295, %v4296
      %v4298 = vsel %vm3093, %v4228, 0.0
      %v4299 = vadd.f32 %v4297, %v4298
      %v4300 = vsel %vm3093, %v4229, 0.0
      %v4301 = vadd.f32 %v4299, %v4300
      %v4302 = vsel %vm3093, %v4230, 0.0
      %v4303 = vadd.f32 %v4301, %v4302
      %v4304 = vsel %vm3093, %v4231, 0.0
      %v4305 = vadd.f32 %v4303, %v4304
      %v4306 = vsel %vm3093, %v4232, 0.0
      %v4307 = vadd.f32 %v4305, %v4306
      %v4308 = vsel %vm3093, %v4233, 0.0
      %v4309 = vadd.f32 %v4307, %v4308
      %v4310 = vsel %vm3093, %v4234, 0.0
      %v4311 = vadd.f32 %v4309, %v4310
      %v4312 = vsel %vm3093, %v4235, 0.0
      %v4313 = vadd.f32 %v4311, %v4312
      %v4314 = vsel %vm3093, %v4236, 0.0
      %v4315 = vadd.f32 %v4313, %v4314
      %v4316 = vsel %vm3093, %v4237, 0.0
      %v4317 = vadd.f32 %v4315, %v4316
      %v4318 = vsel %vm3093, %v4238, 0.0
      %v4319 = vadd.f32 %v4317, %v4318
      %v4320 = vsel %vm3093, %v4239, 0.0
      %v4321 = vadd.f32 %v4319, %v4320
      %v4322 = vsel %vm3093, %v4240, 0.0
      %v4323 = vadd.f32 %v4321, %v4322
      %v4324 = vsel %vm3093, %v4241, 0.0
      %v4325 = vadd.f32 %v4323, %v4324
      %v4326 = vsel %vm3093, %v4242, 0.0
      %v4327 = vadd.f32 %v4325, %v4326
      %v4328 = vsel %vm3093, %v4243, 0.0
      %v4329 = vadd.f32 %v4327, %v4328
      %v4330 = vsel %vm3093, %v4244, 0.0
      %v4331 = vadd.f32 %v4329, %v4330
      %v4332 = vsel %vm3093, %v4245, 0.0
      %v4333 = vadd.f32 %v4331, %v4332
      %v4334 = vsel %vm3093, %v4246, 0.0
      %v4335 = vadd.f32 %v4333, %v4334
      %v4336 = vsel %vm3093, %v4247, 0.0
      %v4337 = vadd.f32 %v4335, %v4336
      %v4338 = vsel %vm3093, %v4248, 0.0
      %v4339 = vadd.f32 %v4337, %v4338
      %v4340 = vsel %vm3093, %v4249, 0.0
      %v4341 = vadd.f32 %v4339, %v4340
      %v4342 = vsel %vm3093, %v4250, 0.0
      %v4343 = vadd.f32 %v4341, %v4342
      %v4344 = vsel %vm3093, %v4251, 0.0
      %v4345 = vadd.f32 %v4343, %v4344
      %v4346 = vsel %vm3093, %v4252, 0.0
      %v4347 = vadd.f32 %v4345, %v4346
      %v4348 = vsel %vm3093, %v4253, 0.0
      %v4349 = vadd.f32 %v4347, %v4348
      %v4350 = vsel %vm3093, %v4254, 0.0
      %v4351 = vadd.f32 %v4349, %v4350
      %v4352 = vsel %vm3093, %v4255, 0.0
      %v4353 = vadd.f32 %v4351, %v4352
      %v4354 = vsel %vm3093, %v4256, 0.0
      %v4355 = vadd.f32 %v4353, %v4354
      %v4356 = vsel %vm3093, %v4257, 0.0
      %v4357 = vadd.f32 %v4355, %v4356
      %v4358 = vsel %vm3093, %v4258, 0.0
      %v4359 = vadd.f32 %v4357, %v4358
      %v4360 = vsel %vm3093, %v4259, 0.0
      %v4361 = vadd.f32 %v4359, %v4360
      %v4362 = vsel %vm3093, %v4260, 0.0
      %v4363 = vadd.f32 %v4361, %v4362
      %v4364 = vsel %vm3093, %v4261, 0.0
      %v4365 = vadd.f32 %v4363, %v4364
      %v4366 = vsel %vm3093, %v4262, 0.0
      %v4367 = vadd.f32 %v4365, %v4366
      %v4368 = vsel %vm3093, %v4263, 0.0
      %v4369 = vadd.f32 %v4367, %v4368
      %v4370 = vsel %vm3093, %v4264, 0.0
      %v4371 = vadd.f32 %v4369, %v4370
      %v4372 = vsel %vm3093, %v4265, 0.0
      %v4373 = vadd.f32 %v4371, %v4372
      %v4374 = vsel %vm3093, %v4266, 0.0
      %v4375 = vadd.f32 %v4373, %v4374
      %v4376 = vsel %vm3093, %v4267, 0.0
      %v4377 = vadd.f32 %v4375, %v4376
      %v4378 = vsel %vm3093, %v4268, 0.0
      %v4379 = vadd.f32 %v4377, %v4378
      %v4380 = vsel %vm3093, %v4269, 0.0
      %v4381 = vadd.f32 %v4379, %v4380
      %v4382 = vsel %vm3093, %v4270, 0.0
      %v4383 = vadd.f32 %v4381, %v4382
      %v4384 = vsel %vm3093, %v4271, 0.0
      %v4385 = vadd.f32 %v4383, %v4384
      %v4386 = vsel %vm3093, %v4272, 0.0
      %v4387 = vadd.f32 %v4385, %v4386
      %v4388 = vsel %vm3093, %v4273, 0.0
      %v4389 = vadd.f32 %v4387, %v4388
      %v4390 = vsel %vm3093, %v4274, 0.0
      %v4391 = vadd.f32 %v4389, %v4390
      %v4392 = vsel %vm3093, %v4275, 0.0
      %v4393 = vadd.f32 %v4391, %v4392
      %v4394 = vsel %vm3093, %v4276, 0.0
      %v4395 = vadd.f32 %v4393, %v4394
      %v4396 = vsel %vm3093, %v4277, 0.0
      %v4397 = vadd.f32 %v4395, %v4396
      %v4398 = vsel %vm3093, %v4278, 0.0
      %v4399 = vadd.f32 %v4397, %v4398
      %v4400 = vsel %vm3093, %v4279, 0.0
      %v4401 = vadd.f32 %v4399, %v4400
      %v4402 = vsel %vm3093, %v4280, 0.0
      %v4403 = vadd.f32 %v4401, %v4402
      %v4404 = vsel %vm3093, %v4281, 0.0
      %v4405 = vadd.f32 %v4403, %v4404
      %v4406 = vsel %vm3093, %v4282, 0.0
      %v4407 = vadd.f32 %v4405, %v4406
      %v4408 = vsel %vm3093, %v4283, 0.0
      %v4409 = vadd.f32 %v4407, %v4408
      %v4410 = vsel %vm3093, %v4284, 0.0
      %v4411 = vadd.f32 %v4409, %v4410
      %v4412 = vrot.slane %v4411, 4
      %v4413 = vadd.f32 %v4411, %v4412
      %v4414 = vrot.slane %v4413, 2
      %v4415 = vadd.f32 %v4413, %v4414
      %v4416 = vrot.slane %v4415, 1
      %v4417 = vadd.f32 %v4415, %v4416
      %vm4418 = vcmask 1040384
      %v4419 = vsel %vm4418, %v4220, %v4417
      %vm4420 = vcmask 58368
      %4421 = vst.msk [vmem:[%s509] sm:$0x3] %vm4420, %v4419
      %s4422 = smul.u32 %s22, 2
      %s4423 = sadd.s32 %s4422, %s23
      %s4424 = smul.u32 64, %s4423
      %p4425 = scmp.lt.s32.totalorder %s4424, 255
      %s4426 = scalar_select %p4425, %s4424, 255
      %s4427 = smul.addr %s4426, 8
      %s4428 = scalar_lea.vmem %s5, %s4427
      %p4429 = scmp.lt.s32.totalorder %s22, 1
      %s4430 = scalar_select %p4429, %s22, 1
      %p4431 = scmp.lt.s32.totalorder %s23, 1
      %s4432 = scalar_select %p4431, %s23, 1
      %s4433 = smul.addr %s4430, 2
      %s4434 = sadd.s32 %s4432, %s4433
      %s4435 = smul.addr %s4434, 2
      %s4436 = scalar_lea.vmem %s6, %s4435
      // Predicated region
      $region41: #{up_forward.4} parent=39 // pred_check
        %p4437 = pneg %p193
      $region42: #{up_forward.4} parent=39 // pred_check_branch
        %4439 = sbr.rel (%p4437) target = $region44
      $region43: #{up_forward.4} parent=39 // pred_region
        %s4440 = smul.u32 %s22, 2
        %s4441 = sadd.s32 %s4440, %s23
        %s4442 = smul.u32 64, %s4441
      $region44: #{up_forward.4} parent=39 // pred_fallthru
        _
      // Predicated region
      $region45: #{up_forward.4} parent=39 // pred_check
        %p4443 = pneg %p221
      $region46: #{up_forward.4} parent=39 // pred_check_branch
        %4445 = sbr.rel (%p4443) target = $region48
      $region47: #{up_forward.4} parent=39 // pred_region
        _
      $region48: #{up_forward.4} parent=39 // pred_fallthru
        _
    $region40: #{up_forward.4} parent=5 // pred_fallthru
      _
    %p4446 = scmp.le.s32.totalorder 2, %s13
    // Predicated region
    $region49: #{up_forward.4} parent=5 // pred_check
      %p4447 = pneg %p4446
    $region50: #{up_forward.4} parent=5 // pred_check_branch
      %4449 = sbr.rel (%p4447) target = $region52
    $region51: #{up_forward.4} parent=5 // pred_region
      %s4450 = ssub.s32 %s13, 2
      // Predicated region
      $region53: #{up_forward.4} parent=51 // pred_check
        %p4451 = pneg %p199
      $region54: #{up_forward.4} parent=51 // pred_check_branch
        %4453 = sbr.rel (%p4451) target = $region56
      $region55: #{up_forward.4} parent=51 // pred_region
        %s4454 = smul.u32 %s24, 2
        %s4455 = sadd.s32 %s4454, %s25
        %s4456 = smul.u32 64, %s4455
        %p4457 = scmp.lt.s32.totalorder %s4456, 255
        %s4458 = scalar_select %p4457, %s4456, 255
        %s4459 = smul.addr %s4458, 8
        %s4460 = scalar_lea.vmem %s5, %s4459
      $region56: #{up_forward.4} parent=51 // pred_fallthru
        _
      // Predicated region
      $region57: #{up_forward.4} parent=51 // pred_check
        %p4461 = pneg %p227
      $region58: #{up_forward.4} parent=51 // pred_check_branch
        %4463 = sbr.rel (%p4461) target = $region60
      $region59: #{up_forward.4} parent=51 // pred_region
        %p4464 = scmp.lt.s32.totalorder %s24, 1
        %s4465 = scalar_select %p4464, %s24, 1
        %p4466 = scmp.lt.s32.totalorder %s25, 1
        %s4467 = scalar_select %p4466, %s25, 1
        %s4468 = smul.addr %s4465, 2
        %s4469 = sadd.s32 %s4467, %s4468
        %s4470 = smul.addr %s4469, 2
        %s4471 = scalar_lea.vmem %s6, %s4470
      $region60: #{up_forward.4} parent=51 // pred_fallthru
        _
    $region52: #{up_forward.4} parent=5 // pred_fallthru
      _
  $region6: #{up_forward.4} parent=0 // loop_footer
    %s17 = sadd.s32 1, %s13
  $region7: #{up_forward.4} parent=0 // loop_footer_branch
    %12 = sbr.rel target = $region3
  $region8: #{up_forward.4} parent=0 // loop_exit
    _

</llo_original>
